<compile_context>
chip_gen: v7x
topology: tpu7x:2x2x1
jax: 0.10.0
libtpu: 0.0.40
codegen_flags: <defaults>
</compile_context>

<pallas_src>
import jax
import jax.numpy as jnp
from jax.experimental import pallas as pl
from jax.experimental.pallas import tpu as pltpu

NEG_SLOPE = 0.01   # torch.nn.LeakyReLU default
BN_EPS = 1e-5      # torch.nn.BatchNorm2d default


# ----------------------------- Pallas kernel ------------------------------- #
def _double_conv_kernel(x_ref, w1_ref, b1_ref, w2_ref, b2_ref, o_ref, mid_ref):
    # x_ref : (1, H+2, W+2, C_in)   bf16, spatially pre-padded input image
    # w1_ref: (9, C_in, C_mid)      bf16, BN1 scale folded in (tap order kh*3+kw)
    # b1_ref: (1, C_mid)            f32 fused conv-bias + BN1 bias
    # w2_ref: (9, C_mid, C_out)     bf16, BN2 scale folded in
    # b2_ref: (1, C_out)            f32 fused conv-bias + BN2 bias
    # o_ref : (1, H, W, C_out)      f32 output
    # mid_ref: (H+2, W+2, C_mid)    bf16 VMEM scratch, layer-1 output w/ zero halo
    _, h, w, c_out = o_ref.shape
    c_mid = w1_ref.shape[2]

    # The halo border of the scratch only has to be zeroed once; the interior is
    # fully overwritten every grid step.
    @pl.when(pl.program_id(0) == 0)
    def _():
        mid_ref[...] = jnp.zeros_like(mid_ref)

    def conv3x3_bn_lrelu(img, w_taps, bias):
        # img: (H+2, W+2, C) bf16; w_taps: (9, C, C_o) bf16; bias: (1, C_o) f32
        hw = h * w
        c_o = w_taps.shape[2]
        acc = jnp.zeros((hw, c_o), jnp.float32)
        for kh in range(3):
            for kw in range(3):
                # Shifted window -> (H*W, C) "patch" tile, built in VMEM/vregs
                # (merging leading dims only: the lane (minor) dim is unchanged).
                tap = img[kh:kh + h, kw:kw + w, :].reshape(hw, -1)
                acc = acc + jnp.dot(tap, w_taps[kh * 3 + kw],
                                    preferred_element_type=jnp.float32)
        acc = acc + bias                                  # fused conv-bias + BN
        return jnp.where(acc >= 0, acc, NEG_SLOPE * acc)  # LeakyReLU (f32)

    # ---- layer 1: conv + BN + LeakyReLU, kept on-chip in the halo scratch ----
    y1 = conv3x3_bn_lrelu(x_ref[0], w1_ref[...], b1_ref[...])
    mid_ref[1:h + 1, 1:w + 1, :] = y1.reshape(h, w, c_mid).astype(mid_ref.dtype)

    # ---- layer 2: reads the VMEM intermediate, writes the final output ------
    y2 = conv3x3_bn_lrelu(mid_ref[...], w2_ref[...], b2_ref[...])
    o_ref[0] = y2.reshape(h, w, c_out).astype(o_ref.dtype)


def _double_conv_call(xpad, w1, b1, w2, b2):
    n, hp, wp, c_in = xpad.shape
    h, w = hp - 2, wp - 2
    c_mid = w1.shape[2]
    c_out = w2.shape[2]

    return pl.pallas_call(
        _double_conv_kernel,
        out_shape=jax.ShapeDtypeStruct((n, h, w, c_out), jnp.float32),
        grid_spec=pltpu.PrefetchScalarGridSpec(
            num_scalar_prefetch=0,
            grid=(n,),
            in_specs=[
                pl.BlockSpec((1, hp, wp, c_in), lambda i: (i, 0, 0, 0)),
                pl.BlockSpec((9, c_in, c_mid), lambda i: (0, 0, 0)),
                pl.BlockSpec((1, c_mid), lambda i: (0, 0)),
                pl.BlockSpec((9, c_mid, c_out), lambda i: (0, 0, 0)),
                pl.BlockSpec((1, c_out), lambda i: (0, 0)),
            ],
            out_specs=pl.BlockSpec((1, h, w, c_out), lambda i: (i, 0, 0, 0)),
            scratch_shapes=[pltpu.VMEM((hp, wp, c_mid), jnp.bfloat16)],
        ),
        compiler_params=pltpu.CompilerParams(
            dimension_semantics=("parallel",)),
    )(xpad, w1, b1, w2, b2)


# ------------------------------ JAX glue ------------------------------------ #
def _fold_bn(conv_w, conv_b, gamma, beta, mean, var):
    """Fold eval-mode BatchNorm into the conv weights/bias.

    conv_w: (C_out, C_in, 3, 3) -> (9, C_in, C_out) bf16, scaled by BN scale.
    bias  : (1, C_out) f32 = (conv_b - mean) * scale + beta.
    """
    c_out, c_in = conv_w.shape[0], conv_w.shape[1]
    scale = gamma / jnp.sqrt(var + BN_EPS)
    w_taps = jnp.transpose(conv_w, (2, 3, 1, 0)).reshape(9, c_in, c_out)
    w_taps = (w_taps * scale[None, None, :]).astype(jnp.bfloat16)
    bias = ((conv_b - mean) * scale + beta).astype(jnp.float32).reshape(1, c_out)
    return w_taps, bias


def double_conv_forward(x_nchw, params):
    # NCHW -> NHWC, spatial pad=1 (on the small raw activation, not 9x patches),
    # and bf16 cast for the HBM/MXU stream.
    x = jnp.transpose(x_nchw, (0, 2, 3, 1))
    xpad = jnp.pad(x, ((0, 0), (1, 1), (1, 1), (0, 0))).astype(jnp.bfloat16)

    w1, b1 = _fold_bn(*params["conv1"], *params["bn1"])
    w2, b2 = _fold_bn(*params["conv2"], *params["bn2"])

    y = _double_conv_call(xpad, w1, b1, w2, b2)       # (N, H, W, C_out) f32
    return jnp.transpose(y, (0, 3, 1, 2))             # NHWC -> NCHW


# --------------------------- reference (pure JAX) --------------------------- #
def _reference(x_nchw, params):
    def layer(x, conv_w, conv_b, gamma, beta, mean, var):
        y = jax.lax.conv_general_dilated(
            x, conv_w, window_strides=(1, 1), padding=((1, 1), (1, 1)),
            dimension_numbers=("NCHW", "OIHW", "NCHW"),
            precision=jax.lax.Precision.HIGHEST)
        y = y + conv_b[None, :, None, None]
        scale = gamma / jnp.sqrt(var + BN_EPS)
        y = (y - mean[None, :, None, None]) * scale[None, :, None, None] \
            + beta[None, :, None, None]
        return jnp.where(y >= 0, y, NEG_SLOPE * y)

    y = layer(x_nchw, *params["conv1"], *params["bn1"])
    return layer(y, *params["conv2"], *params["bn2"])


# --------------------------------- main ------------------------------------- #
def _init_params(key, in_channels, out_channels, mid_channels=None):
    if not mid_channels:
        mid_channels = out_channels
    ks = jax.random.split(key, 4)

    def conv(k, co, ci):
        kw, kb = jax.random.split(k)
        w = jax.random.normal(kw, (co, ci, 3, 3), jnp.float32) * 0.1
        b = jax.random.normal(kb, (co,), jnp.float32) * 0.1
        return w, b

    def bn(k, c):
        k1, k2, k3, k4 = jax.random.split(k, 4)
        gamma = 1.0 + 0.1 * jax.random.normal(k1, (c,), jnp.float32)
        beta = 0.1 * jax.random.normal(k2, (c,), jnp.float32)
        mean = 0.1 * jax.random.normal(k3, (c,), jnp.float32)
        var = 1.0 + 0.1 * jax.random.uniform(k4, (c,), jnp.float32)
        return gamma, beta, mean, var

    return {
        "conv1": conv(ks[0], mid_channels, in_channels),
        "bn1": bn(ks[1], mid_channels),
        "conv2": conv(ks[2], out_channels, mid_channels),
        "bn2": bn(ks[3], out_channels),
    }


if __name__ == "__main__":
    key = jax.random.PRNGKey(0)
    kx, kp = jax.random.split(key)

    N, C_IN, H, W = 2, 4, 16, 16
    C_OUT = 8
    x = jax.random.normal(kx, (N, C_IN, H, W), jnp.float32)
    params = _init_params(kp, C_IN, C_OUT)

    out = jax.jit(double_conv_forward)(x, params)
    out = jax.block_until_ready(out)
    assert out.shape == (N, C_OUT, H, W), out.shape

    ref = jax.block_until_ready(_reference(x, params))
    # bf16 activation/weight stream with f32 accumulation -> 2e-2 tolerance.
    assert jnp.allclose(out, ref, atol=2e-2, rtol=2e-2), \
        float(jnp.max(jnp.abs(out - ref)))

    print("KERNEL_OK")
</pallas_src>

<mosaic_0001>
module attributes {stable_mosaic.version = 11 : i64} {
  func.func @_double_conv_kernel(%arg0: i32, %arg1: memref<1x18x18x4xbf16, #tpu.memory_space<vmem>>, %arg2: memref<9x4x8xbf16, #tpu.memory_space<vmem>>, %arg3: memref<1x8xf32, #tpu.memory_space<vmem>>, %arg4: memref<9x8x8xbf16, #tpu.memory_space<vmem>>, %arg5: memref<1x8xf32, #tpu.memory_space<vmem>>, %arg6: memref<1x16x16x8xf32, #tpu.memory_space<vmem>>, %arg7: memref<18x18x8xbf16, #tpu.memory_space<vmem>>) attributes {dimension_semantics = [#tpu.dimension_semantics<parallel>], iteration_bounds = array<i64: 2>, scalar_prefetch = 0 : i64, scratch_operands = 1 : i64, tpu.core_type = #tpu.core_type<tc>, window_params = [{transform_indices = @transform_0, window_bounds = array<i64: 1, 18, 18, 4>}, {pipeline_mode = #tpu.pipeline_mode<synchronous>, transform_indices = @transform_1, window_bounds = array<i64: 9, 4, 8>}, {pipeline_mode = #tpu.pipeline_mode<synchronous>, transform_indices = @transform_2, window_bounds = array<i64: 1, 8>}, {pipeline_mode = #tpu.pipeline_mode<synchronous>, transform_indices = @transform_3, window_bounds = array<i64: 9, 8, 8>}, {pipeline_mode = #tpu.pipeline_mode<synchronous>, transform_indices = @transform_4, window_bounds = array<i64: 1, 8>}, {transform_indices = @transform_5, window_bounds = array<i64: 1, 16, 16, 8>}]} {
    %c0_i32 = arith.constant 0 : i32
    %0 = arith.cmpi eq, %arg0, %c0_i32 : i32
    %1 = arith.extui %0 : i1 to i32
    %c0_i32_0 = arith.constant 0 : i32
    %2 = arith.cmpi ne, %1, %c0_i32_0 : i32
    scf.if %2 {
      %cst_46 = arith.constant 0.000000e+00 : bf16
      %141 = vector.broadcast %cst_46 : bf16 to vector<18x18x8xbf16>
      %c0_47 = arith.constant 0 : index
      %c0_48 = arith.constant 0 : index
      %c0_49 = arith.constant 0 : index
      %142 = vector.load %arg7[%c0_47, %c0_48, %c0_49] : memref<18x18x8xbf16, #tpu.memory_space<vmem>>, vector<18x18x8xbf16>
      tpu.vector_store %arg7[%c0_47, %c0_48, %c0_49], %141 {strides = array<i32>} : memref<18x18x8xbf16, #tpu.memory_space<vmem>>, vector<18x18x8xbf16>,
    } else {
    }
    %c0 = arith.constant 0 : index
    %c0_1 = arith.constant 0 : index
    %c0_2 = arith.constant 0 : index
    %c0_3 = arith.constant 0 : index
    %3 = vector.load %arg1[%c0, %c0_1, %c0_2, %c0_3] : memref<1x18x18x4xbf16, #tpu.memory_space<vmem>>, vector<1x18x18x4xbf16>
    %4 = vector.shape_cast %3 : vector<1x18x18x4xbf16> to vector<18x18x4xbf16>
    %c0_4 = arith.constant 0 : index
    %c0_5 = arith.constant 0 : index
    %c0_6 = arith.constant 0 : index
    %5 = vector.load %arg2[%c0_4, %c0_5, %c0_6] : memref<9x4x8xbf16, #tpu.memory_space<vmem>>, vector<9x4x8xbf16>
    %c0_7 = arith.constant 0 : index
    %c0_8 = arith.constant 0 : index
    %6 = vector.load %arg3[%c0_7, %c0_8] : memref<1x8xf32, #tpu.memory_space<vmem>>, vector<1x8xf32>
    %cst = arith.constant 0.000000e+00 : f32
    %7 = vector.broadcast %cst : f32 to vector<256x8xf32>
    %8 = vector.extract_strided_slice %4 {offsets = [0, 0, 0], sizes = [16, 16, 4], strides = [1, 1, 1]} : vector<18x18x4xbf16> to vector<16x16x4xbf16>
    %9 = vector.shape_cast %8 : vector<16x16x4xbf16> to vector<256x4xbf16>
    %10 = vector.extract_strided_slice %5 {offsets = [0, 0, 0], sizes = [1, 4, 8], strides = [1, 1, 1]} : vector<9x4x8xbf16> to vector<1x4x8xbf16>
    %11 = vector.shape_cast %10 : vector<1x4x8xbf16> to vector<4x8xbf16>
    %cst_9 = arith.constant dense<0.000000e+00> : vector<256x8xf32>
    %12 = tpu.matmul %9, %11, %cst_9 {dimension_numbers = #tpu.dot_dimension_numbers<[1], [0], [0], [1], [0, 0, 1, 1], [], []>} : vector<256x4xbf16>, vector<4x8xbf16>, vector<256x8xf32> -> vector<256x8xf32>
    %13 = arith.addf %7, %12 : vector<256x8xf32>
    %14 = vector.extract_strided_slice %4 {offsets = [0, 1, 0], sizes = [16, 16, 4], strides = [1, 1, 1]} : vector<18x18x4xbf16> to vector<16x16x4xbf16>
    %15 = vector.shape_cast %14 : vector<16x16x4xbf16> to vector<256x4xbf16>
    %16 = vector.extract_strided_slice %5 {offsets = [1, 0, 0], sizes = [1, 4, 8], strides = [1, 1, 1]} : vector<9x4x8xbf16> to vector<1x4x8xbf16>
    %17 = vector.shape_cast %16 : vector<1x4x8xbf16> to vector<4x8xbf16>
    %cst_10 = arith.constant dense<0.000000e+00> : vector<256x8xf32>
    %18 = tpu.matmul %15, %17, %cst_10 {dimension_numbers = #tpu.dot_dimension_numbers<[1], [0], [0], [1], [0, 0, 1, 1], [], []>} : vector<256x4xbf16>, vector<4x8xbf16>, vector<256x8xf32> -> vector<256x8xf32>
    %19 = arith.addf %13, %18 : vector<256x8xf32>
    %20 = vector.extract_strided_slice %4 {offsets = [0, 2, 0], sizes = [16, 16, 4], strides = [1, 1, 1]} : vector<18x18x4xbf16> to vector<16x16x4xbf16>
    %21 = vector.shape_cast %20 : vector<16x16x4xbf16> to vector<256x4xbf16>
    %22 = vector.extract_strided_slice %5 {offsets = [2, 0, 0], sizes = [1, 4, 8], strides = [1, 1, 1]} : vector<9x4x8xbf16> to vector<1x4x8xbf16>
    %23 = vector.shape_cast %22 : vector<1x4x8xbf16> to vector<4x8xbf16>
    %cst_11 = arith.constant dense<0.000000e+00> : vector<256x8xf32>
    %24 = tpu.matmul %21, %23, %cst_11 {dimension_numbers = #tpu.dot_dimension_numbers<[1], [0], [0], [1], [0, 0, 1, 1], [], []>} : vector<256x4xbf16>, vector<4x8xbf16>, vector<256x8xf32> -> vector<256x8xf32>
    %25 = arith.addf %19, %24 : vector<256x8xf32>
    %26 = vector.extract_strided_slice %4 {offsets = [1, 0, 0], sizes = [16, 16, 4], strides = [1, 1, 1]} : vector<18x18x4xbf16> to vector<16x16x4xbf16>
    %27 = vector.shape_cast %26 : vector<16x16x4xbf16> to vector<256x4xbf16>
    %28 = vector.extract_strided_slice %5 {offsets = [3, 0, 0], sizes = [1, 4, 8], strides = [1, 1, 1]} : vector<9x4x8xbf16> to vector<1x4x8xbf16>
    %29 = vector.shape_cast %28 : vector<1x4x8xbf16> to vector<4x8xbf16>
    %cst_12 = arith.constant dense<0.000000e+00> : vector<256x8xf32>
    %30 = tpu.matmul %27, %29, %cst_12 {dimension_numbers = #tpu.dot_dimension_numbers<[1], [0], [0], [1], [0, 0, 1, 1], [], []>} : vector<256x4xbf16>, vector<4x8xbf16>, vector<256x8xf32> -> vector<256x8xf32>
    %31 = arith.addf %25, %30 : vector<256x8xf32>
    %32 = vector.extract_strided_slice %4 {offsets = [1, 1, 0], sizes = [16, 16, 4], strides = [1, 1, 1]} : vector<18x18x4xbf16> to vector<16x16x4xbf16>
    %33 = vector.shape_cast %32 : vector<16x16x4xbf16> to vector<256x4xbf16>
    %34 = vector.extract_strided_slice %5 {offsets = [4, 0, 0], sizes = [1, 4, 8], strides = [1, 1, 1]} : vector<9x4x8xbf16> to vector<1x4x8xbf16>
    %35 = vector.shape_cast %34 : vector<1x4x8xbf16> to vector<4x8xbf16>
    %cst_13 = arith.constant dense<0.000000e+00> : vector<256x8xf32>
    %36 = tpu.matmul %33, %35, %cst_13 {dimension_numbers = #tpu.dot_dimension_numbers<[1], [0], [0], [1], [0, 0, 1, 1], [], []>} : vector<256x4xbf16>, vector<4x8xbf16>, vector<256x8xf32> -> vector<256x8xf32>
    %37 = arith.addf %31, %36 : vector<256x8xf32>
    %38 = vector.extract_strided_slice %4 {offsets = [1, 2, 0], sizes = [16, 16, 4], strides = [1, 1, 1]} : vector<18x18x4xbf16> to vector<16x16x4xbf16>
    %39 = vector.shape_cast %38 : vector<16x16x4xbf16> to vector<256x4xbf16>
    %40 = vector.extract_strided_slice %5 {offsets = [5, 0, 0], sizes = [1, 4, 8], strides = [1, 1, 1]} : vector<9x4x8xbf16> to vector<1x4x8xbf16>
    %41 = vector.shape_cast %40 : vector<1x4x8xbf16> to vector<4x8xbf16>
    %cst_14 = arith.constant dense<0.000000e+00> : vector<256x8xf32>
    %42 = tpu.matmul %39, %41, %cst_14 {dimension_numbers = #tpu.dot_dimension_numbers<[1], [0], [0], [1], [0, 0, 1, 1], [], []>} : vector<256x4xbf16>, vector<4x8xbf16>, vector<256x8xf32> -> vector<256x8xf32>
    %43 = arith.addf %37, %42 : vector<256x8xf32>
    %44 = vector.extract_strided_slice %4 {offsets = [2, 0, 0], sizes = [16, 16, 4], strides = [1, 1, 1]} : vector<18x18x4xbf16> to vector<16x16x4xbf16>
    %45 = vector.shape_cast %44 : vector<16x16x4xbf16> to vector<256x4xbf16>
    %46 = vector.extract_strided_slice %5 {offsets = [6, 0, 0], sizes = [1, 4, 8], strides = [1, 1, 1]} : vector<9x4x8xbf16> to vector<1x4x8xbf16>
    %47 = vector.shape_cast %46 : vector<1x4x8xbf16> to vector<4x8xbf16>
    %cst_15 = arith.constant dense<0.000000e+00> : vector<256x8xf32>
    %48 = tpu.matmul %45, %47, %cst_15 {dimension_numbers = #tpu.dot_dimension_numbers<[1], [0], [0], [1], [0, 0, 1, 1], [], []>} : vector<256x4xbf16>, vector<4x8xbf16>, vector<256x8xf32> -> vector<256x8xf32>
    %49 = arith.addf %43, %48 : vector<256x8xf32>
    %50 = vector.extract_strided_slice %4 {offsets = [2, 1, 0], sizes = [16, 16, 4], strides = [1, 1, 1]} : vector<18x18x4xbf16> to vector<16x16x4xbf16>
    %51 = vector.shape_cast %50 : vector<16x16x4xbf16> to vector<256x4xbf16>
    %52 = vector.extract_strided_slice %5 {offsets = [7, 0, 0], sizes = [1, 4, 8], strides = [1, 1, 1]} : vector<9x4x8xbf16> to vector<1x4x8xbf16>
    %53 = vector.shape_cast %52 : vector<1x4x8xbf16> to vector<4x8xbf16>
    %cst_16 = arith.constant dense<0.000000e+00> : vector<256x8xf32>
    %54 = tpu.matmul %51, %53, %cst_16 {dimension_numbers = #tpu.dot_dimension_numbers<[1], [0], [0], [1], [0, 0, 1, 1], [], []>} : vector<256x4xbf16>, vector<4x8xbf16>, vector<256x8xf32> -> vector<256x8xf32>
    %55 = arith.addf %49, %54 : vector<256x8xf32>
    %56 = vector.extract_strided_slice %4 {offsets = [2, 2, 0], sizes = [16, 16, 4], strides = [1, 1, 1]} : vector<18x18x4xbf16> to vector<16x16x4xbf16>
    %57 = vector.shape_cast %56 : vector<16x16x4xbf16> to vector<256x4xbf16>
    %58 = vector.extract_strided_slice %5 {offsets = [8, 0, 0], sizes = [1, 4, 8], strides = [1, 1, 1]} : vector<9x4x8xbf16> to vector<1x4x8xbf16>
    %59 = vector.shape_cast %58 : vector<1x4x8xbf16> to vector<4x8xbf16>
    %cst_17 = arith.constant dense<0.000000e+00> : vector<256x8xf32>
    %60 = tpu.matmul %57, %59, %cst_17 {dimension_numbers = #tpu.dot_dimension_numbers<[1], [0], [0], [1], [0, 0, 1, 1], [], []>} : vector<256x4xbf16>, vector<4x8xbf16>, vector<256x8xf32> -> vector<256x8xf32>
    %61 = arith.addf %55, %60 : vector<256x8xf32>
    %62 = vector.broadcast %6 : vector<1x8xf32> to vector<256x8xf32>
    %63 = arith.addf %61, %62 : vector<256x8xf32>
    %cst_18 = arith.constant 0.000000e+00 : f32
    %64 = vector.broadcast %cst_18 : f32 to vector<256x8xf32>
    %65 = arith.cmpf oge, %63, %64 : vector<256x8xf32>
    %cst_19 = arith.constant 0.00999999977 : f32
    %66 = vector.broadcast %cst_19 : f32 to vector<256x8xf32>
    %67 = arith.mulf %66, %63 : vector<256x8xf32>
    %68 = arith.select %65, %63, %67 : vector<256x8xi1>, vector<256x8xf32>
    %69 = vector.shape_cast %68 : vector<256x8xf32> to vector<16x16x8xf32>
    %70 = arith.truncf %69 : vector<16x16x8xf32> to vector<16x16x8xbf16>
    %c1 = arith.constant 1 : index
    %c1_20 = arith.constant 1 : index
    %c0_21 = arith.constant 0 : index
    %71 = vector.load %arg7[%c1, %c1_20, %c0_21] : memref<18x18x8xbf16, #tpu.memory_space<vmem>>, vector<16x16x8xbf16>
    tpu.vector_store %arg7[%c1, %c1_20, %c0_21], %70 {strides = array<i32>} : memref<18x18x8xbf16, #tpu.memory_space<vmem>>, vector<16x16x8xbf16>,
    %c0_22 = arith.constant 0 : index
    %c0_23 = arith.constant 0 : index
    %c0_24 = arith.constant 0 : index
    %72 = vector.load %arg7[%c0_22, %c0_23, %c0_24] : memref<18x18x8xbf16, #tpu.memory_space<vmem>>, vector<18x18x8xbf16>
    %c0_25 = arith.constant 0 : index
    %c0_26 = arith.constant 0 : index
    %c0_27 = arith.constant 0 : index
    %73 = vector.load %arg4[%c0_25, %c0_26, %c0_27] : memref<9x8x8xbf16, #tpu.memory_space<vmem>>, vector<9x8x8xbf16>
    %c0_28 = arith.constant 0 : index
    %c0_29 = arith.constant 0 : index
    %74 = vector.load %arg5[%c0_28, %c0_29] : memref<1x8xf32, #tpu.memory_space<vmem>>, vector<1x8xf32>
    %cst_30 = arith.constant 0.000000e+00 : f32
    %75 = vector.broadcast %cst_30 : f32 to vector<256x8xf32>
    %76 = vector.extract_strided_slice %72 {offsets = [0, 0, 0], sizes = [16, 16, 8], strides = [1, 1, 1]} : vector<18x18x8xbf16> to vector<16x16x8xbf16>
    %77 = vector.shape_cast %76 : vector<16x16x8xbf16> to vector<256x8xbf16>
    %78 = vector.extract_strided_slice %73 {offsets = [0, 0, 0], sizes = [1, 8, 8], strides = [1, 1, 1]} : vector<9x8x8xbf16> to vector<1x8x8xbf16>
    %79 = vector.shape_cast %78 : vector<1x8x8xbf16> to vector<8x8xbf16>
    %cst_31 = arith.constant dense<0.000000e+00> : vector<256x8xf32>
    %80 = tpu.matmul %77, %79, %cst_31 {dimension_numbers = #tpu.dot_dimension_numbers<[1], [0], [0], [1], [0, 0, 1, 1], [], []>} : vector<256x8xbf16>, vector<8x8xbf16>, vector<256x8xf32> -> vector<256x8xf32>
    %81 = arith.addf %75, %80 : vector<256x8xf32>
    %82 = vector.extract_strided_slice %72 {offsets = [0, 1, 0], sizes = [16, 16, 8], strides = [1, 1, 1]} : vector<18x18x8xbf16> to vector<16x16x8xbf16>
    %83 = vector.shape_cast %82 : vector<16x16x8xbf16> to vector<256x8xbf16>
    %84 = vector.extract_strided_slice %73 {offsets = [1, 0, 0], sizes = [1, 8, 8], strides = [1, 1, 1]} : vector<9x8x8xbf16> to vector<1x8x8xbf16>
    %85 = vector.shape_cast %84 : vector<1x8x8xbf16> to vector<8x8xbf16>
    %cst_32 = arith.constant dense<0.000000e+00> : vector<256x8xf32>
    %86 = tpu.matmul %83, %85, %cst_32 {dimension_numbers = #tpu.dot_dimension_numbers<[1], [0], [0], [1], [0, 0, 1, 1], [], []>} : vector<256x8xbf16>, vector<8x8xbf16>, vector<256x8xf32> -> vector<256x8xf32>
    %87 = arith.addf %81, %86 : vector<256x8xf32>
    %88 = vector.extract_strided_slice %72 {offsets = [0, 2, 0], sizes = [16, 16, 8], strides = [1, 1, 1]} : vector<18x18x8xbf16> to vector<16x16x8xbf16>
    %89 = vector.shape_cast %88 : vector<16x16x8xbf16> to vector<256x8xbf16>
    %90 = vector.extract_strided_slice %73 {offsets = [2, 0, 0], sizes = [1, 8, 8], strides = [1, 1, 1]} : vector<9x8x8xbf16> to vector<1x8x8xbf16>
    %91 = vector.shape_cast %90 : vector<1x8x8xbf16> to vector<8x8xbf16>
    %cst_33 = arith.constant dense<0.000000e+00> : vector<256x8xf32>
    %92 = tpu.matmul %89, %91, %cst_33 {dimension_numbers = #tpu.dot_dimension_numbers<[1], [0], [0], [1], [0, 0, 1, 1], [], []>} : vector<256x8xbf16>, vector<8x8xbf16>, vector<256x8xf32> -> vector<256x8xf32>
    %93 = arith.addf %87, %92 : vector<256x8xf32>
    %94 = vector.extract_strided_slice %72 {offsets = [1, 0, 0], sizes = [16, 16, 8], strides = [1, 1, 1]} : vector<18x18x8xbf16> to vector<16x16x8xbf16>
    %95 = vector.shape_cast %94 : vector<16x16x8xbf16> to vector<256x8xbf16>
    %96 = vector.extract_strided_slice %73 {offsets = [3, 0, 0], sizes = [1, 8, 8], strides = [1, 1, 1]} : vector<9x8x8xbf16> to vector<1x8x8xbf16>
    %97 = vector.shape_cast %96 : vector<1x8x8xbf16> to vector<8x8xbf16>
    %cst_34 = arith.constant dense<0.000000e+00> : vector<256x8xf32>
    %98 = tpu.matmul %95, %97, %cst_34 {dimension_numbers = #tpu.dot_dimension_numbers<[1], [0], [0], [1], [0, 0, 1, 1], [], []>} : vector<256x8xbf16>, vector<8x8xbf16>, vector<256x8xf32> -> vector<256x8xf32>
    %99 = arith.addf %93, %98 : vector<256x8xf32>
    %100 = vector.extract_strided_slice %72 {offsets = [1, 1, 0], sizes = [16, 16, 8], strides = [1, 1, 1]} : vector<18x18x8xbf16> to vector<16x16x8xbf16>
    %101 = vector.shape_cast %100 : vector<16x16x8xbf16> to vector<256x8xbf16>
    %102 = vector.extract_strided_slice %73 {offsets = [4, 0, 0], sizes = [1, 8, 8], strides = [1, 1, 1]} : vector<9x8x8xbf16> to vector<1x8x8xbf16>
    %103 = vector.shape_cast %102 : vector<1x8x8xbf16> to vector<8x8xbf16>
    %cst_35 = arith.constant dense<0.000000e+00> : vector<256x8xf32>
    %104 = tpu.matmul %101, %103, %cst_35 {dimension_numbers = #tpu.dot_dimension_numbers<[1], [0], [0], [1], [0, 0, 1, 1], [], []>} : vector<256x8xbf16>, vector<8x8xbf16>, vector<256x8xf32> -> vector<256x8xf32>
    %105 = arith.addf %99, %104 : vector<256x8xf32>
    %106 = vector.extract_strided_slice %72 {offsets = [1, 2, 0], sizes = [16, 16, 8], strides = [1, 1, 1]} : vector<18x18x8xbf16> to vector<16x16x8xbf16>
    %107 = vector.shape_cast %106 : vector<16x16x8xbf16> to vector<256x8xbf16>
    %108 = vector.extract_strided_slice %73 {offsets = [5, 0, 0], sizes = [1, 8, 8], strides = [1, 1, 1]} : vector<9x8x8xbf16> to vector<1x8x8xbf16>
    %109 = vector.shape_cast %108 : vector<1x8x8xbf16> to vector<8x8xbf16>
    %cst_36 = arith.constant dense<0.000000e+00> : vector<256x8xf32>
    %110 = tpu.matmul %107, %109, %cst_36 {dimension_numbers = #tpu.dot_dimension_numbers<[1], [0], [0], [1], [0, 0, 1, 1], [], []>} : vector<256x8xbf16>, vector<8x8xbf16>, vector<256x8xf32> -> vector<256x8xf32>
    %111 = arith.addf %105, %110 : vector<256x8xf32>
    %112 = vector.extract_strided_slice %72 {offsets = [2, 0, 0], sizes = [16, 16, 8], strides = [1, 1, 1]} : vector<18x18x8xbf16> to vector<16x16x8xbf16>
    %113 = vector.shape_cast %112 : vector<16x16x8xbf16> to vector<256x8xbf16>
    %114 = vector.extract_strided_slice %73 {offsets = [6, 0, 0], sizes = [1, 8, 8], strides = [1, 1, 1]} : vector<9x8x8xbf16> to vector<1x8x8xbf16>
    %115 = vector.shape_cast %114 : vector<1x8x8xbf16> to vector<8x8xbf16>
    %cst_37 = arith.constant dense<0.000000e+00> : vector<256x8xf32>
    %116 = tpu.matmul %113, %115, %cst_37 {dimension_numbers = #tpu.dot_dimension_numbers<[1], [0], [0], [1], [0, 0, 1, 1], [], []>} : vector<256x8xbf16>, vector<8x8xbf16>, vector<256x8xf32> -> vector<256x8xf32>
    %117 = arith.addf %111, %116 : vector<256x8xf32>
    %118 = vector.extract_strided_slice %72 {offsets = [2, 1, 0], sizes = [16, 16, 8], strides = [1, 1, 1]} : vector<18x18x8xbf16> to vector<16x16x8xbf16>
    %119 = vector.shape_cast %118 : vector<16x16x8xbf16> to vector<256x8xbf16>
    %120 = vector.extract_strided_slice %73 {offsets = [7, 0, 0], sizes = [1, 8, 8], strides = [1, 1, 1]} : vector<9x8x8xbf16> to vector<1x8x8xbf16>
    %121 = vector.shape_cast %120 : vector<1x8x8xbf16> to vector<8x8xbf16>
    %cst_38 = arith.constant dense<0.000000e+00> : vector<256x8xf32>
    %122 = tpu.matmul %119, %121, %cst_38 {dimension_numbers = #tpu.dot_dimension_numbers<[1], [0], [0], [1], [0, 0, 1, 1], [], []>} : vector<256x8xbf16>, vector<8x8xbf16>, vector<256x8xf32> -> vector<256x8xf32>
    %123 = arith.addf %117, %122 : vector<256x8xf32>
    %124 = vector.extract_strided_slice %72 {offsets = [2, 2, 0], sizes = [16, 16, 8], strides = [1, 1, 1]} : vector<18x18x8xbf16> to vector<16x16x8xbf16>
    %125 = vector.shape_cast %124 : vector<16x16x8xbf16> to vector<256x8xbf16>
    %126 = vector.extract_strided_slice %73 {offsets = [8, 0, 0], sizes = [1, 8, 8], strides = [1, 1, 1]} : vector<9x8x8xbf16> to vector<1x8x8xbf16>
    %127 = vector.shape_cast %126 : vector<1x8x8xbf16> to vector<8x8xbf16>
    %cst_39 = arith.constant dense<0.000000e+00> : vector<256x8xf32>
    %128 = tpu.matmul %125, %127, %cst_39 {dimension_numbers = #tpu.dot_dimension_numbers<[1], [0], [0], [1], [0, 0, 1, 1], [], []>} : vector<256x8xbf16>, vector<8x8xbf16>, vector<256x8xf32> -> vector<256x8xf32>
    %129 = arith.addf %123, %128 : vector<256x8xf32>
    %130 = vector.broadcast %74 : vector<1x8xf32> to vector<256x8xf32>
    %131 = arith.addf %129, %130 : vector<256x8xf32>
    %cst_40 = arith.constant 0.000000e+00 : f32
    %132 = vector.broadcast %cst_40 : f32 to vector<256x8xf32>
    %133 = arith.cmpf oge, %131, %132 : vector<256x8xf32>
    %cst_41 = arith.constant 0.00999999977 : f32
    %134 = vector.broadcast %cst_41 : f32 to vector<256x8xf32>
    %135 = arith.mulf %134, %131 : vector<256x8xf32>
    %136 = arith.select %133, %131, %135 : vector<256x8xi1>, vector<256x8xf32>
    %137 = vector.shape_cast %136 : vector<256x8xf32> to vector<16x16x8xf32>
    %c0_42 = arith.constant 0 : index
    %c0_43 = arith.constant 0 : index
    %c0_44 = arith.constant 0 : index
    %c0_45 = arith.constant 0 : index
    %138 = vector.load %arg6[%c0_42, %c0_43, %c0_44, %c0_45] : memref<1x16x16x8xf32, #tpu.memory_space<vmem>>, vector<1x16x16x8xf32>
    %139 = vector.shape_cast %138 : vector<1x16x16x8xf32> to vector<16x16x8xf32>
    %140 = vector.shape_cast %137 : vector<16x16x8xf32> to vector<1x16x16x8xf32>
    tpu.vector_store %arg6[%c0_42, %c0_43, %c0_44, %c0_45], %140 {strides = array<i32>} : memref<1x16x16x8xf32, #tpu.memory_space<vmem>>, vector<1x16x16x8xf32>,
    return
  }
  func.func @transform_0(%arg0: i32) -> (i32, i32, i32, i32) {
    %c0_i32 = arith.constant 0 : i32
    %c0_i32_0 = arith.constant 0 : i32
    %c0_i32_1 = arith.constant 0 : i32
    %c0_i32_2 = arith.constant 0 : i32
    return %arg0, %c0_i32, %c0_i32_0, %c0_i32_1 : i32, i32, i32, i32
  }
  func.func @transform_1(%arg0: i32) -> (i32, i32, i32) {
    %c0_i32 = arith.constant 0 : i32
    %c0_i32_0 = arith.constant 0 : i32
    %c0_i32_1 = arith.constant 0 : i32
    %c0_i32_2 = arith.constant 0 : i32
    return %c0_i32, %c0_i32_0, %c0_i32_1 : i32, i32, i32
  }
  func.func @transform_2(%arg0: i32) -> (i32, i32) {
    %c0_i32 = arith.constant 0 : i32
    %c0_i32_0 = arith.constant 0 : i32
    %c0_i32_1 = arith.constant 0 : i32
    return %c0_i32, %c0_i32_0 : i32, i32
  }
  func.func @transform_3(%arg0: i32) -> (i32, i32, i32) {
    %c0_i32 = arith.constant 0 : i32
    %c0_i32_0 = arith.constant 0 : i32
    %c0_i32_1 = arith.constant 0 : i32
    %c0_i32_2 = arith.constant 0 : i32
    return %c0_i32, %c0_i32_0, %c0_i32_1 : i32, i32, i32
  }
  func.func @transform_4(%arg0: i32) -> (i32, i32) {
    %c0_i32 = arith.constant 0 : i32
    %c0_i32_0 = arith.constant 0 : i32
    %c0_i32_1 = arith.constant 0 : i32
    return %c0_i32, %c0_i32_0 : i32, i32
  }
  func.func @transform_5(%arg0: i32) -> (i32, i32, i32, i32) {
    %c0_i32 = arith.constant 0 : i32
    %c0_i32_0 = arith.constant 0 : i32
    %c0_i32_1 = arith.constant 0 : i32
    %c0_i32_2 = arith.constant 0 : i32
    return %arg0, %c0_i32, %c0_i32_0, %c0_i32_1 : i32, i32, i32, i32
  }
}

</mosaic_0001>

<llo_original>
// kernel: double_conv_forward.1
$region0: #{double_conv_forward.1}
  #allocation0 [shape = 'u32[]', space=smem, size = 0x4, offset = 0x4, fixed_abs, tag = 'smem constant byte address 0x4 - core index']
  #allocation1 [shape = 'u32[144,128]{1,0:T(1,128)}', space=vmem, size = 0x12000, scoped, tag = 'internal scratch']
  #allocation2 [shape = 'bf16[18,18,8]{2,1,0:T(8,128)(2,1)}', space=vmem, size = 0x1b000, scoped, tag = 'scratch operand']
  %s0 = inlined_call_operand.vmem [shape: bf16[2,18,18,4], index: 0, kind: input, shape index: {}]
  %s1 = inlined_call_operand.vmem [shape: bf16[9,4,8], index: 1, kind: input, shape index: {}]
  %s2 = inlined_call_operand.vmem [shape: f32[1,8], index: 2, kind: input, shape index: {}]
  %s3 = inlined_call_operand.vmem [shape: bf16[9,8,8], index: 3, kind: input, shape index: {}]
  %s4 = inlined_call_operand.vmem [shape: f32[1,8], index: 4, kind: input, shape index: {}]
  %s5 = inlined_call_operand.vmem [shape: f32[2,16,16,8], index: 5, kind: output, shape index: {}]
  %s6 = sld [smem:[#allocation0]]
  $region57: #{double_conv_forward.1} parent=0
    _
  %s8 = ssub.s32 1, %s6
  %s9 = scalar_select 0, %s8, %s6
  loop: start=0, step=1, limit=4
  $region2: #{double_conv_forward.1} parent=0 // loop_pre_header
    _
  $region3: #{double_conv_forward.1} parent=0 // loop_header
    %s11 = sphi 0, %s15
    %p12 = scmp.ge.s32.totalorder %s11, 4
    %s21 = sphi 0, %s23
    %s24 = sphi 0, %s21
    %s25 = sphi 0, %s24
    %s41 = sphi 0, %s25
    %s45 = sphi 0, %s45
    %s47 = sphi 0, %s45
    %s48 = sphi 0, %s47
    %s62 = sphi 0, %s48
    %s66 = sphi 0, %s66
    %s68 = sphi 0, %s66
    %s69 = sphi 0, %s68
    %s83 = sphi 0, %s69
    %s87 = sphi 0, %s87
    %s89 = sphi 0, %s87
    %s90 = sphi 0, %s89
    %s104 = sphi 0, %s90
    %s108 = sphi 0, %s108
    %s110 = sphi 0, %s108
    %s111 = sphi 0, %s110
    %s125 = sphi 0, %s111
    %s131 = sphi 0, %s133
    %s134 = sphi 0, %s131
    %s135 = sphi 0, %s134
    %s151 = sphi 0, %s135
  $region4: #{double_conv_forward.1} parent=0 // loop_header_branch
    %14 = sbr.rel (%p12) target = $region8
  $region5: #{double_conv_forward.1} parent=0 // loop_body
    %s16 = ssub.s32 %s11, 1
    %s17 = ssub.s32 %s11, 2
    %s18 = sadd.s32 %s11, 1
    %s19 = ssub.s32 %s11, %s18
    %p20 = scmp.eq.s32.totalorder %s19, 0
    %s22 = sadd.s32 %s21, 1
    %s23 = scalar_select %p20, %s21, %s22
    %p26 = pneg %p20
    %p27 = scmp.eq.s32.totalorder %s11, 1
    %p28 = por %p26, %p27
    %p29 = scmp.ne.s32.totalorder %s21, %s24
    %p30 = scmp.eq.s32.totalorder %s11, 0
    %p31 = por %p29, %p30
    %p32 = scmp.ne.s32.totalorder %s21, %s24
    %p33 = scmp.eq.s32.totalorder %s16, 1
    %p34 = por %p32, %p33
    %p35 = scmp.ne.s32.totalorder %s24, %s25
    %p36 = scmp.eq.s32.totalorder %s16, 0
    %p37 = por %p35, %p36
    %p38 = scmp.ne.s32.totalorder %s24, %s25
    %p39 = scmp.eq.s32.totalorder %s17, 1
    %p40 = por %p38, %p39
    %p42 = scmp.ne.s32.totalorder %s25, %s41
    %p43 = scmp.eq.s32.totalorder %s17, 0
    %p44 = por %p42, %p43
    %s46 = sadd.s32 %s45, 1
    %p49 = scmp.eq.s32.totalorder %s11, 1
    %p50 = scmp.ne.s32.totalorder %s45, %s47
    %p51 = scmp.eq.s32.totalorder %s11, 0
    %p52 = por %p50, %p51
    %p53 = scmp.ne.s32.totalorder %s45, %s47
    %p54 = scmp.eq.s32.totalorder %s16, 1
    %p55 = por %p53, %p54
    %p56 = scmp.ne.s32.totalorder %s47, %s48
    %p57 = scmp.eq.s32.totalorder %s16, 0
    %p58 = por %p56, %p57
    %p59 = scmp.ne.s32.totalorder %s47, %s48
    %p60 = scmp.eq.s32.totalorder %s17, 1
    %p61 = por %p59, %p60
    %p63 = scmp.ne.s32.totalorder %s48, %s62
    %p64 = scmp.eq.s32.totalorder %s17, 0
    %p65 = por %p63, %p64
    %s67 = sadd.s32 %s66, 1
    %p70 = scmp.eq.s32.totalorder %s11, 1
    %p71 = scmp.ne.s32.totalorder %s66, %s68
    %p72 = scmp.eq.s32.totalorder %s11, 0
    %p73 = por %p71, %p72
    %p74 = scmp.ne.s32.totalorder %s66, %s68
    %p75 = scmp.eq.s32.totalorder %s16, 1
    %p76 = por %p74, %p75
    %p77 = scmp.ne.s32.totalorder %s68, %s69
    %p78 = scmp.eq.s32.totalorder %s16, 0
    %p79 = por %p77, %p78
    %p80 = scmp.ne.s32.totalorder %s68, %s69
    %p81 = scmp.eq.s32.totalorder %s17, 1
    %p82 = por %p80, %p81
    %p84 = scmp.ne.s32.totalorder %s69, %s83
    %p85 = scmp.eq.s32.totalorder %s17, 0
    %p86 = por %p84, %p85
    %s88 = sadd.s32 %s87, 1
    %p91 = scmp.eq.s32.totalorder %s11, 1
    %p92 = scmp.ne.s32.totalorder %s87, %s89
    %p93 = scmp.eq.s32.totalorder %s11, 0
    %p94 = por %p92, %p93
    %p95 = scmp.ne.s32.totalorder %s87, %s89
    %p96 = scmp.eq.s32.totalorder %s16, 1
    %p97 = por %p95, %p96
    %p98 = scmp.ne.s32.totalorder %s89, %s90
    %p99 = scmp.eq.s32.totalorder %s16, 0
    %p100 = por %p98, %p99
    %p101 = scmp.ne.s32.totalorder %s89, %s90
    %p102 = scmp.eq.s32.totalorder %s17, 1
    %p103 = por %p101, %p102
    %p105 = scmp.ne.s32.totalorder %s90, %s104
    %p106 = scmp.eq.s32.totalorder %s17, 0
    %p107 = por %p105, %p106
    %s109 = sadd.s32 %s108, 1
    %p112 = scmp.eq.s32.totalorder %s11, 1
    %p113 = scmp.ne.s32.totalorder %s108, %s110
    %p114 = scmp.eq.s32.totalorder %s11, 0
    %p115 = por %p113, %p114
    %p116 = scmp.ne.s32.totalorder %s108, %s110
    %p117 = scmp.eq.s32.totalorder %s16, 1
    %p118 = por %p116, %p117
    %p119 = scmp.ne.s32.totalorder %s110, %s111
    %p120 = scmp.eq.s32.totalorder %s16, 0
    %p121 = por %p119, %p120
    %p122 = scmp.ne.s32.totalorder %s110, %s111
    %p123 = scmp.eq.s32.totalorder %s17, 1
    %p124 = por %p122, %p123
    %p126 = scmp.ne.s32.totalorder %s111, %s125
    %p127 = scmp.eq.s32.totalorder %s17, 0
    %p128 = por %p126, %p127
    %s129 = ssub.s32 %s11, %s18
    %p130 = scmp.eq.s32.totalorder %s129, 0
    %s132 = sadd.s32 %s131, 1
    %s133 = scalar_select %p130, %s131, %s132
    %p136 = pneg %p130
    %p137 = scmp.eq.s32.totalorder %s11, 1
    %p138 = por %p136, %p137
    %p139 = scmp.ne.s32.totalorder %s131, %s134
    %p140 = scmp.eq.s32.totalorder %s11, 0
    %p141 = por %p139, %p140
    %p142 = scmp.ne.s32.totalorder %s131, %s134
    %p143 = scmp.eq.s32.totalorder %s16, 1
    %p144 = por %p142, %p143
    %p145 = scmp.ne.s32.totalorder %s134, %s135
    %p146 = scmp.eq.s32.totalorder %s16, 0
    %p147 = por %p145, %p146
    %p148 = scmp.ne.s32.totalorder %s134, %s135
    %p149 = scmp.eq.s32.totalorder %s17, 1
    %p150 = por %p148, %p149
    %p152 = scmp.ne.s32.totalorder %s135, %s151
    %p153 = scmp.eq.s32.totalorder %s17, 0
    %p154 = por %p152, %p153
    %p155 = scmp.le.s32.totalorder 1, %s11
    %p156 = scmp.lt.s32.totalorder %s11, 3
    %p157 = pnand %p155, %p156
    %p158 = pneg %p157
    // Predicated region
    $region9: #{double_conv_forward.1} parent=5 // pred_check
      _
    $region10: #{double_conv_forward.1} parent=5 // pred_check_branch
      %160 = sbr.rel (%p157) target = $region12
    $region11: #{double_conv_forward.1} parent=5 // pred_region
      %s161 = ssub.s32 %s11, 1
      // Predicated region
      $region13: #{double_conv_forward.1} parent=11 // pred_check
        %p162 = pneg %p58
      $region14: #{double_conv_forward.1} parent=11 // pred_check_branch
        %164 = sbr.rel (%p162) target = $region16
      $region15: #{double_conv_forward.1} parent=11 // pred_region
        _
      $region16: #{double_conv_forward.1} parent=11 // pred_fallthru
        _
      // Predicated region
      $region17: #{double_conv_forward.1} parent=11 // pred_check
        %p165 = pneg %p79
      $region18: #{double_conv_forward.1} parent=11 // pred_check_branch
        %167 = sbr.rel (%p165) target = $region20
      $region19: #{double_conv_forward.1} parent=11 // pred_region
        _
      $region20: #{double_conv_forward.1} parent=11 // pred_fallthru
        _
      // Predicated region
      $region21: #{double_conv_forward.1} parent=11 // pred_check
        %p168 = pneg %p100
      $region22: #{double_conv_forward.1} parent=11 // pred_check_branch
        %170 = sbr.rel (%p168) target = $region24
      $region23: #{double_conv_forward.1} parent=11 // pred_region
        _
      $region24: #{double_conv_forward.1} parent=11 // pred_fallthru
        _
      // Predicated region
      $region25: #{double_conv_forward.1} parent=11 // pred_check
        %p171 = pneg %p121
      $region26: #{double_conv_forward.1} parent=11 // pred_check_branch
        %173 = sbr.rel (%p171) target = $region28
      $region27: #{double_conv_forward.1} parent=11 // pred_region
        _
      $region28: #{double_conv_forward.1} parent=11 // pred_fallthru
        _
    $region12: #{double_conv_forward.1} parent=5 // pred_fallthru
      _
    %p174 = scmp.lt.s32.totalorder %s11, 2
    // Predicated region
    $region29: #{double_conv_forward.1} parent=5 // pred_check
      %p175 = pneg %p174
    $region30: #{double_conv_forward.1} parent=5 // pred_check_branch
      %177 = sbr.rel (%p175) target = $region32
    $region31: #{double_conv_forward.1} parent=5 // pred_region
      // Predicated region
      $region33: #{double_conv_forward.1} parent=31 // pred_check
        %p178 = pneg %p31
      $region34: #{double_conv_forward.1} parent=31 // pred_check_branch
        %180 = sbr.rel (%p178) target = $region36
      $region35: #{double_conv_forward.1} parent=31 // pred_region
        %p181 = scmp.lt.s32.totalorder %s11, 1
        %s182 = scalar_select %p181, %s11, 1
        %s183 = smul.addr %s182, 54
        %s184 = smul.addr %s183, 4
        %s185 = scalar_lea.vmem %s0, %s184
      $region36: #{double_conv_forward.1} parent=31 // pred_fallthru
        _
    $region32: #{double_conv_forward.1} parent=5 // pred_fallthru
      _
    %p186 = scmp.le.s32.totalorder 1, %s11
    %p187 = scmp.lt.s32.totalorder %s11, 3
    %p188 = pnand %p186, %p187
    %p189 = pneg %p188
    // Predicated region
    $region37: #{double_conv_forward.1} parent=5 // pred_check
      _
    $region38: #{double_conv_forward.1} parent=5 // pred_check_branch
      %191 = sbr.rel (%p188) target = $region40
    $region39: #{double_conv_forward.1} parent=5 // pred_region
      %s192 = ssub.s32 %s11, 1
      %p193 = scmp.lt.s32.totalorder %s16, 1
      %s194 = scalar_select %p193, %s16, 1
      %s195 = smul.addr %s194, 54
      %s196 = smul.addr %s195, 4
      %s197 = scalar_lea.vmem %s0, %s196
      %p198 = pneg %p37
      %p199 = pneg %p34
      %p200 = pneg %p58
      %p201 = pneg %p55
      %p202 = pneg %p79
      %p203 = pneg %p76
      %p204 = pneg %p100
      %p205 = pneg %p97
      %p206 = pneg %p121
      %p207 = pneg %p118
      %p208 = pneg %p147
      %p209 = pneg %p144
      %p210 = scmp.lt.s32.totalorder %s16, 1
      %s211 = scalar_select %p210, %s16, 1
      %s212 = smul.addr %s211, 32
      %s213 = smul.addr %s212, 8
      %s214 = scalar_lea.vmem %s5, %s213
      %p215 = scmp.lt.s32.totalorder %s16, 1
      %s216 = scalar_select %p215, %s16, 1
      %s217 = smul.addr %s216, 54
      %s218 = smul.addr %s217, 4
      %s219 = scalar_lea.vmem %s0, %s218
      %p220 = scmp.lt.s32.totalorder %s16, 1
      %s221 = scalar_select %p220, %s16, 1
      %s222 = smul.addr %s221, 32
      %s223 = smul.addr %s222, 8
      %s224 = scalar_lea.vmem %s5, %s223
      %p226 = scmp.eq.s32.totalorder %s16, 0
      // Predicated region
      $region41: #{double_conv_forward.1} parent=39 // pred_check
        %p227 = pneg %p226
      $region42: #{double_conv_forward.1} parent=39 // pred_check_branch
        %229 = sbr.rel (%p227) target = $region44
      $region43: #{double_conv_forward.1} parent=39 // pred_region
        %vm230 = vcmask 60416
        %231 = vst.msk [vmem:[#allocation2] sm:$0xf] %vm230, 0
        %232 = vst.msk [vmem:[#allocation2 + $0x4] sm:$0xf] %vm230, 0
        %vm233 = vcmask 57344
        %234 = vst.msk [vmem:[#allocation2 + $0x8] sm:$0x1] %vm233, 0
        %235 = vst.msk [vmem:[#allocation2 + $0xc] sm:$0xf] %vm230, 0
        %236 = vst.msk [vmem:[#allocation2 + $0x10] sm:$0xf] %vm230, 0
        %237 = vst.msk [vmem:[#allocation2 + $0x14] sm:$0x1] %vm233, 0
        %238 = vst.msk [vmem:[#allocation2 + $0x18] sm:$0xf] %vm230, 0
        %239 = vst.msk [vmem:[#allocation2 + $0x1c] sm:$0xf] %vm230, 0
        %240 = vst.msk [vmem:[#allocation2 + $0x20] sm:$0x1] %vm233, 0
        %241 = vst.msk [vmem:[#allocation2 + $0x24] sm:$0xf] %vm230, 0
        %242 = vst.msk [vmem:[#allocation2 + $0x28] sm:$0xf] %vm230, 0
        %243 = vst.msk [vmem:[#allocation2 + $0x2c] sm:$0x1] %vm233, 0
        %244 = vst.msk [vmem:[#allocation2 + $0x30] sm:$0xf] %vm230, 0
        %245 = vst.msk [vmem:[#allocation2 + $0x34] sm:$0xf] %vm230, 0
        %246 = vst.msk [vmem:[#allocation2 + $0x38] sm:$0x1] %vm233, 0
        %247 = vst.msk [vmem:[#allocation2 + $0x3c] sm:$0xf] %vm230, 0
        %248 = vst.msk [vmem:[#allocation2 + $0x40] sm:$0xf] %vm230, 0
        %249 = vst.msk [vmem:[#allocation2 + $0x44] sm:$0x1] %vm233, 0
        %250 = vst.msk [vmem:[#allocation2 + $0x48] sm:$0xf] %vm230, 0
        %251 = vst.msk [vmem:[#allocation2 + $0x4c] sm:$0xf] %vm230, 0
        %252 = vst.msk [vmem:[#allocation2 + $0x50] sm:$0x1] %vm233, 0
        %253 = vst.msk [vmem:[#allocation2 + $0x54] sm:$0xf] %vm230, 0
        %254 = vst.msk [vmem:[#allocation2 + $0x58] sm:$0xf] %vm230, 0
        %255 = vst.msk [vmem:[#allocation2 + $0x5c] sm:$0x1] %vm233, 0
        %256 = vst.msk [vmem:[#allocation2 + $0x60] sm:$0xf] %vm230, 0
        %257 = vst.msk [vmem:[#allocation2 + $0x64] sm:$0xf] %vm230, 0
        %258 = vst.msk [vmem:[#allocation2 + $0x68] sm:$0x1] %vm233, 0
        %259 = vst.msk [vmem:[#allocation2 + $0x6c] sm:$0xf] %vm230, 0
        %260 = vst.msk [vmem:[#allocation2 + $0x70] sm:$0xf] %vm230, 0
        %261 = vst.msk [vmem:[#allocation2 + $0x74] sm:$0x1] %vm233, 0
        %262 = vst.msk [vmem:[#allocation2 + $0x78] sm:$0xf] %vm230, 0
        %263 = vst.msk [vmem:[#allocation2 + $0x7c] sm:$0xf] %vm230, 0
        %264 = vst.msk [vmem:[#allocation2 + $0x80] sm:$0x1] %vm233, 0
        %265 = vst.msk [vmem:[#allocation2 + $0x84] sm:$0xf] %vm230, 0
        %266 = vst.msk [vmem:[#allocation2 + $0x88] sm:$0xf] %vm230, 0
        %267 = vst.msk [vmem:[#allocation2 + $0x8c] sm:$0x1] %vm233, 0
        %268 = vst.msk [vmem:[#allocation2 + $0x90] sm:$0xf] %vm230, 0
        %269 = vst.msk [vmem:[#allocation2 + $0x94] sm:$0xf] %vm230, 0
        %270 = vst.msk [vmem:[#allocation2 + $0x98] sm:$0x1] %vm233, 0
        %271 = vst.msk [vmem:[#allocation2 + $0x9c] sm:$0xf] %vm230, 0
        %272 = vst.msk [vmem:[#allocation2 + $0xa0] sm:$0xf] %vm230, 0
        %273 = vst.msk [vmem:[#allocation2 + $0xa4] sm:$0x1] %vm233, 0
        %274 = vst.msk [vmem:[#allocation2 + $0xa8] sm:$0xf] %vm230, 0
        %275 = vst.msk [vmem:[#allocation2 + $0xac] sm:$0xf] %vm230, 0
        %276 = vst.msk [vmem:[#allocation2 + $0xb0] sm:$0x1] %vm233, 0
        %277 = vst.msk [vmem:[#allocation2 + $0xb4] sm:$0xf] %vm230, 0
        %278 = vst.msk [vmem:[#allocation2 + $0xb8] sm:$0xf] %vm230, 0
        %279 = vst.msk [vmem:[#allocation2 + $0xbc] sm:$0x1] %vm233, 0
        %280 = vst.msk [vmem:[#allocation2 + $0xc0] sm:$0xf] %vm230, 0
        %281 = vst.msk [vmem:[#allocation2 + $0xc4] sm:$0xf] %vm230, 0
        %282 = vst.msk [vmem:[#allocation2 + $0xc8] sm:$0x1] %vm233, 0
        %283 = vst.msk [vmem:[#allocation2 + $0xcc] sm:$0xf] %vm230, 0
        %284 = vst.msk [vmem:[#allocation2 + $0xd0] sm:$0xf] %vm230, 0
        %285 = vst.msk [vmem:[#allocation2 + $0xd4] sm:$0x1] %vm233, 0
      $region44: #{double_conv_forward.1} parent=39 // pred_fallthru
        _
      %v286 = vld [vmem:[%s219] sm:$0xf]
      %v287 = vld [vmem:[%s219 + $0x4] sm:$0xf]
      %v288 = vld [vmem:[%s219 + $0x8] sm:$0x1]
      %v289 = vld [vmem:[%s219 + $0xc] sm:$0xf]
      %v290 = vld [vmem:[%s219 + $0x10] sm:$0xf]
      %v291 = vld [vmem:[%s219 + $0x14] sm:$0x1]
      %v292 = vld [vmem:[%s219 + $0x18] sm:$0xf]
      %v293 = vld [vmem:[%s219 + $0x1c] sm:$0xf]
      %v294 = vld [vmem:[%s219 + $0x20] sm:$0x1]
      %v295 = vld [vmem:[%s219 + $0x24] sm:$0xf]
      %v296 = vld [vmem:[%s219 + $0x28] sm:$0xf]
      %v297 = vld [vmem:[%s219 + $0x2c] sm:$0x1]
      %v298 = vld [vmem:[%s219 + $0x30] sm:$0xf]
      %v299 = vld [vmem:[%s219 + $0x34] sm:$0xf]
      %v300 = vld [vmem:[%s219 + $0x38] sm:$0x1]
      %v301 = vld [vmem:[%s219 + $0x3c] sm:$0xf]
      %v302 = vld [vmem:[%s219 + $0x40] sm:$0xf]
      %v303 = vld [vmem:[%s219 + $0x44] sm:$0x1]
      %v304 = vld [vmem:[%s219 + $0x48] sm:$0xf]
      %v305 = vld [vmem:[%s219 + $0x4c] sm:$0xf]
      %v306 = vld [vmem:[%s219 + $0x50] sm:$0x1]
      %v307 = vld [vmem:[%s219 + $0x54] sm:$0xf]
      %v308 = vld [vmem:[%s219 + $0x58] sm:$0xf]
      %v309 = vld [vmem:[%s219 + $0x5c] sm:$0x1]
      %v310 = vld [vmem:[%s219 + $0x60] sm:$0xf]
      %v311 = vld [vmem:[%s219 + $0x64] sm:$0xf]
      %v312 = vld [vmem:[%s219 + $0x68] sm:$0x1]
      %v313 = vld [vmem:[%s219 + $0x6c] sm:$0xf]
      %v314 = vld [vmem:[%s219 + $0x70] sm:$0xf]
      %v315 = vld [vmem:[%s219 + $0x74] sm:$0x1]
      %v316 = vld [vmem:[%s219 + $0x78] sm:$0xf]
      %v317 = vld [vmem:[%s219 + $0x7c] sm:$0xf]
      %v318 = vld [vmem:[%s219 + $0x80] sm:$0x1]
      %v319 = vld [vmem:[%s219 + $0x84] sm:$0xf]
      %v320 = vld [vmem:[%s219 + $0x88] sm:$0xf]
      %v321 = vld [vmem:[%s219 + $0x8c] sm:$0x1]
      %v322 = vld [vmem:[%s219 + $0x90] sm:$0xf]
      %v323 = vld [vmem:[%s219 + $0x94] sm:$0xf]
      %v324 = vld [vmem:[%s219 + $0x98] sm:$0x1]
      %v325 = vld [vmem:[%s219 + $0x9c] sm:$0xf]
      %v326 = vld [vmem:[%s219 + $0xa0] sm:$0xf]
      %v327 = vld [vmem:[%s219 + $0xa4] sm:$0x1]
      %v328 = vld [vmem:[%s219 + $0xa8] sm:$0xf]
      %v329 = vld [vmem:[%s219 + $0xac] sm:$0xf]
      %v330 = vld [vmem:[%s219 + $0xb0] sm:$0x1]
      %v331 = vld [vmem:[%s219 + $0xb4] sm:$0xf]
      %v332 = vld [vmem:[%s219 + $0xb8] sm:$0xf]
      %v333 = vld [vmem:[%s219 + $0xbc] sm:$0x1]
      %v334 = vld [vmem:[%s219 + $0xc0] sm:$0xf]
      %v335 = vld [vmem:[%s219 + $0xc4] sm:$0xf]
      %v336 = vld [vmem:[%s219 + $0xc8] sm:$0x1]
      %v337 = vld [vmem:[%s219 + $0xcc] sm:$0xf]
      %v338 = vld [vmem:[%s219 + $0xd0] sm:$0xf]
      %v339 = vld [vmem:[%s219 + $0xd4] sm:$0x1]
      %v340 = vld [vmem:[%s1] sm:$0x3]
      %v341 = vld [vmem:[%s1 + $0x2] sm:$0x3]
      %v342 = vld [vmem:[%s1 + $0x4] sm:$0x3]
      %v343 = vld [vmem:[%s1 + $0x6] sm:$0x3]
      %v344 = vld [vmem:[%s1 + $0x8] sm:$0x3]
      %v345 = vld [vmem:[%s1 + $0xa] sm:$0x3]
      %v346 = vld [vmem:[%s1 + $0xc] sm:$0x3]
      %v347 = vld [vmem:[%s1 + $0xe] sm:$0x3]
      %v348 = vld [vmem:[%s1 + $0x10] sm:$0x3]
      %v349 = vld [vmem:[%s2] sm:$0x1]
      %vm350 = vsmask.f32 3328
      %vm351 = vsmask.f32 7440
      %vm352 = vmor %vm350, %vm351
      %v354 = vshrl.u32 %v286, 16
      %v356 = vrot.slane %v354, 4
      %v357 = vshll.u32 %v286, 16
      %v359 = vrot.slane %v357, 5
      %v360 = vor.u32 %v356, %v359
      %v361 = vrot.slane %v360, 4
      %v363 = vshll.u32 %v287, 16
      %v365 = vrot.slane %v363, 5
      %v366 = vsel %vm352, %v361, %v365
      %v367 = vshrl.u32 %v287, 16
      %v369 = vrot.slane %v367, 4
      %v370 = vor.u32 %v369, %v365
      %v371 = vrot.slane %v370, 4
      %v373 = vshll.u32 %v288, 16
      %v375 = vrot.slane %v373, 5
      %v376 = vsel %vm352, %v371, %v375
      %v378 = vshrl.u32 %v289, 16
      %v380 = vrot.slane %v378, 4
      %v381 = vshll.u32 %v289, 16
      %v383 = vrot.slane %v381, 5
      %v384 = vor.u32 %v380, %v383
      %v385 = vrot.slane %v384, 4
      %v387 = vshll.u32 %v290, 16
      %v389 = vrot.slane %v387, 5
      %v390 = vsel %vm352, %v385, %v389
      %v391 = vshrl.u32 %v290, 16
      %v393 = vrot.slane %v391, 4
      %v394 = vor.u32 %v393, %v389
      %v395 = vrot.slane %v394, 4
      %v397 = vshll.u32 %v291, 16
      %v399 = vrot.slane %v397, 5
      %v400 = vsel %vm352, %v395, %v399
      %v402 = vshrl.u32 %v292, 16
      %v404 = vrot.slane %v402, 4
      %v405 = vshll.u32 %v292, 16
      %v407 = vrot.slane %v405, 5
      %v408 = vor.u32 %v404, %v407
      %v409 = vrot.slane %v408, 4
      %v411 = vshll.u32 %v293, 16
      %v413 = vrot.slane %v411, 5
      %v414 = vsel %vm352, %v409, %v413
      %v415 = vshrl.u32 %v293, 16
      %v417 = vrot.slane %v415, 4
      %v418 = vor.u32 %v417, %v413
      %v419 = vrot.slane %v418, 4
      %v421 = vshll.u32 %v294, 16
      %v423 = vrot.slane %v421, 5
      %v424 = vsel %vm352, %v419, %v423
      %v426 = vshrl.u32 %v295, 16
      %v428 = vrot.slane %v426, 4
      %v429 = vshll.u32 %v295, 16
      %v431 = vrot.slane %v429, 5
      %v432 = vor.u32 %v428, %v431
      %v433 = vrot.slane %v432, 4
      %v435 = vshll.u32 %v296, 16
      %v437 = vrot.slane %v435, 5
      %v438 = vsel %vm352, %v433, %v437
      %v439 = vshrl.u32 %v296, 16
      %v441 = vrot.slane %v439, 4
      %v442 = vor.u32 %v441, %v437
      %v443 = vrot.slane %v442, 4
      %v445 = vshll.u32 %v297, 16
      %v447 = vrot.slane %v445, 5
      %v448 = vsel %vm352, %v443, %v447
      %v450 = vshrl.u32 %v298, 16
      %v452 = vrot.slane %v450, 4
      %v453 = vshll.u32 %v298, 16
      %v455 = vrot.slane %v453, 5
      %v456 = vor.u32 %v452, %v455
      %v457 = vrot.slane %v456, 4
      %v459 = vshll.u32 %v299, 16
      %v461 = vrot.slane %v459, 5
      %v462 = vsel %vm352, %v457, %v461
      %v463 = vshrl.u32 %v299, 16
      %v465 = vrot.slane %v463, 4
      %v466 = vor.u32 %v465, %v461
      %v467 = vrot.slane %v466, 4
      %v469 = vshll.u32 %v300, 16
      %v471 = vrot.slane %v469, 5
      %v472 = vsel %vm352, %v467, %v471
      %v474 = vshrl.u32 %v301, 16
      %v476 = vrot.slane %v474, 4
      %v477 = vshll.u32 %v301, 16
      %v479 = vrot.slane %v477, 5
      %v480 = vor.u32 %v476, %v479
      %v481 = vrot.slane %v480, 4
      %v483 = vshll.u32 %v302, 16
      %v485 = vrot.slane %v483, 5
      %v486 = vsel %vm352, %v481, %v485
      %v487 = vshrl.u32 %v302, 16
      %v489 = vrot.slane %v487, 4
      %v490 = vor.u32 %v489, %v485
      %v491 = vrot.slane %v490, 4
      %v493 = vshll.u32 %v303, 16
      %v495 = vrot.slane %v493, 5
      %v496 = vsel %vm352, %v491, %v495
      %v498 = vshrl.u32 %v304, 16
      %v500 = vrot.slane %v498, 4
      %v501 = vshll.u32 %v304, 16
      %v503 = vrot.slane %v501, 5
      %v504 = vor.u32 %v500, %v503
      %v505 = vrot.slane %v504, 4
      %v507 = vshll.u32 %v305, 16
      %v509 = vrot.slane %v507, 5
      %v510 = vsel %vm352, %v505, %v509
      %v511 = vshrl.u32 %v305, 16
      %v513 = vrot.slane %v511, 4
      %v514 = vor.u32 %v513, %v509
      %v515 = vrot.slane %v514, 4
      %v517 = vshll.u32 %v306, 16
      %v519 = vrot.slane %v517, 5
      %v520 = vsel %vm352, %v515, %v519
      %v522 = vshrl.u32 %v307, 16
      %v524 = vrot.slane %v522, 4
      %v525 = vshll.u32 %v307, 16
      %v527 = vrot.slane %v525, 5
      %v528 = vor.u32 %v524, %v527
      %v529 = vrot.slane %v528, 4
      %v531 = vshll.u32 %v308, 16
      %v533 = vrot.slane %v531, 5
      %v534 = vsel %vm352, %v529, %v533
      %v535 = vshrl.u32 %v308, 16
      %v537 = vrot.slane %v535, 4
      %v538 = vor.u32 %v537, %v533
      %v539 = vrot.slane %v538, 4
      %v541 = vshll.u32 %v309, 16
      %v543 = vrot.slane %v541, 5
      %v544 = vsel %vm352, %v539, %v543
      %v546 = vshrl.u32 %v310, 16
      %v548 = vrot.slane %v546, 4
      %v549 = vshll.u32 %v310, 16
      %v551 = vrot.slane %v549, 5
      %v552 = vor.u32 %v548, %v551
      %v553 = vrot.slane %v552, 4
      %v555 = vshll.u32 %v311, 16
      %v557 = vrot.slane %v555, 5
      %v558 = vsel %vm352, %v553, %v557
      %v559 = vshrl.u32 %v311, 16
      %v561 = vrot.slane %v559, 4
      %v562 = vor.u32 %v561, %v557
      %v563 = vrot.slane %v562, 4
      %v565 = vshll.u32 %v312, 16
      %v567 = vrot.slane %v565, 5
      %v568 = vsel %vm352, %v563, %v567
      %v570 = vshrl.u32 %v313, 16
      %v572 = vrot.slane %v570, 4
      %v573 = vshll.u32 %v313, 16
      %v575 = vrot.slane %v573, 5
      %v576 = vor.u32 %v572, %v575
      %v577 = vrot.slane %v576, 4
      %v579 = vshll.u32 %v314, 16
      %v581 = vrot.slane %v579, 5
      %v582 = vsel %vm352, %v577, %v581
      %v583 = vshrl.u32 %v314, 16
      %v585 = vrot.slane %v583, 4
      %v586 = vor.u32 %v585, %v581
      %v587 = vrot.slane %v586, 4
      %v589 = vshll.u32 %v315, 16
      %v591 = vrot.slane %v589, 5
      %v592 = vsel %vm352, %v587, %v591
      %v594 = vshrl.u32 %v316, 16
      %v596 = vrot.slane %v594, 4
      %v597 = vshll.u32 %v316, 16
      %v599 = vrot.slane %v597, 5
      %v600 = vor.u32 %v596, %v599
      %v601 = vrot.slane %v600, 4
      %v603 = vshll.u32 %v317, 16
      %v605 = vrot.slane %v603, 5
      %v606 = vsel %vm352, %v601, %v605
      %v607 = vshrl.u32 %v317, 16
      %v609 = vrot.slane %v607, 4
      %v610 = vor.u32 %v609, %v605
      %v611 = vrot.slane %v610, 4
      %v613 = vshll.u32 %v318, 16
      %v615 = vrot.slane %v613, 5
      %v616 = vsel %vm352, %v611, %v615
      %v618 = vshrl.u32 %v319, 16
      %v620 = vrot.slane %v618, 4
      %v621 = vshll.u32 %v319, 16
      %v623 = vrot.slane %v621, 5
      %v624 = vor.u32 %v620, %v623
      %v625 = vrot.slane %v624, 4
      %v627 = vshll.u32 %v320, 16
      %v629 = vrot.slane %v627, 5
      %v630 = vsel %vm352, %v625, %v629
      %v631 = vshrl.u32 %v320, 16
      %v633 = vrot.slane %v631, 4
      %v634 = vor.u32 %v633, %v629
      %v635 = vrot.slane %v634, 4
      %v637 = vshll.u32 %v321, 16
      %v639 = vrot.slane %v637, 5
      %v640 = vsel %vm352, %v635, %v639
      %v642 = vshrl.u32 %v322, 16
      %v644 = vrot.slane %v642, 4
      %v645 = vshll.u32 %v322, 16
      %v647 = vrot.slane %v645, 5
      %v648 = vor.u32 %v644, %v647
      %v649 = vrot.slane %v648, 4
      %v651 = vshll.u32 %v323, 16
      %v653 = vrot.slane %v651, 5
      %v654 = vsel %vm352, %v649, %v653
      %v655 = vshrl.u32 %v323, 16
      %v657 = vrot.slane %v655, 4
      %v658 = vor.u32 %v657, %v653
      %v659 = vrot.slane %v658, 4
      %v661 = vshll.u32 %v324, 16
      %v663 = vrot.slane %v661, 5
      %v664 = vsel %vm352, %v659, %v663
      %v666 = vshrl.u32 %v325, 16
      %v668 = vrot.slane %v666, 4
      %v669 = vshll.u32 %v325, 16
      %v671 = vrot.slane %v669, 5
      %v672 = vor.u32 %v668, %v671
      %v673 = vrot.slane %v672, 4
      %v675 = vshll.u32 %v326, 16
      %v677 = vrot.slane %v675, 5
      %v678 = vsel %vm352, %v673, %v677
      %v679 = vshrl.u32 %v326, 16
      %v681 = vrot.slane %v679, 4
      %v682 = vor.u32 %v681, %v677
      %v683 = vrot.slane %v682, 4
      %v685 = vshll.u32 %v327, 16
      %v687 = vrot.slane %v685, 5
      %v688 = vsel %vm352, %v683, %v687
      %v690 = vshrl.u32 %v328, 16
      %v692 = vrot.slane %v690, 4
      %v693 = vshll.u32 %v328, 16
      %v695 = vrot.slane %v693, 5
      %v696 = vor.u32 %v692, %v695
      %v697 = vrot.slane %v696, 4
      %v699 = vshll.u32 %v329, 16
      %v701 = vrot.slane %v699, 5
      %v702 = vsel %vm352, %v697, %v701
      %v703 = vshrl.u32 %v329, 16
      %v705 = vrot.slane %v703, 4
      %v706 = vor.u32 %v705, %v701
      %v707 = vrot.slane %v706, 4
      %v709 = vshll.u32 %v330, 16
      %v711 = vrot.slane %v709, 5
      %v712 = vsel %vm352, %v707, %v711
      %v714 = vshrl.u32 %v331, 16
      %v716 = vrot.slane %v714, 4
      %v717 = vshll.u32 %v331, 16
      %v719 = vrot.slane %v717, 5
      %v720 = vor.u32 %v716, %v719
      %v721 = vrot.slane %v720, 4
      %v723 = vshll.u32 %v332, 16
      %v725 = vrot.slane %v723, 5
      %v726 = vsel %vm352, %v721, %v725
      %v727 = vshrl.u32 %v332, 16
      %v729 = vrot.slane %v727, 4
      %v730 = vor.u32 %v729, %v725
      %v731 = vrot.slane %v730, 4
      %v733 = vshll.u32 %v333, 16
      %v735 = vrot.slane %v733, 5
      %v736 = vsel %vm352, %v731, %v735
      %v737 = vunpack.c.l.b16 %v366
      %v738 = vunpack.c.l.b16 %v376
      %v739 = vunpack.c.l.b16 %v390
      %v740 = vunpack.c.l.b16 %v400
      %v741 = vunpack.c.l.b16 %v414
      %v742 = vunpack.c.l.b16 %v424
      %v743 = vunpack.c.l.b16 %v438
      %v744 = vunpack.c.l.b16 %v448
      %v745 = vunpack.c.l.b16 %v462
      %v746 = vunpack.c.l.b16 %v472
      %v747 = vunpack.c.l.b16 %v486
      %v748 = vunpack.c.l.b16 %v496
      %v749 = vunpack.c.l.b16 %v510
      %v750 = vunpack.c.l.b16 %v520
      %v751 = vunpack.c.l.b16 %v534
      %v752 = vunpack.c.l.b16 %v544
      %v753 = vunpack.c.l.b16 %v558
      %v754 = vunpack.c.l.b16 %v568
      %v755 = vunpack.c.l.b16 %v582
      %v756 = vunpack.c.l.b16 %v592
      %v757 = vunpack.c.l.b16 %v606
      %v758 = vunpack.c.l.b16 %v616
      %v759 = vunpack.c.l.b16 %v630
      %v760 = vunpack.c.l.b16 %v640
      %v761 = vunpack.c.l.b16 %v654
      %v762 = vunpack.c.l.b16 %v664
      %v763 = vunpack.c.l.b16 %v678
      %v764 = vunpack.c.l.b16 %v688
      %v765 = vunpack.c.l.b16 %v702
      %v766 = vunpack.c.l.b16 %v712
      %v767 = vunpack.c.l.b16 %v726
      %v768 = vunpack.c.l.b16 %v736
      %v769 = vpack.c.b16 %v738, %v737
      %v770 = vpack.c.b16 %v740, %v739
      %v771 = vpack.c.b16 %v742, %v741
      %v772 = vpack.c.b16 %v744, %v743
      %v773 = vpack.c.b16 %v746, %v745
      %v774 = vpack.c.b16 %v748, %v747
      %v775 = vpack.c.b16 %v750, %v749
      %v776 = vpack.c.b16 %v752, %v751
      %v777 = vpack.c.b16 %v754, %v753
      %v778 = vpack.c.b16 %v756, %v755
      %v779 = vpack.c.b16 %v758, %v757
      %v780 = vpack.c.b16 %v760, %v759
      %v781 = vpack.c.b16 %v762, %v761
      %v782 = vpack.c.b16 %v764, %v763
      %v783 = vpack.c.b16 %v766, %v765
      %v784 = vpack.c.b16 %v768, %v767
      %vm785 = vcmask 31744
      %v787 = vsel %vm785, %v769, 0
      %v790 = vsel %vm785, %v770, 0
      %v793 = vsel %vm785, %v771, 0
      %v796 = vsel %vm785, %v772, 0
      %v799 = vsel %vm785, %v773, 0
      %v802 = vsel %vm785, %v774, 0
      %v805 = vsel %vm785, %v775, 0
      %v808 = vsel %vm785, %v776, 0
      %v811 = vsel %vm785, %v777, 0
      %v814 = vsel %vm785, %v778, 0
      %v817 = vsel %vm785, %v779, 0
      %v820 = vsel %vm785, %v780, 0
      %v823 = vsel %vm785, %v781, 0
      %v826 = vsel %vm785, %v782, 0
      %v829 = vsel %vm785, %v783, 0
      %v832 = vsel %vm785, %v784, 0
      %vm834 = vcmask 1041408
      %v836 = vsel %vm834, %v341, 0
      %838 = vmatprep.subr.bf16.mxu0 0
      %839 = vmatpush1.bf16.msra.mxu0 %v836
      %840 = vmatprep.subr.bf16.mxu0 0
      %841 = vmatpush1.bf16.msra.mxu0 0
      %842 = vmatprep.subr.bf16.mxu0 0
      %843 = vmatpush1.bf16.msra.mxu0 0
      %844 = vmatprep.subr.bf16.mxu0 0
      %845 = vmatpush1.bf16.msra.mxu0 0
      %846 = vmatprep.subr.bf16.mxu0 0
      %847 = vmatpush1.bf16.msra.mxu0 0
      %848 = vmatprep.subr.bf16.mxu0 0
      %849 = vmatpush1.bf16.msra.mxu0 0
      %850 = vmatprep.subr.bf16.mxu0 0
      %851 = vmatpush1.bf16.msra.mxu0 0
      %852 = vmatprep.subr.bf16.mxu0 0
      %853 = vmatpush1.bf16.msra.mxu0 0
      %854 = vmatprep.subr.bf16.mxu0 0
      %855 = vmatpush1.bf16.msra.mxu0 0
      %856 = vmatprep.subr.bf16.mxu0 0
      %857 = vmatpush1.bf16.msra.mxu0 0
      %858 = vmatprep.subr.bf16.mxu0 0
      %859 = vmatpush1.bf16.msra.mxu0 0
      %860 = vmatprep.subr.bf16.mxu0 0
      %861 = vmatpush1.bf16.msra.mxu0 0
      %862 = vmatprep.subr.bf16.mxu0 0
      %863 = vmatpush1.bf16.msra.mxu0 0
      %864 = vmatprep.subr.bf16.mxu0 0
      %865 = vmatpush1.bf16.msra.mxu0 0
      %866 = vmatprep.subr.bf16.mxu0 0
      %867 = vmatpush1.bf16.msra.mxu0 0
      %868 = vmatprep.subr.bf16.mxu0 0
      %869 = vmatpush1.bf16.msra.mxu0 0
      %870 = vmatprep.mubr.bf16.mxu0 0
      %871 = vmatmul.mubr.bf16.gmra.mrb[0].mxu0 %v787
      %v872 = vpop.f32.mrb[0].mxu0
      %v873 = vadd.f32 0.0, %v872
      %v874 = vpop.f32.mrb[0].mxu0
      %v875 = vpop.f32.mrb[0].mxu0
      %v876 = vadd.f32 0.0, %v875
      %v877 = vpop.f32.mrb[0].mxu0
      %878 = vmatprep.mubr.bf16.mxu0 0
      %879 = vmatmul.mubr.bf16.gmra.mrb[0].mxu0 %v790
      %v880 = vpop.f32.mrb[0].mxu0
      %v881 = vadd.f32 0.0, %v880
      %v882 = vpop.f32.mrb[0].mxu0
      %v883 = vpop.f32.mrb[0].mxu0
      %v884 = vadd.f32 0.0, %v883
      %v885 = vpop.f32.mrb[0].mxu0
      %886 = vmatprep.mubr.bf16.mxu0 0
      %887 = vmatmul.mubr.bf16.gmra.mrb[0].mxu0 %v793
      %v888 = vpop.f32.mrb[0].mxu0
      %v889 = vadd.f32 0.0, %v888
      %v890 = vpop.f32.mrb[0].mxu0
      %v891 = vpop.f32.mrb[0].mxu0
      %v892 = vadd.f32 0.0, %v891
      %v893 = vpop.f32.mrb[0].mxu0
      %894 = vmatprep.mubr.bf16.mxu0 0
      %895 = vmatmul.mubr.bf16.gmra.mrb[0].mxu0 %v796
      %v896 = vpop.f32.mrb[0].mxu0
      %v897 = vadd.f32 0.0, %v896
      %v898 = vpop.f32.mrb[0].mxu0
      %v899 = vpop.f32.mrb[0].mxu0
      %v900 = vadd.f32 0.0, %v899
      %v901 = vpop.f32.mrb[0].mxu0
      %902 = vmatprep.mubr.bf16.mxu0 0
      %903 = vmatmul.mubr.bf16.gmra.mrb[0].mxu0 %v799
      %v904 = vpop.f32.mrb[0].mxu0
      %v905 = vadd.f32 0.0, %v904
      %v906 = vpop.f32.mrb[0].mxu0
      %v907 = vpop.f32.mrb[0].mxu0
      %v908 = vadd.f32 0.0, %v907
      %v909 = vpop.f32.mrb[0].mxu0
      %910 = vmatprep.mubr.bf16.mxu0 0
      %911 = vmatmul.mubr.bf16.gmra.mrb[0].mxu0 %v802
      %v912 = vpop.f32.mrb[0].mxu0
      %v913 = vadd.f32 0.0, %v912
      %v914 = vpop.f32.mrb[0].mxu0
      %v915 = vpop.f32.mrb[0].mxu0
      %v916 = vadd.f32 0.0, %v915
      %v917 = vpop.f32.mrb[0].mxu0
      %918 = vmatprep.mubr.bf16.mxu0 0
      %919 = vmatmul.mubr.bf16.gmra.mrb[0].mxu0 %v805
      %v920 = vpop.f32.mrb[0].mxu0
      %v921 = vadd.f32 0.0, %v920
      %v922 = vpop.f32.mrb[0].mxu0
      %v923 = vpop.f32.mrb[0].mxu0
      %v924 = vadd.f32 0.0, %v923
      %v925 = vpop.f32.mrb[0].mxu0
      %926 = vmatprep.mubr.bf16.mxu0 0
      %927 = vmatmul.mubr.bf16.gmra.mrb[0].mxu0 %v808
      %v928 = vpop.f32.mrb[0].mxu0
      %v929 = vadd.f32 0.0, %v928
      %v930 = vpop.f32.mrb[0].mxu0
      %v931 = vpop.f32.mrb[0].mxu0
      %v932 = vadd.f32 0.0, %v931
      %v933 = vpop.f32.mrb[0].mxu0
      %934 = vmatprep.mubr.bf16.mxu0 0
      %935 = vmatmul.mubr.bf16.gmra.mrb[0].mxu0 %v811
      %v936 = vpop.f32.mrb[0].mxu0
      %v937 = vadd.f32 0.0, %v936
      %v938 = vpop.f32.mrb[0].mxu0
      %v939 = vpop.f32.mrb[0].mxu0
      %v940 = vadd.f32 0.0, %v939
      %v941 = vpop.f32.mrb[0].mxu0
      %942 = vmatprep.mubr.bf16.mxu0 0
      %943 = vmatmul.mubr.bf16.gmra.mrb[0].mxu0 %v814
      %v944 = vpop.f32.mrb[0].mxu0
      %v945 = vadd.f32 0.0, %v944
      %v946 = vpop.f32.mrb[0].mxu0
      %v947 = vpop.f32.mrb[0].mxu0
      %v948 = vadd.f32 0.0, %v947
      %v949 = vpop.f32.mrb[0].mxu0
      %950 = vmatprep.mubr.bf16.mxu0 0
      %951 = vmatmul.mubr.bf16.gmra.mrb[0].mxu0 %v817
      %v952 = vpop.f32.mrb[0].mxu0
      %v953 = vadd.f32 0.0, %v952
      %v954 = vpop.f32.mrb[0].mxu0
      %v955 = vpop.f32.mrb[0].mxu0
      %v956 = vadd.f32 0.0, %v955
      %v957 = vpop.f32.mrb[0].mxu0
      %958 = vmatprep.mubr.bf16.mxu0 0
      %959 = vmatmul.mubr.bf16.gmra.mrb[0].mxu0 %v820
      %v960 = vpop.f32.mrb[0].mxu0
      %v961 = vadd.f32 0.0, %v960
      %v962 = vpop.f32.mrb[0].mxu0
      %v963 = vpop.f32.mrb[0].mxu0
      %v964 = vadd.f32 0.0, %v963
      %v965 = vpop.f32.mrb[0].mxu0
      %966 = vmatprep.mubr.bf16.mxu0 0
      %967 = vmatmul.mubr.bf16.gmra.mrb[0].mxu0 %v823
      %v968 = vpop.f32.mrb[0].mxu0
      %v969 = vadd.f32 0.0, %v968
      %v970 = vpop.f32.mrb[0].mxu0
      %v971 = vpop.f32.mrb[0].mxu0
      %v972 = vadd.f32 0.0, %v971
      %v973 = vpop.f32.mrb[0].mxu0
      %974 = vmatprep.mubr.bf16.mxu0 0
      %975 = vmatmul.mubr.bf16.gmra.mrb[0].mxu0 %v826
      %v976 = vpop.f32.mrb[0].mxu0
      %v977 = vadd.f32 0.0, %v976
      %v978 = vpop.f32.mrb[0].mxu0
      %v979 = vpop.f32.mrb[0].mxu0
      %v980 = vadd.f32 0.0, %v979
      %v981 = vpop.f32.mrb[0].mxu0
      %982 = vmatprep.mubr.bf16.mxu0 0
      %983 = vmatmul.mubr.bf16.gmra.mrb[0].mxu0 %v829
      %v984 = vpop.f32.mrb[0].mxu0
      %v985 = vadd.f32 0.0, %v984
      %v986 = vpop.f32.mrb[0].mxu0
      %v987 = vpop.f32.mrb[0].mxu0
      %v988 = vadd.f32 0.0, %v987
      %v989 = vpop.f32.mrb[0].mxu0
      %990 = vmatprep.mubr.bf16.mxu0 0
      %991 = vmatmul.mubr.bf16.gmra.mrb[0].mxu0 %v832
      %v992 = vpop.f32.mrb[0].mxu0
      %v993 = vadd.f32 0.0, %v992
      %v994 = vpop.f32.mrb[0].mxu0
      %v995 = vpop.f32.mrb[0].mxu0
      %v996 = vadd.f32 0.0, %v995
      %v997 = vpop.f32.mrb[0].mxu0
      %998 = vdwg.mxu0
      %v1031 = vunpack.c.l.b16 %v286
      %v1032 = vunpack.c.l.b16 %v287
      %v1033 = vunpack.c.l.b16 %v289
      %v1034 = vunpack.c.l.b16 %v290
      %v1035 = vunpack.c.l.b16 %v292
      %v1036 = vunpack.c.l.b16 %v293
      %v1037 = vunpack.c.l.b16 %v295
      %v1038 = vunpack.c.l.b16 %v296
      %v1039 = vunpack.c.l.b16 %v298
      %v1040 = vunpack.c.l.b16 %v299
      %v1041 = vunpack.c.l.b16 %v301
      %v1042 = vunpack.c.l.b16 %v302
      %v1043 = vunpack.c.l.b16 %v304
      %v1044 = vunpack.c.l.b16 %v305
      %v1045 = vunpack.c.l.b16 %v307
      %v1046 = vunpack.c.l.b16 %v308
      %v1047 = vunpack.c.l.b16 %v310
      %v1048 = vunpack.c.l.b16 %v311
      %v1049 = vunpack.c.l.b16 %v313
      %v1050 = vunpack.c.l.b16 %v314
      %v1051 = vunpack.c.l.b16 %v316
      %v1052 = vunpack.c.l.b16 %v317
      %v1053 = vunpack.c.l.b16 %v319
      %v1054 = vunpack.c.l.b16 %v320
      %v1055 = vunpack.c.l.b16 %v322
      %v1056 = vunpack.c.l.b16 %v323
      %v1057 = vunpack.c.l.b16 %v325
      %v1058 = vunpack.c.l.b16 %v326
      %v1059 = vunpack.c.l.b16 %v328
      %v1060 = vunpack.c.l.b16 %v329
      %v1061 = vunpack.c.l.b16 %v331
      %v1062 = vunpack.c.l.b16 %v332
      %v1063 = vpack.c.b16 %v1032, %v1031
      %v1064 = vpack.c.b16 %v1034, %v1033
      %v1065 = vpack.c.b16 %v1036, %v1035
      %v1066 = vpack.c.b16 %v1038, %v1037
      %v1067 = vpack.c.b16 %v1040, %v1039
      %v1068 = vpack.c.b16 %v1042, %v1041
      %v1069 = vpack.c.b16 %v1044, %v1043
      %v1070 = vpack.c.b16 %v1046, %v1045
      %v1071 = vpack.c.b16 %v1048, %v1047
      %v1072 = vpack.c.b16 %v1050, %v1049
      %v1073 = vpack.c.b16 %v1052, %v1051
      %v1074 = vpack.c.b16 %v1054, %v1053
      %v1075 = vpack.c.b16 %v1056, %v1055
      %v1076 = vpack.c.b16 %v1058, %v1057
      %v1077 = vpack.c.b16 %v1060, %v1059
      %v1078 = vpack.c.b16 %v1062, %v1061
      %v1080 = vsel %vm785, %v1063, 0
      %v1083 = vsel %vm785, %v1064, 0
      %v1086 = vsel %vm785, %v1065, 0
      %v1089 = vsel %vm785, %v1066, 0
      %v1092 = vsel %vm785, %v1067, 0
      %v1095 = vsel %vm785, %v1068, 0
      %v1098 = vsel %vm785, %v1069, 0
      %v1101 = vsel %vm785, %v1070, 0
      %v1104 = vsel %vm785, %v1071, 0
      %v1107 = vsel %vm785, %v1072, 0
      %v1110 = vsel %vm785, %v1073, 0
      %v1113 = vsel %vm785, %v1074, 0
      %v1116 = vsel %vm785, %v1075, 0
      %v1119 = vsel %vm785, %v1076, 0
      %v1122 = vsel %vm785, %v1077, 0
      %v1125 = vsel %vm785, %v1078, 0
      %v1128 = vsel %vm834, %v340, 0
      %1130 = vmatprep.subr.bf16.mxu0 0
      %1131 = vmatpush1.bf16.msra.mxu0 %v1128
      %1132 = vmatprep.subr.bf16.mxu0 0
      %1133 = vmatpush1.bf16.msra.mxu0 0
      %1134 = vmatprep.subr.bf16.mxu0 0
      %1135 = vmatpush1.bf16.msra.mxu0 0
      %1136 = vmatprep.subr.bf16.mxu0 0
      %1137 = vmatpush1.bf16.msra.mxu0 0
      %1138 = vmatprep.subr.bf16.mxu0 0
      %1139 = vmatpush1.bf16.msra.mxu0 0
      %1140 = vmatprep.subr.bf16.mxu0 0
      %1141 = vmatpush1.bf16.msra.mxu0 0
      %1142 = vmatprep.subr.bf16.mxu0 0
      %1143 = vmatpush1.bf16.msra.mxu0 0
      %1144 = vmatprep.subr.bf16.mxu0 0
      %1145 = vmatpush1.bf16.msra.mxu0 0
      %1146 = vmatprep.subr.bf16.mxu0 0
      %1147 = vmatpush1.bf16.msra.mxu0 0
      %1148 = vmatprep.subr.bf16.mxu0 0
      %1149 = vmatpush1.bf16.msra.mxu0 0
      %1150 = vmatprep.subr.bf16.mxu0 0
      %1151 = vmatpush1.bf16.msra.mxu0 0
      %1152 = vmatprep.subr.bf16.mxu0 0
      %1153 = vmatpush1.bf16.msra.mxu0 0
      %1154 = vmatprep.subr.bf16.mxu0 0
      %1155 = vmatpush1.bf16.msra.mxu0 0
      %1156 = vmatprep.subr.bf16.mxu0 0
      %1157 = vmatpush1.bf16.msra.mxu0 0
      %1158 = vmatprep.subr.bf16.mxu0 0
      %1159 = vmatpush1.bf16.msra.mxu0 0
      %1160 = vmatprep.subr.bf16.mxu0 0
      %1161 = vmatpush1.bf16.msra.mxu0 0
      %1162 = vmatprep.mubr.bf16.mxu0 0
      %1163 = vmatmul.mubr.bf16.gmra.mrb[0].mxu0 %v1080
      %v1164 = vpop.f32.mrb[0].mxu0
      %v1165 = vadd.f32 %v873, %v1164
      %v1166 = vpop.f32.mrb[0].mxu0
      %v1167 = vpop.f32.mrb[0].mxu0
      %v1168 = vadd.f32 %v876, %v1167
      %v1169 = vpop.f32.mrb[0].mxu0
      %1170 = vmatprep.mubr.bf16.mxu0 0
      %1171 = vmatmul.mubr.bf16.gmra.mrb[0].mxu0 %v1083
      %v1172 = vpop.f32.mrb[0].mxu0
      %v1173 = vadd.f32 %v881, %v1172
      %v1174 = vpop.f32.mrb[0].mxu0
      %v1175 = vpop.f32.mrb[0].mxu0
      %v1176 = vadd.f32 %v884, %v1175
      %v1177 = vpop.f32.mrb[0].mxu0
      %1178 = vmatprep.mubr.bf16.mxu0 0
      %1179 = vmatmul.mubr.bf16.gmra.mrb[0].mxu0 %v1086
      %v1180 = vpop.f32.mrb[0].mxu0
      %v1181 = vadd.f32 %v889, %v1180
      %v1182 = vpop.f32.mrb[0].mxu0
      %v1183 = vpop.f32.mrb[0].mxu0
      %v1184 = vadd.f32 %v892, %v1183
      %v1185 = vpop.f32.mrb[0].mxu0
      %1186 = vmatprep.mubr.bf16.mxu0 0
      %1187 = vmatmul.mubr.bf16.gmra.mrb[0].mxu0 %v1089
      %v1188 = vpop.f32.mrb[0].mxu0
      %v1189 = vadd.f32 %v897, %v1188
      %v1190 = vpop.f32.mrb[0].mxu0
      %v1191 = vpop.f32.mrb[0].mxu0
      %v1192 = vadd.f32 %v900, %v1191
      %v1193 = vpop.f32.mrb[0].mxu0
      %1194 = vmatprep.mubr.bf16.mxu0 0
      %1195 = vmatmul.mubr.bf16.gmra.mrb[0].mxu0 %v1092
      %v1196 = vpop.f32.mrb[0].mxu0
      %v1197 = vadd.f32 %v905, %v1196
      %v1198 = vpop.f32.mrb[0].mxu0
      %v1199 = vpop.f32.mrb[0].mxu0
      %v1200 = vadd.f32 %v908, %v1199
      %v1201 = vpop.f32.mrb[0].mxu0
      %1202 = vmatprep.mubr.bf16.mxu0 0
      %1203 = vmatmul.mubr.bf16.gmra.mrb[0].mxu0 %v1095
      %v1204 = vpop.f32.mrb[0].mxu0
      %v1205 = vadd.f32 %v913, %v1204
      %v1206 = vpop.f32.mrb[0].mxu0
      %v1207 = vpop.f32.mrb[0].mxu0
      %v1208 = vadd.f32 %v916, %v1207
      %v1209 = vpop.f32.mrb[0].mxu0
      %1210 = vmatprep.mubr.bf16.mxu0 0
      %1211 = vmatmul.mubr.bf16.gmra.mrb[0].mxu0 %v1098
      %v1212 = vpop.f32.mrb[0].mxu0
      %v1213 = vadd.f32 %v921, %v1212
      %v1214 = vpop.f32.mrb[0].mxu0
      %v1215 = vpop.f32.mrb[0].mxu0
      %v1216 = vadd.f32 %v924, %v1215
      %v1217 = vpop.f32.mrb[0].mxu0
      %1218 = vmatprep.mubr.bf16.mxu0 0
      %1219 = vmatmul.mubr.bf16.gmra.mrb[0].mxu0 %v1101
      %v1220 = vpop.f32.mrb[0].mxu0
      %v1221 = vadd.f32 %v929, %v1220
      %v1222 = vpop.f32.mrb[0].mxu0
      %v1223 = vpop.f32.mrb[0].mxu0
      %v1224 = vadd.f32 %v932, %v1223
      %v1225 = vpop.f32.mrb[0].mxu0
      %1226 = vmatprep.mubr.bf16.mxu0 0
      %1227 = vmatmul.mubr.bf16.gmra.mrb[0].mxu0 %v1104
      %v1228 = vpop.f32.mrb[0].mxu0
      %v1229 = vadd.f32 %v937, %v1228
      %v1230 = vpop.f32.mrb[0].mxu0
      %v1231 = vpop.f32.mrb[0].mxu0
      %v1232 = vadd.f32 %v940, %v1231
      %v1233 = vpop.f32.mrb[0].mxu0
      %1234 = vmatprep.mubr.bf16.mxu0 0
      %1235 = vmatmul.mubr.bf16.gmra.mrb[0].mxu0 %v1107
      %v1236 = vpop.f32.mrb[0].mxu0
      %v1237 = vadd.f32 %v945, %v1236
      %v1238 = vpop.f32.mrb[0].mxu0
      %v1239 = vpop.f32.mrb[0].mxu0
      %v1240 = vadd.f32 %v948, %v1239
      %v1241 = vpop.f32.mrb[0].mxu0
      %1242 = vmatprep.mubr.bf16.mxu0 0
      %1243 = vmatmul.mubr.bf16.gmra.mrb[0].mxu0 %v1110
      %v1244 = vpop.f32.mrb[0].mxu0
      %v1245 = vadd.f32 %v953, %v1244
      %v1246 = vpop.f32.mrb[0].mxu0
      %v1247 = vpop.f32.mrb[0].mxu0
      %v1248 = vadd.f32 %v956, %v1247
      %v1249 = vpop.f32.mrb[0].mxu0
      %1250 = vmatprep.mubr.bf16.mxu0 0
      %1251 = vmatmul.mubr.bf16.gmra.mrb[0].mxu0 %v1113
      %v1252 = vpop.f32.mrb[0].mxu0
      %v1253 = vadd.f32 %v961, %v1252
      %v1254 = vpop.f32.mrb[0].mxu0
      %v1255 = vpop.f32.mrb[0].mxu0
      %v1256 = vadd.f32 %v964, %v1255
      %v1257 = vpop.f32.mrb[0].mxu0
      %1258 = vmatprep.mubr.bf16.mxu0 0
      %1259 = vmatmul.mubr.bf16.gmra.mrb[0].mxu0 %v1116
      %v1260 = vpop.f32.mrb[0].mxu0
      %v1261 = vadd.f32 %v969, %v1260
      %v1262 = vpop.f32.mrb[0].mxu0
      %v1263 = vpop.f32.mrb[0].mxu0
      %v1264 = vadd.f32 %v972, %v1263
      %v1265 = vpop.f32.mrb[0].mxu0
      %1266 = vmatprep.mubr.bf16.mxu0 0
      %1267 = vmatmul.mubr.bf16.gmra.mrb[0].mxu0 %v1119
      %v1268 = vpop.f32.mrb[0].mxu0
      %v1269 = vadd.f32 %v977, %v1268
      %v1270 = vpop.f32.mrb[0].mxu0
      %v1271 = vpop.f32.mrb[0].mxu0
      %v1272 = vadd.f32 %v980, %v1271
      %v1273 = vpop.f32.mrb[0].mxu0
      %1274 = vmatprep.mubr.bf16.mxu0 0
      %1275 = vmatmul.mubr.bf16.gmra.mrb[0].mxu0 %v1122
      %v1276 = vpop.f32.mrb[0].mxu0
      %v1277 = vadd.f32 %v985, %v1276
      %v1278 = vpop.f32.mrb[0].mxu0
      %v1279 = vpop.f32.mrb[0].mxu0
      %v1280 = vadd.f32 %v988, %v1279
      %v1281 = vpop.f32.mrb[0].mxu0
      %1282 = vmatprep.mubr.bf16.mxu0 0
      %1283 = vmatmul.mubr.bf16.gmra.mrb[0].mxu0 %v1125
      %v1284 = vpop.f32.mrb[0].mxu0
      %v1285 = vadd.f32 %v993, %v1284
      %v1286 = vpop.f32.mrb[0].mxu0
      %v1287 = vpop.f32.mrb[0].mxu0
      %v1288 = vadd.f32 %v996, %v1287
      %v1289 = vpop.f32.mrb[0].mxu0
      %1290 = vdwg.mxu0
      %vm1307 = vcmask 1042432
      %vm1308 = vcmask 1046532
      %vm1309 = vmor %vm1307, %vm1308
      %v1310 = vrot.slane %v286, 5
      %v1311 = vrot.slane %v1310, 4
      %v1312 = vrot.slane %v287, 5
      %v1313 = vsel %vm1309, %v1311, %v1312
      %v1314 = vrot.slane %v1312, 4
      %v1315 = vrot.slane %v288, 5
      %v1316 = vsel %vm1309, %v1314, %v1315
      %v1317 = vrot.slane %v289, 5
      %v1318 = vrot.slane %v1317, 4
      %v1319 = vrot.slane %v290, 5
      %v1320 = vsel %vm1309, %v1318, %v1319
      %v1321 = vrot.slane %v1319, 4
      %v1322 = vrot.slane %v291, 5
      %v1323 = vsel %vm1309, %v1321, %v1322
      %v1324 = vrot.slane %v292, 5
      %v1325 = vrot.slane %v1324, 4
      %v1326 = vrot.slane %v293, 5
      %v1327 = vsel %vm1309, %v1325, %v1326
      %v1328 = vrot.slane %v1326, 4
      %v1329 = vrot.slane %v294, 5
      %v1330 = vsel %vm1309, %v1328, %v1329
      %v1331 = vrot.slane %v295, 5
      %v1332 = vrot.slane %v1331, 4
      %v1333 = vrot.slane %v296, 5
      %v1334 = vsel %vm1309, %v1332, %v1333
      %v1335 = vrot.slane %v1333, 4
      %v1336 = vrot.slane %v297, 5
      %v1337 = vsel %vm1309, %v1335, %v1336
      %v1338 = vrot.slane %v298, 5
      %v1339 = vrot.slane %v1338, 4
      %v1340 = vrot.slane %v299, 5
      %v1341 = vsel %vm1309, %v1339, %v1340
      %v1342 = vrot.slane %v1340, 4
      %v1343 = vrot.slane %v300, 5
      %v1344 = vsel %vm1309, %v1342, %v1343
      %v1345 = vrot.slane %v301, 5
      %v1346 = vrot.slane %v1345, 4
      %v1347 = vrot.slane %v302, 5
      %v1348 = vsel %vm1309, %v1346, %v1347
      %v1349 = vrot.slane %v1347, 4
      %v1350 = vrot.slane %v303, 5
      %v1351 = vsel %vm1309, %v1349, %v1350
      %v1352 = vrot.slane %v304, 5
      %v1353 = vrot.slane %v1352, 4
      %v1354 = vrot.slane %v305, 5
      %v1355 = vsel %vm1309, %v1353, %v1354
      %v1356 = vrot.slane %v1354, 4
      %v1357 = vrot.slane %v306, 5
      %v1358 = vsel %vm1309, %v1356, %v1357
      %v1359 = vrot.slane %v307, 5
      %v1360 = vrot.slane %v1359, 4
      %v1361 = vrot.slane %v308, 5
      %v1362 = vsel %vm1309, %v1360, %v1361
      %v1363 = vrot.slane %v1361, 4
      %v1364 = vrot.slane %v309, 5
      %v1365 = vsel %vm1309, %v1363, %v1364
      %v1366 = vrot.slane %v310, 5
      %v1367 = vrot.slane %v1366, 4
      %v1368 = vrot.slane %v311, 5
      %v1369 = vsel %vm1309, %v1367, %v1368
      %v1370 = vrot.slane %v1368, 4
      %v1371 = vrot.slane %v312, 5
      %v1372 = vsel %vm1309, %v1370, %v1371
      %v1373 = vrot.slane %v313, 5
      %v1374 = vrot.slane %v1373, 4
      %v1375 = vrot.slane %v314, 5
      %v1376 = vsel %vm1309, %v1374, %v1375
      %v1377 = vrot.slane %v1375, 4
      %v1378 = vrot.slane %v315, 5
      %v1379 = vsel %vm1309, %v1377, %v1378
      %v1380 = vrot.slane %v316, 5
      %v1381 = vrot.slane %v1380, 4
      %v1382 = vrot.slane %v317, 5
      %v1383 = vsel %vm1309, %v1381, %v1382
      %v1384 = vrot.slane %v1382, 4
      %v1385 = vrot.slane %v318, 5
      %v1386 = vsel %vm1309, %v1384, %v1385
      %v1387 = vrot.slane %v319, 5
      %v1388 = vrot.slane %v1387, 4
      %v1389 = vrot.slane %v320, 5
      %v1390 = vsel %vm1309, %v1388, %v1389
      %v1391 = vrot.slane %v1389, 4
      %v1392 = vrot.slane %v321, 5
      %v1393 = vsel %vm1309, %v1391, %v1392
      %v1394 = vrot.slane %v322, 5
      %v1395 = vrot.slane %v1394, 4
      %v1396 = vrot.slane %v323, 5
      %v1397 = vsel %vm1309, %v1395, %v1396
      %v1398 = vrot.slane %v1396, 4
      %v1399 = vrot.slane %v324, 5
      %v1400 = vsel %vm1309, %v1398, %v1399
      %v1401 = vrot.slane %v325, 5
      %v1402 = vrot.slane %v1401, 4
      %v1403 = vrot.slane %v326, 5
      %v1404 = vsel %vm1309, %v1402, %v1403
      %v1405 = vrot.slane %v1403, 4
      %v1406 = vrot.slane %v327, 5
      %v1407 = vsel %vm1309, %v1405, %v1406
      %v1408 = vrot.slane %v328, 5
      %v1409 = vrot.slane %v1408, 4
      %v1410 = vrot.slane %v329, 5
      %v1411 = vsel %vm1309, %v1409, %v1410
      %v1412 = vrot.slane %v1410, 4
      %v1413 = vrot.slane %v330, 5
      %v1414 = vsel %vm1309, %v1412, %v1413
      %v1415 = vrot.slane %v331, 5
      %v1416 = vrot.slane %v1415, 4
      %v1417 = vrot.slane %v332, 5
      %v1418 = vsel %vm1309, %v1416, %v1417
      %v1419 = vrot.slane %v1417, 4
      %v1420 = vrot.slane %v333, 5
      %v1421 = vsel %vm1309, %v1419, %v1420
      %v1422 = vunpack.c.l.b16 %v1313
      %v1423 = vunpack.c.l.b16 %v1316
      %v1424 = vunpack.c.l.b16 %v1320
      %v1425 = vunpack.c.l.b16 %v1323
      %v1426 = vunpack.c.l.b16 %v1327
      %v1427 = vunpack.c.l.b16 %v1330
      %v1428 = vunpack.c.l.b16 %v1334
      %v1429 = vunpack.c.l.b16 %v1337
      %v1430 = vunpack.c.l.b16 %v1341
      %v1431 = vunpack.c.l.b16 %v1344
      %v1432 = vunpack.c.l.b16 %v1348
      %v1433 = vunpack.c.l.b16 %v1351
      %v1434 = vunpack.c.l.b16 %v1355
      %v1435 = vunpack.c.l.b16 %v1358
      %v1436 = vunpack.c.l.b16 %v1362
      %v1437 = vunpack.c.l.b16 %v1365
      %v1438 = vunpack.c.l.b16 %v1369
      %v1439 = vunpack.c.l.b16 %v1372
      %v1440 = vunpack.c.l.b16 %v1376
      %v1441 = vunpack.c.l.b16 %v1379
      %v1442 = vunpack.c.l.b16 %v1383
      %v1443 = vunpack.c.l.b16 %v1386
      %v1444 = vunpack.c.l.b16 %v1390
      %v1445 = vunpack.c.l.b16 %v1393
      %v1446 = vunpack.c.l.b16 %v1397
      %v1447 = vunpack.c.l.b16 %v1400
      %v1448 = vunpack.c.l.b16 %v1404
      %v1449 = vunpack.c.l.b16 %v1407
      %v1450 = vunpack.c.l.b16 %v1411
      %v1451 = vunpack.c.l.b16 %v1414
      %v1452 = vunpack.c.l.b16 %v1418
      %v1453 = vunpack.c.l.b16 %v1421
      %v1454 = vpack.c.b16 %v1423, %v1422
      %v1455 = vpack.c.b16 %v1425, %v1424
      %v1456 = vpack.c.b16 %v1427, %v1426
      %v1457 = vpack.c.b16 %v1429, %v1428
      %v1458 = vpack.c.b16 %v1431, %v1430
      %v1459 = vpack.c.b16 %v1433, %v1432
      %v1460 = vpack.c.b16 %v1435, %v1434
      %v1461 = vpack.c.b16 %v1437, %v1436
      %v1462 = vpack.c.b16 %v1439, %v1438
      %v1463 = vpack.c.b16 %v1441, %v1440
      %v1464 = vpack.c.b16 %v1443, %v1442
      %v1465 = vpack.c.b16 %v1445, %v1444
      %v1466 = vpack.c.b16 %v1447, %v1446
      %v1467 = vpack.c.b16 %v1449, %v1448
      %v1468 = vpack.c.b16 %v1451, %v1450
      %v1469 = vpack.c.b16 %v1453, %v1452
      %v1471 = vsel %vm785, %v1454, 0
      %v1474 = vsel %vm785, %v1455, 0
      %v1477 = vsel %vm785, %v1456, 0
      %v1480 = vsel %vm785, %v1457, 0
      %v1483 = vsel %vm785, %v1458, 0
      %v1486 = vsel %vm785, %v1459, 0
      %v1489 = vsel %vm785, %v1460, 0
      %v1492 = vsel %vm785, %v1461, 0
      %v1495 = vsel %vm785, %v1462, 0
      %v1498 = vsel %vm785, %v1463, 0
      %v1501 = vsel %vm785, %v1464, 0
      %v1504 = vsel %vm785, %v1465, 0
      %v1507 = vsel %vm785, %v1466, 0
      %v1510 = vsel %vm785, %v1467, 0
      %v1513 = vsel %vm785, %v1468, 0
      %v1516 = vsel %vm785, %v1469, 0
      %v1519 = vsel %vm834, %v342, 0
      %1521 = vmatprep.subr.bf16.mxu0 0
      %1522 = vmatpush1.bf16.msra.mxu0 %v1519
      %1523 = vmatprep.subr.bf16.mxu0 0
      %1524 = vmatpush1.bf16.msra.mxu0 0
      %1525 = vmatprep.subr.bf16.mxu0 0
      %1526 = vmatpush1.bf16.msra.mxu0 0
      %1527 = vmatprep.subr.bf16.mxu0 0
      %1528 = vmatpush1.bf16.msra.mxu0 0
      %1529 = vmatprep.subr.bf16.mxu0 0
      %1530 = vmatpush1.bf16.msra.mxu0 0
      %1531 = vmatprep.subr.bf16.mxu0 0
      %1532 = vmatpush1.bf16.msra.mxu0 0
      %1533 = vmatprep.subr.bf16.mxu0 0
      %1534 = vmatpush1.bf16.msra.mxu0 0
      %1535 = vmatprep.subr.bf16.mxu0 0
      %1536 = vmatpush1.bf16.msra.mxu0 0
      %1537 = vmatprep.subr.bf16.mxu0 0
      %1538 = vmatpush1.bf16.msra.mxu0 0
      %1539 = vmatprep.subr.bf16.mxu0 0
      %1540 = vmatpush1.bf16.msra.mxu0 0
      %1541 = vmatprep.subr.bf16.mxu0 0
      %1542 = vmatpush1.bf16.msra.mxu0 0
      %1543 = vmatprep.subr.bf16.mxu0 0
      %1544 = vmatpush1.bf16.msra.mxu0 0
      %1545 = vmatprep.subr.bf16.mxu0 0
      %1546 = vmatpush1.bf16.msra.mxu0 0
      %1547 = vmatprep.subr.bf16.mxu0 0
      %1548 = vmatpush1.bf16.msra.mxu0 0
      %1549 = vmatprep.subr.bf16.mxu0 0
      %1550 = vmatpush1.bf16.msra.mxu0 0
      %1551 = vmatprep.subr.bf16.mxu0 0
      %1552 = vmatpush1.bf16.msra.mxu0 0
      %1553 = vmatprep.mubr.bf16.mxu0 0
      %1554 = vmatmul.mubr.bf16.gmra.mrb[0].mxu0 %v1471
      %v1555 = vpop.f32.mrb[0].mxu0
      %v1556 = vadd.f32 0.0, %v1555
      %v1557 = vpop.f32.mrb[0].mxu0
      %v1558 = vpop.f32.mrb[0].mxu0
      %v1559 = vadd.f32 0.0, %v1558
      %v1560 = vpop.f32.mrb[0].mxu0
      %1561 = vmatprep.mubr.bf16.mxu0 0
      %1562 = vmatmul.mubr.bf16.gmra.mrb[0].mxu0 %v1474
      %v1563 = vpop.f32.mrb[0].mxu0
      %v1564 = vadd.f32 0.0, %v1563
      %v1565 = vpop.f32.mrb[0].mxu0
      %v1566 = vpop.f32.mrb[0].mxu0
      %v1567 = vadd.f32 0.0, %v1566
      %v1568 = vpop.f32.mrb[0].mxu0
      %1569 = vmatprep.mubr.bf16.mxu0 0
      %1570 = vmatmul.mubr.bf16.gmra.mrb[0].mxu0 %v1477
      %v1571 = vpop.f32.mrb[0].mxu0
      %v1572 = vadd.f32 0.0, %v1571
      %v1573 = vpop.f32.mrb[0].mxu0
      %v1574 = vpop.f32.mrb[0].mxu0
      %v1575 = vadd.f32 0.0, %v1574
      %v1576 = vpop.f32.mrb[0].mxu0
      %1577 = vmatprep.mubr.bf16.mxu0 0
      %1578 = vmatmul.mubr.bf16.gmra.mrb[0].mxu0 %v1480
      %v1579 = vpop.f32.mrb[0].mxu0
      %v1580 = vadd.f32 0.0, %v1579
      %v1581 = vpop.f32.mrb[0].mxu0
      %v1582 = vpop.f32.mrb[0].mxu0
      %v1583 = vadd.f32 0.0, %v1582
      %v1584 = vpop.f32.mrb[0].mxu0
      %1585 = vmatprep.mubr.bf16.mxu0 0
      %1586 = vmatmul.mubr.bf16.gmra.mrb[0].mxu0 %v1483
      %v1587 = vpop.f32.mrb[0].mxu0
      %v1588 = vadd.f32 0.0, %v1587
      %v1589 = vpop.f32.mrb[0].mxu0
      %v1590 = vpop.f32.mrb[0].mxu0
      %v1591 = vadd.f32 0.0, %v1590
      %v1592 = vpop.f32.mrb[0].mxu0
      %1593 = vmatprep.mubr.bf16.mxu0 0
      %1594 = vmatmul.mubr.bf16.gmra.mrb[0].mxu0 %v1486
      %v1595 = vpop.f32.mrb[0].mxu0
      %v1596 = vadd.f32 0.0, %v1595
      %v1597 = vpop.f32.mrb[0].mxu0
      %v1598 = vpop.f32.mrb[0].mxu0
      %v1599 = vadd.f32 0.0, %v1598
      %v1600 = vpop.f32.mrb[0].mxu0
      %1601 = vmatprep.mubr.bf16.mxu0 0
      %1602 = vmatmul.mubr.bf16.gmra.mrb[0].mxu0 %v1489
      %v1603 = vpop.f32.mrb[0].mxu0
      %v1604 = vadd.f32 0.0, %v1603
      %v1605 = vpop.f32.mrb[0].mxu0
      %v1606 = vpop.f32.mrb[0].mxu0
      %v1607 = vadd.f32 0.0, %v1606
      %v1608 = vpop.f32.mrb[0].mxu0
      %1609 = vmatprep.mubr.bf16.mxu0 0
      %1610 = vmatmul.mubr.bf16.gmra.mrb[0].mxu0 %v1492
      %v1611 = vpop.f32.mrb[0].mxu0
      %v1612 = vadd.f32 0.0, %v1611
      %v1613 = vpop.f32.mrb[0].mxu0
      %v1614 = vpop.f32.mrb[0].mxu0
      %v1615 = vadd.f32 0.0, %v1614
      %v1616 = vpop.f32.mrb[0].mxu0
      %1617 = vmatprep.mubr.bf16.mxu0 0
      %1618 = vmatmul.mubr.bf16.gmra.mrb[0].mxu0 %v1495
      %v1619 = vpop.f32.mrb[0].mxu0
      %v1620 = vadd.f32 0.0, %v1619
      %v1621 = vpop.f32.mrb[0].mxu0
      %v1622 = vpop.f32.mrb[0].mxu0
      %v1623 = vadd.f32 0.0, %v1622
      %v1624 = vpop.f32.mrb[0].mxu0
      %1625 = vmatprep.mubr.bf16.mxu0 0
      %1626 = vmatmul.mubr.bf16.gmra.mrb[0].mxu0 %v1498
      %v1627 = vpop.f32.mrb[0].mxu0
      %v1628 = vadd.f32 0.0, %v1627
      %v1629 = vpop.f32.mrb[0].mxu0
      %v1630 = vpop.f32.mrb[0].mxu0
      %v1631 = vadd.f32 0.0, %v1630
      %v1632 = vpop.f32.mrb[0].mxu0
      %1633 = vmatprep.mubr.bf16.mxu0 0
      %1634 = vmatmul.mubr.bf16.gmra.mrb[0].mxu0 %v1501
      %v1635 = vpop.f32.mrb[0].mxu0
      %v1636 = vadd.f32 0.0, %v1635
      %v1637 = vpop.f32.mrb[0].mxu0
      %v1638 = vpop.f32.mrb[0].mxu0
      %v1639 = vadd.f32 0.0, %v1638
      %v1640 = vpop.f32.mrb[0].mxu0
      %1641 = vmatprep.mubr.bf16.mxu0 0
      %1642 = vmatmul.mubr.bf16.gmra.mrb[0].mxu0 %v1504
      %v1643 = vpop.f32.mrb[0].mxu0
      %v1644 = vadd.f32 0.0, %v1643
      %v1645 = vpop.f32.mrb[0].mxu0
      %v1646 = vpop.f32.mrb[0].mxu0
      %v1647 = vadd.f32 0.0, %v1646
      %v1648 = vpop.f32.mrb[0].mxu0
      %1649 = vmatprep.mubr.bf16.mxu0 0
      %1650 = vmatmul.mubr.bf16.gmra.mrb[0].mxu0 %v1507
      %v1651 = vpop.f32.mrb[0].mxu0
      %v1652 = vadd.f32 0.0, %v1651
      %v1653 = vpop.f32.mrb[0].mxu0
      %v1654 = vpop.f32.mrb[0].mxu0
      %v1655 = vadd.f32 0.0, %v1654
      %v1656 = vpop.f32.mrb[0].mxu0
      %1657 = vmatprep.mubr.bf16.mxu0 0
      %1658 = vmatmul.mubr.bf16.gmra.mrb[0].mxu0 %v1510
      %v1659 = vpop.f32.mrb[0].mxu0
      %v1660 = vadd.f32 0.0, %v1659
      %v1661 = vpop.f32.mrb[0].mxu0
      %v1662 = vpop.f32.mrb[0].mxu0
      %v1663 = vadd.f32 0.0, %v1662
      %v1664 = vpop.f32.mrb[0].mxu0
      %1665 = vmatprep.mubr.bf16.mxu0 0
      %1666 = vmatmul.mubr.bf16.gmra.mrb[0].mxu0 %v1513
      %v1667 = vpop.f32.mrb[0].mxu0
      %v1668 = vadd.f32 0.0, %v1667
      %v1669 = vpop.f32.mrb[0].mxu0
      %v1670 = vpop.f32.mrb[0].mxu0
      %v1671 = vadd.f32 0.0, %v1670
      %v1672 = vpop.f32.mrb[0].mxu0
      %1673 = vmatprep.mubr.bf16.mxu0 0
      %1674 = vmatmul.mubr.bf16.gmra.mrb[0].mxu0 %v1516
      %v1675 = vpop.f32.mrb[0].mxu0
      %v1676 = vadd.f32 0.0, %v1675
      %v1677 = vpop.f32.mrb[0].mxu0
      %v1678 = vpop.f32.mrb[0].mxu0
      %v1679 = vadd.f32 0.0, %v1678
      %v1680 = vpop.f32.mrb[0].mxu0
      %1681 = vdwg.mxu0
      %v1682 = vadd.f32 %v1165, %v1556
      %v1683 = vadd.f32 %v1168, %v1559
      %v1684 = vadd.f32 %v1173, %v1564
      %v1685 = vadd.f32 %v1176, %v1567
      %v1686 = vadd.f32 %v1181, %v1572
      %v1687 = vadd.f32 %v1184, %v1575
      %v1688 = vadd.f32 %v1189, %v1580
      %v1689 = vadd.f32 %v1192, %v1583
      %v1690 = vadd.f32 %v1197, %v1588
      %v1691 = vadd.f32 %v1200, %v1591
      %v1692 = vadd.f32 %v1205, %v1596
      %v1693 = vadd.f32 %v1208, %v1599
      %v1694 = vadd.f32 %v1213, %v1604
      %v1695 = vadd.f32 %v1216, %v1607
      %v1696 = vadd.f32 %v1221, %v1612
      %v1697 = vadd.f32 %v1224, %v1615
      %v1698 = vadd.f32 %v1229, %v1620
      %v1699 = vadd.f32 %v1232, %v1623
      %v1700 = vadd.f32 %v1237, %v1628
      %v1701 = vadd.f32 %v1240, %v1631
      %v1702 = vadd.f32 %v1245, %v1636
      %v1703 = vadd.f32 %v1248, %v1639
      %v1704 = vadd.f32 %v1253, %v1644
      %v1705 = vadd.f32 %v1256, %v1647
      %v1706 = vadd.f32 %v1261, %v1652
      %v1707 = vadd.f32 %v1264, %v1655
      %v1708 = vadd.f32 %v1269, %v1660
      %v1709 = vadd.f32 %v1272, %v1663
      %v1710 = vadd.f32 %v1277, %v1668
      %v1711 = vadd.f32 %v1280, %v1671
      %v1712 = vadd.f32 %v1285, %v1676
      %v1713 = vadd.f32 %v1288, %v1679
      %v1716 = vunpack.c.l.b16 %v334
      %v1717 = vunpack.c.l.b16 %v335
      %v1718 = vpack.c.b16 %v1717, %v1716
      %v1720 = vsel %vm785, %v1718, 0
      %v1723 = vsel %vm834, %v343, 0
      %1725 = vmatprep.subr.bf16.mxu0 0
      %1726 = vmatpush1.bf16.msra.mxu0 %v1723
      %1727 = vmatprep.subr.bf16.mxu0 0
      %1728 = vmatpush1.bf16.msra.mxu0 0
      %1729 = vmatprep.subr.bf16.mxu0 0
      %1730 = vmatpush1.bf16.msra.mxu0 0
      %1731 = vmatprep.subr.bf16.mxu0 0
      %1732 = vmatpush1.bf16.msra.mxu0 0
      %1733 = vmatprep.subr.bf16.mxu0 0
      %1734 = vmatpush1.bf16.msra.mxu0 0
      %1735 = vmatprep.subr.bf16.mxu0 0
      %1736 = vmatpush1.bf16.msra.mxu0 0
      %1737 = vmatprep.subr.bf16.mxu0 0
      %1738 = vmatpush1.bf16.msra.mxu0 0
      %1739 = vmatprep.subr.bf16.mxu0 0
      %1740 = vmatpush1.bf16.msra.mxu0 0
      %1741 = vmatprep.subr.bf16.mxu0 0
      %1742 = vmatpush1.bf16.msra.mxu0 0
      %1743 = vmatprep.subr.bf16.mxu0 0
      %1744 = vmatpush1.bf16.msra.mxu0 0
      %1745 = vmatprep.subr.bf16.mxu0 0
      %1746 = vmatpush1.bf16.msra.mxu0 0
      %1747 = vmatprep.subr.bf16.mxu0 0
      %1748 = vmatpush1.bf16.msra.mxu0 0
      %1749 = vmatprep.subr.bf16.mxu0 0
      %1750 = vmatpush1.bf16.msra.mxu0 0
      %1751 = vmatprep.subr.bf16.mxu0 0
      %1752 = vmatpush1.bf16.msra.mxu0 0
      %1753 = vmatprep.subr.bf16.mxu0 0
      %1754 = vmatpush1.bf16.msra.mxu0 0
      %1755 = vmatprep.subr.bf16.mxu0 0
      %1756 = vmatpush1.bf16.msra.mxu0 0
      %1757 = vmatprep.mubr.bf16.mxu0 0
      %1758 = vmatmul.mubr.bf16.gmra.mrb[0].mxu0 %v1083
      %v1759 = vpop.f32.mrb[0].mxu0
      %v1760 = vadd.f32 0.0, %v1759
      %v1761 = vpop.f32.mrb[0].mxu0
      %v1762 = vpop.f32.mrb[0].mxu0
      %v1763 = vadd.f32 0.0, %v1762
      %v1764 = vpop.f32.mrb[0].mxu0
      %1765 = vmatprep.mubr.bf16.mxu0 0
      %1766 = vmatmul.mubr.bf16.gmra.mrb[0].mxu0 %v1086
      %v1767 = vpop.f32.mrb[0].mxu0
      %v1768 = vadd.f32 0.0, %v1767
      %v1769 = vpop.f32.mrb[0].mxu0
      %v1770 = vpop.f32.mrb[0].mxu0
      %v1771 = vadd.f32 0.0, %v1770
      %v1772 = vpop.f32.mrb[0].mxu0
      %1773 = vmatprep.mubr.bf16.mxu0 0
      %1774 = vmatmul.mubr.bf16.gmra.mrb[0].mxu0 %v1089
      %v1775 = vpop.f32.mrb[0].mxu0
      %v1776 = vadd.f32 0.0, %v1775
      %v1777 = vpop.f32.mrb[0].mxu0
      %v1778 = vpop.f32.mrb[0].mxu0
      %v1779 = vadd.f32 0.0, %v1778
      %v1780 = vpop.f32.mrb[0].mxu0
      %1781 = vmatprep.mubr.bf16.mxu0 0
      %1782 = vmatmul.mubr.bf16.gmra.mrb[0].mxu0 %v1092
      %v1783 = vpop.f32.mrb[0].mxu0
      %v1784 = vadd.f32 0.0, %v1783
      %v1785 = vpop.f32.mrb[0].mxu0
      %v1786 = vpop.f32.mrb[0].mxu0
      %v1787 = vadd.f32 0.0, %v1786
      %v1788 = vpop.f32.mrb[0].mxu0
      %1789 = vmatprep.mubr.bf16.mxu0 0
      %1790 = vmatmul.mubr.bf16.gmra.mrb[0].mxu0 %v1095
      %v1791 = vpop.f32.mrb[0].mxu0
      %v1792 = vadd.f32 0.0, %v1791
      %v1793 = vpop.f32.mrb[0].mxu0
      %v1794 = vpop.f32.mrb[0].mxu0
      %v1795 = vadd.f32 0.0, %v1794
      %v1796 = vpop.f32.mrb[0].mxu0
      %1797 = vmatprep.mubr.bf16.mxu0 0
      %1798 = vmatmul.mubr.bf16.gmra.mrb[0].mxu0 %v1098
      %v1799 = vpop.f32.mrb[0].mxu0
      %v1800 = vadd.f32 0.0, %v1799
      %v1801 = vpop.f32.mrb[0].mxu0
      %v1802 = vpop.f32.mrb[0].mxu0
      %v1803 = vadd.f32 0.0, %v1802
      %v1804 = vpop.f32.mrb[0].mxu0
      %1805 = vmatprep.mubr.bf16.mxu0 0
      %1806 = vmatmul.mubr.bf16.gmra.mrb[0].mxu0 %v1101
      %v1807 = vpop.f32.mrb[0].mxu0
      %v1808 = vadd.f32 0.0, %v1807
      %v1809 = vpop.f32.mrb[0].mxu0
      %v1810 = vpop.f32.mrb[0].mxu0
      %v1811 = vadd.f32 0.0, %v1810
      %v1812 = vpop.f32.mrb[0].mxu0
      %1813 = vmatprep.mubr.bf16.mxu0 0
      %1814 = vmatmul.mubr.bf16.gmra.mrb[0].mxu0 %v1104
      %v1815 = vpop.f32.mrb[0].mxu0
      %v1816 = vadd.f32 0.0, %v1815
      %v1817 = vpop.f32.mrb[0].mxu0
      %v1818 = vpop.f32.mrb[0].mxu0
      %v1819 = vadd.f32 0.0, %v1818
      %v1820 = vpop.f32.mrb[0].mxu0
      %1821 = vmatprep.mubr.bf16.mxu0 0
      %1822 = vmatmul.mubr.bf16.gmra.mrb[0].mxu0 %v1107
      %v1823 = vpop.f32.mrb[0].mxu0
      %v1824 = vadd.f32 0.0, %v1823
      %v1825 = vpop.f32.mrb[0].mxu0
      %v1826 = vpop.f32.mrb[0].mxu0
      %v1827 = vadd.f32 0.0, %v1826
      %v1828 = vpop.f32.mrb[0].mxu0
      %1829 = vmatprep.mubr.bf16.mxu0 0
      %1830 = vmatmul.mubr.bf16.gmra.mrb[0].mxu0 %v1110
      %v1831 = vpop.f32.mrb[0].mxu0
      %v1832 = vadd.f32 0.0, %v1831
      %v1833 = vpop.f32.mrb[0].mxu0
      %v1834 = vpop.f32.mrb[0].mxu0
      %v1835 = vadd.f32 0.0, %v1834
      %v1836 = vpop.f32.mrb[0].mxu0
      %1837 = vmatprep.mubr.bf16.mxu0 0
      %1838 = vmatmul.mubr.bf16.gmra.mrb[0].mxu0 %v1113
      %v1839 = vpop.f32.mrb[0].mxu0
      %v1840 = vadd.f32 0.0, %v1839
      %v1841 = vpop.f32.mrb[0].mxu0
      %v1842 = vpop.f32.mrb[0].mxu0
      %v1843 = vadd.f32 0.0, %v1842
      %v1844 = vpop.f32.mrb[0].mxu0
      %1845 = vmatprep.mubr.bf16.mxu0 0
      %1846 = vmatmul.mubr.bf16.gmra.mrb[0].mxu0 %v1116
      %v1847 = vpop.f32.mrb[0].mxu0
      %v1848 = vadd.f32 0.0, %v1847
      %v1849 = vpop.f32.mrb[0].mxu0
      %v1850 = vpop.f32.mrb[0].mxu0
      %v1851 = vadd.f32 0.0, %v1850
      %v1852 = vpop.f32.mrb[0].mxu0
      %1853 = vmatprep.mubr.bf16.mxu0 0
      %1854 = vmatmul.mubr.bf16.gmra.mrb[0].mxu0 %v1119
      %v1855 = vpop.f32.mrb[0].mxu0
      %v1856 = vadd.f32 0.0, %v1855
      %v1857 = vpop.f32.mrb[0].mxu0
      %v1858 = vpop.f32.mrb[0].mxu0
      %v1859 = vadd.f32 0.0, %v1858
      %v1860 = vpop.f32.mrb[0].mxu0
      %1861 = vmatprep.mubr.bf16.mxu0 0
      %1862 = vmatmul.mubr.bf16.gmra.mrb[0].mxu0 %v1122
      %v1863 = vpop.f32.mrb[0].mxu0
      %v1864 = vadd.f32 0.0, %v1863
      %v1865 = vpop.f32.mrb[0].mxu0
      %v1866 = vpop.f32.mrb[0].mxu0
      %v1867 = vadd.f32 0.0, %v1866
      %v1868 = vpop.f32.mrb[0].mxu0
      %1869 = vmatprep.mubr.bf16.mxu0 0
      %1870 = vmatmul.mubr.bf16.gmra.mrb[0].mxu0 %v1125
      %v1871 = vpop.f32.mrb[0].mxu0
      %v1872 = vadd.f32 0.0, %v1871
      %v1873 = vpop.f32.mrb[0].mxu0
      %v1874 = vpop.f32.mrb[0].mxu0
      %v1875 = vadd.f32 0.0, %v1874
      %v1876 = vpop.f32.mrb[0].mxu0
      %1877 = vmatprep.mubr.bf16.mxu0 0
      %1878 = vmatmul.mubr.bf16.gmra.mrb[0].mxu0 %v1720
      %v1879 = vpop.f32.mrb[0].mxu0
      %v1880 = vadd.f32 0.0, %v1879
      %v1881 = vpop.f32.mrb[0].mxu0
      %v1882 = vpop.f32.mrb[0].mxu0
      %v1883 = vadd.f32 0.0, %v1882
      %v1884 = vpop.f32.mrb[0].mxu0
      %1885 = vdwg.mxu0
      %v1886 = vadd.f32 %v1682, %v1760
      %v1887 = vadd.f32 %v1683, %v1763
      %v1888 = vadd.f32 %v1684, %v1768
      %v1889 = vadd.f32 %v1685, %v1771
      %v1890 = vadd.f32 %v1686, %v1776
      %v1891 = vadd.f32 %v1687, %v1779
      %v1892 = vadd.f32 %v1688, %v1784
      %v1893 = vadd.f32 %v1689, %v1787
      %v1894 = vadd.f32 %v1690, %v1792
      %v1895 = vadd.f32 %v1691, %v1795
      %v1896 = vadd.f32 %v1692, %v1800
      %v1897 = vadd.f32 %v1693, %v1803
      %v1898 = vadd.f32 %v1694, %v1808
      %v1899 = vadd.f32 %v1695, %v1811
      %v1900 = vadd.f32 %v1696, %v1816
      %v1901 = vadd.f32 %v1697, %v1819
      %v1902 = vadd.f32 %v1698, %v1824
      %v1903 = vadd.f32 %v1699, %v1827
      %v1904 = vadd.f32 %v1700, %v1832
      %v1905 = vadd.f32 %v1701, %v1835
      %v1906 = vadd.f32 %v1702, %v1840
      %v1907 = vadd.f32 %v1703, %v1843
      %v1908 = vadd.f32 %v1704, %v1848
      %v1909 = vadd.f32 %v1705, %v1851
      %v1910 = vadd.f32 %v1706, %v1856
      %v1911 = vadd.f32 %v1707, %v1859
      %v1912 = vadd.f32 %v1708, %v1864
      %v1913 = vadd.f32 %v1709, %v1867
      %v1914 = vadd.f32 %v1710, %v1872
      %v1915 = vadd.f32 %v1711, %v1875
      %v1916 = vadd.f32 %v1712, %v1880
      %v1917 = vadd.f32 %v1713, %v1883
      %v1919 = vshrl.u32 %v334, 16
      %v1921 = vrot.slane %v1919, 4
      %v1922 = vshll.u32 %v334, 16
      %v1924 = vrot.slane %v1922, 5
      %v1925 = vor.u32 %v1921, %v1924
      %v1926 = vrot.slane %v1925, 4
      %v1928 = vshll.u32 %v335, 16
      %v1930 = vrot.slane %v1928, 5
      %v1931 = vsel %vm352, %v1926, %v1930
      %v1932 = vshrl.u32 %v335, 16
      %v1934 = vrot.slane %v1932, 4
      %v1935 = vor.u32 %v1934, %v1930
      %v1936 = vrot.slane %v1935, 4
      %v1938 = vshll.u32 %v336, 16
      %v1940 = vrot.slane %v1938, 5
      %v1941 = vsel %vm352, %v1936, %v1940
      %v1942 = vunpack.c.l.b16 %v1931
      %v1943 = vunpack.c.l.b16 %v1941
      %v1944 = vpack.c.b16 %v1943, %v1942
      %v1946 = vsel %vm785, %v1944, 0
      %v1949 = vsel %vm834, %v344, 0
      %1951 = vmatprep.subr.bf16.mxu0 0
      %1952 = vmatpush1.bf16.msra.mxu0 %v1949
      %1953 = vmatprep.subr.bf16.mxu0 0
      %1954 = vmatpush1.bf16.msra.mxu0 0
      %1955 = vmatprep.subr.bf16.mxu0 0
      %1956 = vmatpush1.bf16.msra.mxu0 0
      %1957 = vmatprep.subr.bf16.mxu0 0
      %1958 = vmatpush1.bf16.msra.mxu0 0
      %1959 = vmatprep.subr.bf16.mxu0 0
      %1960 = vmatpush1.bf16.msra.mxu0 0
      %1961 = vmatprep.subr.bf16.mxu0 0
      %1962 = vmatpush1.bf16.msra.mxu0 0
      %1963 = vmatprep.subr.bf16.mxu0 0
      %1964 = vmatpush1.bf16.msra.mxu0 0
      %1965 = vmatprep.subr.bf16.mxu0 0
      %1966 = vmatpush1.bf16.msra.mxu0 0
      %1967 = vmatprep.subr.bf16.mxu0 0
      %1968 = vmatpush1.bf16.msra.mxu0 0
      %1969 = vmatprep.subr.bf16.mxu0 0
      %1970 = vmatpush1.bf16.msra.mxu0 0
      %1971 = vmatprep.subr.bf16.mxu0 0
      %1972 = vmatpush1.bf16.msra.mxu0 0
      %1973 = vmatprep.subr.bf16.mxu0 0
      %1974 = vmatpush1.bf16.msra.mxu0 0
      %1975 = vmatprep.subr.bf16.mxu0 0
      %1976 = vmatpush1.bf16.msra.mxu0 0
      %1977 = vmatprep.subr.bf16.mxu0 0
      %1978 = vmatpush1.bf16.msra.mxu0 0
      %1979 = vmatprep.subr.bf16.mxu0 0
      %1980 = vmatpush1.bf16.msra.mxu0 0
      %1981 = vmatprep.subr.bf16.mxu0 0
      %1982 = vmatpush1.bf16.msra.mxu0 0
      %1983 = vmatprep.mubr.bf16.mxu0 0
      %1984 = vmatmul.mubr.bf16.gmra.mrb[0].mxu0 %v790
      %v1985 = vpop.f32.mrb[0].mxu0
      %v1986 = vadd.f32 0.0, %v1985
      %v1987 = vpop.f32.mrb[0].mxu0
      %v1988 = vpop.f32.mrb[0].mxu0
      %v1989 = vadd.f32 0.0, %v1988
      %v1990 = vpop.f32.mrb[0].mxu0
      %1991 = vmatprep.mubr.bf16.mxu0 0
      %1992 = vmatmul.mubr.bf16.gmra.mrb[0].mxu0 %v793
      %v1993 = vpop.f32.mrb[0].mxu0
      %v1994 = vadd.f32 0.0, %v1993
      %v1995 = vpop.f32.mrb[0].mxu0
      %v1996 = vpop.f32.mrb[0].mxu0
      %v1997 = vadd.f32 0.0, %v1996
      %v1998 = vpop.f32.mrb[0].mxu0
      %1999 = vmatprep.mubr.bf16.mxu0 0
      %2000 = vmatmul.mubr.bf16.gmra.mrb[0].mxu0 %v796
      %v2001 = vpop.f32.mrb[0].mxu0
      %v2002 = vadd.f32 0.0, %v2001
      %v2003 = vpop.f32.mrb[0].mxu0
      %v2004 = vpop.f32.mrb[0].mxu0
      %v2005 = vadd.f32 0.0, %v2004
      %v2006 = vpop.f32.mrb[0].mxu0
      %2007 = vmatprep.mubr.bf16.mxu0 0
      %2008 = vmatmul.mubr.bf16.gmra.mrb[0].mxu0 %v799
      %v2009 = vpop.f32.mrb[0].mxu0
      %v2010 = vadd.f32 0.0, %v2009
      %v2011 = vpop.f32.mrb[0].mxu0
      %v2012 = vpop.f32.mrb[0].mxu0
      %v2013 = vadd.f32 0.0, %v2012
      %v2014 = vpop.f32.mrb[0].mxu0
      %2015 = vmatprep.mubr.bf16.mxu0 0
      %2016 = vmatmul.mubr.bf16.gmra.mrb[0].mxu0 %v802
      %v2017 = vpop.f32.mrb[0].mxu0
      %v2018 = vadd.f32 0.0, %v2017
      %v2019 = vpop.f32.mrb[0].mxu0
      %v2020 = vpop.f32.mrb[0].mxu0
      %v2021 = vadd.f32 0.0, %v2020
      %v2022 = vpop.f32.mrb[0].mxu0
      %2023 = vmatprep.mubr.bf16.mxu0 0
      %2024 = vmatmul.mubr.bf16.gmra.mrb[0].mxu0 %v805
      %v2025 = vpop.f32.mrb[0].mxu0
      %v2026 = vadd.f32 0.0, %v2025
      %v2027 = vpop.f32.mrb[0].mxu0
      %v2028 = vpop.f32.mrb[0].mxu0
      %v2029 = vadd.f32 0.0, %v2028
      %v2030 = vpop.f32.mrb[0].mxu0
      %2031 = vmatprep.mubr.bf16.mxu0 0
      %2032 = vmatmul.mubr.bf16.gmra.mrb[0].mxu0 %v808
      %v2033 = vpop.f32.mrb[0].mxu0
      %v2034 = vadd.f32 0.0, %v2033
      %v2035 = vpop.f32.mrb[0].mxu0
      %v2036 = vpop.f32.mrb[0].mxu0
      %v2037 = vadd.f32 0.0, %v2036
      %v2038 = vpop.f32.mrb[0].mxu0
      %2039 = vmatprep.mubr.bf16.mxu0 0
      %2040 = vmatmul.mubr.bf16.gmra.mrb[0].mxu0 %v811
      %v2041 = vpop.f32.mrb[0].mxu0
      %v2042 = vadd.f32 0.0, %v2041
      %v2043 = vpop.f32.mrb[0].mxu0
      %v2044 = vpop.f32.mrb[0].mxu0
      %v2045 = vadd.f32 0.0, %v2044
      %v2046 = vpop.f32.mrb[0].mxu0
      %2047 = vmatprep.mubr.bf16.mxu0 0
      %2048 = vmatmul.mubr.bf16.gmra.mrb[0].mxu0 %v814
      %v2049 = vpop.f32.mrb[0].mxu0
      %v2050 = vadd.f32 0.0, %v2049
      %v2051 = vpop.f32.mrb[0].mxu0
      %v2052 = vpop.f32.mrb[0].mxu0
      %v2053 = vadd.f32 0.0, %v2052
      %v2054 = vpop.f32.mrb[0].mxu0
      %2055 = vmatprep.mubr.bf16.mxu0 0
      %2056 = vmatmul.mubr.bf16.gmra.mrb[0].mxu0 %v817
      %v2057 = vpop.f32.mrb[0].mxu0
      %v2058 = vadd.f32 0.0, %v2057
      %v2059 = vpop.f32.mrb[0].mxu0
      %v2060 = vpop.f32.mrb[0].mxu0
      %v2061 = vadd.f32 0.0, %v2060
      %v2062 = vpop.f32.mrb[0].mxu0
      %2063 = vmatprep.mubr.bf16.mxu0 0
      %2064 = vmatmul.mubr.bf16.gmra.mrb[0].mxu0 %v820
      %v2065 = vpop.f32.mrb[0].mxu0
      %v2066 = vadd.f32 0.0, %v2065
      %v2067 = vpop.f32.mrb[0].mxu0
      %v2068 = vpop.f32.mrb[0].mxu0
      %v2069 = vadd.f32 0.0, %v2068
      %v2070 = vpop.f32.mrb[0].mxu0
      %2071 = vmatprep.mubr.bf16.mxu0 0
      %2072 = vmatmul.mubr.bf16.gmra.mrb[0].mxu0 %v823
      %v2073 = vpop.f32.mrb[0].mxu0
      %v2074 = vadd.f32 0.0, %v2073
      %v2075 = vpop.f32.mrb[0].mxu0
      %v2076 = vpop.f32.mrb[0].mxu0
      %v2077 = vadd.f32 0.0, %v2076
      %v2078 = vpop.f32.mrb[0].mxu0
      %2079 = vmatprep.mubr.bf16.mxu0 0
      %2080 = vmatmul.mubr.bf16.gmra.mrb[0].mxu0 %v826
      %v2081 = vpop.f32.mrb[0].mxu0
      %v2082 = vadd.f32 0.0, %v2081
      %v2083 = vpop.f32.mrb[0].mxu0
      %v2084 = vpop.f32.mrb[0].mxu0
      %v2085 = vadd.f32 0.0, %v2084
      %v2086 = vpop.f32.mrb[0].mxu0
      %2087 = vmatprep.mubr.bf16.mxu0 0
      %2088 = vmatmul.mubr.bf16.gmra.mrb[0].mxu0 %v829
      %v2089 = vpop.f32.mrb[0].mxu0
      %v2090 = vadd.f32 0.0, %v2089
      %v2091 = vpop.f32.mrb[0].mxu0
      %v2092 = vpop.f32.mrb[0].mxu0
      %v2093 = vadd.f32 0.0, %v2092
      %v2094 = vpop.f32.mrb[0].mxu0
      %2095 = vmatprep.mubr.bf16.mxu0 0
      %2096 = vmatmul.mubr.bf16.gmra.mrb[0].mxu0 %v832
      %v2097 = vpop.f32.mrb[0].mxu0
      %v2098 = vadd.f32 0.0, %v2097
      %v2099 = vpop.f32.mrb[0].mxu0
      %v2100 = vpop.f32.mrb[0].mxu0
      %v2101 = vadd.f32 0.0, %v2100
      %v2102 = vpop.f32.mrb[0].mxu0
      %2103 = vmatprep.mubr.bf16.mxu0 0
      %2104 = vmatmul.mubr.bf16.gmra.mrb[0].mxu0 %v1946
      %v2105 = vpop.f32.mrb[0].mxu0
      %v2106 = vadd.f32 0.0, %v2105
      %v2107 = vpop.f32.mrb[0].mxu0
      %v2108 = vpop.f32.mrb[0].mxu0
      %v2109 = vadd.f32 0.0, %v2108
      %v2110 = vpop.f32.mrb[0].mxu0
      %2111 = vdwg.mxu0
      %v2112 = vadd.f32 %v1886, %v1986
      %v2113 = vadd.f32 %v1887, %v1989
      %v2114 = vadd.f32 %v1888, %v1994
      %v2115 = vadd.f32 %v1889, %v1997
      %v2116 = vadd.f32 %v1890, %v2002
      %v2117 = vadd.f32 %v1891, %v2005
      %v2118 = vadd.f32 %v1892, %v2010
      %v2119 = vadd.f32 %v1893, %v2013
      %v2120 = vadd.f32 %v1894, %v2018
      %v2121 = vadd.f32 %v1895, %v2021
      %v2122 = vadd.f32 %v1896, %v2026
      %v2123 = vadd.f32 %v1897, %v2029
      %v2124 = vadd.f32 %v1898, %v2034
      %v2125 = vadd.f32 %v1899, %v2037
      %v2126 = vadd.f32 %v1900, %v2042
      %v2127 = vadd.f32 %v1901, %v2045
      %v2128 = vadd.f32 %v1902, %v2050
      %v2129 = vadd.f32 %v1903, %v2053
      %v2130 = vadd.f32 %v1904, %v2058
      %v2131 = vadd.f32 %v1905, %v2061
      %v2132 = vadd.f32 %v1906, %v2066
      %v2133 = vadd.f32 %v1907, %v2069
      %v2134 = vadd.f32 %v1908, %v2074
      %v2135 = vadd.f32 %v1909, %v2077
      %v2136 = vadd.f32 %v1910, %v2082
      %v2137 = vadd.f32 %v1911, %v2085
      %v2138 = vadd.f32 %v1912, %v2090
      %v2139 = vadd.f32 %v1913, %v2093
      %v2140 = vadd.f32 %v1914, %v2098
      %v2141 = vadd.f32 %v1915, %v2101
      %v2142 = vadd.f32 %v1916, %v2106
      %v2143 = vadd.f32 %v1917, %v2109
      %v2145 = vrot.slane %v334, 5
      %v2146 = vrot.slane %v2145, 4
      %v2147 = vrot.slane %v335, 5
      %v2148 = vsel %vm1309, %v2146, %v2147
      %v2149 = vrot.slane %v2147, 4
      %v2150 = vrot.slane %v336, 5
      %v2151 = vsel %vm1309, %v2149, %v2150
      %v2152 = vunpack.c.l.b16 %v2148
      %v2153 = vunpack.c.l.b16 %v2151
      %v2154 = vpack.c.b16 %v2153, %v2152
      %v2156 = vsel %vm785, %v2154, 0
      %v2159 = vsel %vm834, %v345, 0
      %2161 = vmatprep.subr.bf16.mxu0 0
      %2162 = vmatpush1.bf16.msra.mxu0 %v2159
      %2163 = vmatprep.subr.bf16.mxu0 0
      %2164 = vmatpush1.bf16.msra.mxu0 0
      %2165 = vmatprep.subr.bf16.mxu0 0
      %2166 = vmatpush1.bf16.msra.mxu0 0
      %2167 = vmatprep.subr.bf16.mxu0 0
      %2168 = vmatpush1.bf16.msra.mxu0 0
      %2169 = vmatprep.subr.bf16.mxu0 0
      %2170 = vmatpush1.bf16.msra.mxu0 0
      %2171 = vmatprep.subr.bf16.mxu0 0
      %2172 = vmatpush1.bf16.msra.mxu0 0
      %2173 = vmatprep.subr.bf16.mxu0 0
      %2174 = vmatpush1.bf16.msra.mxu0 0
      %2175 = vmatprep.subr.bf16.mxu0 0
      %2176 = vmatpush1.bf16.msra.mxu0 0
      %2177 = vmatprep.subr.bf16.mxu0 0
      %2178 = vmatpush1.bf16.msra.mxu0 0
      %2179 = vmatprep.subr.bf16.mxu0 0
      %2180 = vmatpush1.bf16.msra.mxu0 0
      %2181 = vmatprep.subr.bf16.mxu0 0
      %2182 = vmatpush1.bf16.msra.mxu0 0
      %2183 = vmatprep.subr.bf16.mxu0 0
      %2184 = vmatpush1.bf16.msra.mxu0 0
      %2185 = vmatprep.subr.bf16.mxu0 0
      %2186 = vmatpush1.bf16.msra.mxu0 0
      %2187 = vmatprep.subr.bf16.mxu0 0
      %2188 = vmatpush1.bf16.msra.mxu0 0
      %2189 = vmatprep.subr.bf16.mxu0 0
      %2190 = vmatpush1.bf16.msra.mxu0 0
      %2191 = vmatprep.subr.bf16.mxu0 0
      %2192 = vmatpush1.bf16.msra.mxu0 0
      %2193 = vmatprep.mubr.bf16.mxu0 0
      %2194 = vmatmul.mubr.bf16.gmra.mrb[0].mxu0 %v1474
      %v2195 = vpop.f32.mrb[0].mxu0
      %v2196 = vadd.f32 0.0, %v2195
      %v2197 = vpop.f32.mrb[0].mxu0
      %v2198 = vpop.f32.mrb[0].mxu0
      %v2199 = vadd.f32 0.0, %v2198
      %v2200 = vpop.f32.mrb[0].mxu0
      %2201 = vmatprep.mubr.bf16.mxu0 0
      %2202 = vmatmul.mubr.bf16.gmra.mrb[0].mxu0 %v1477
      %v2203 = vpop.f32.mrb[0].mxu0
      %v2204 = vadd.f32 0.0, %v2203
      %v2205 = vpop.f32.mrb[0].mxu0
      %v2206 = vpop.f32.mrb[0].mxu0
      %v2207 = vadd.f32 0.0, %v2206
      %v2208 = vpop.f32.mrb[0].mxu0
      %2209 = vmatprep.mubr.bf16.mxu0 0
      %2210 = vmatmul.mubr.bf16.gmra.mrb[0].mxu0 %v1480
      %v2211 = vpop.f32.mrb[0].mxu0
      %v2212 = vadd.f32 0.0, %v2211
      %v2213 = vpop.f32.mrb[0].mxu0
      %v2214 = vpop.f32.mrb[0].mxu0
      %v2215 = vadd.f32 0.0, %v2214
      %v2216 = vpop.f32.mrb[0].mxu0
      %2217 = vmatprep.mubr.bf16.mxu0 0
      %2218 = vmatmul.mubr.bf16.gmra.mrb[0].mxu0 %v1483
      %v2219 = vpop.f32.mrb[0].mxu0
      %v2220 = vadd.f32 0.0, %v2219
      %v2221 = vpop.f32.mrb[0].mxu0
      %v2222 = vpop.f32.mrb[0].mxu0
      %v2223 = vadd.f32 0.0, %v2222
      %v2224 = vpop.f32.mrb[0].mxu0
      %2225 = vmatprep.mubr.bf16.mxu0 0
      %2226 = vmatmul.mubr.bf16.gmra.mrb[0].mxu0 %v1486
      %v2227 = vpop.f32.mrb[0].mxu0
      %v2228 = vadd.f32 0.0, %v2227
      %v2229 = vpop.f32.mrb[0].mxu0
      %v2230 = vpop.f32.mrb[0].mxu0
      %v2231 = vadd.f32 0.0, %v2230
      %v2232 = vpop.f32.mrb[0].mxu0
      %2233 = vmatprep.mubr.bf16.mxu0 0
      %2234 = vmatmul.mubr.bf16.gmra.mrb[0].mxu0 %v1489
      %v2235 = vpop.f32.mrb[0].mxu0
      %v2236 = vadd.f32 0.0, %v2235
      %v2237 = vpop.f32.mrb[0].mxu0
      %v2238 = vpop.f32.mrb[0].mxu0
      %v2239 = vadd.f32 0.0, %v2238
      %v2240 = vpop.f32.mrb[0].mxu0
      %2241 = vmatprep.mubr.bf16.mxu0 0
      %2242 = vmatmul.mubr.bf16.gmra.mrb[0].mxu0 %v1492
      %v2243 = vpop.f32.mrb[0].mxu0
      %v2244 = vadd.f32 0.0, %v2243
      %v2245 = vpop.f32.mrb[0].mxu0
      %v2246 = vpop.f32.mrb[0].mxu0
      %v2247 = vadd.f32 0.0, %v2246
      %v2248 = vpop.f32.mrb[0].mxu0
      %2249 = vmatprep.mubr.bf16.mxu0 0
      %2250 = vmatmul.mubr.bf16.gmra.mrb[0].mxu0 %v1495
      %v2251 = vpop.f32.mrb[0].mxu0
      %v2252 = vadd.f32 0.0, %v2251
      %v2253 = vpop.f32.mrb[0].mxu0
      %v2254 = vpop.f32.mrb[0].mxu0
      %v2255 = vadd.f32 0.0, %v2254
      %v2256 = vpop.f32.mrb[0].mxu0
      %2257 = vmatprep.mubr.bf16.mxu0 0
      %2258 = vmatmul.mubr.bf16.gmra.mrb[0].mxu0 %v1498
      %v2259 = vpop.f32.mrb[0].mxu0
      %v2260 = vadd.f32 0.0, %v2259
      %v2261 = vpop.f32.mrb[0].mxu0
      %v2262 = vpop.f32.mrb[0].mxu0
      %v2263 = vadd.f32 0.0, %v2262
      %v2264 = vpop.f32.mrb[0].mxu0
      %2265 = vmatprep.mubr.bf16.mxu0 0
      %2266 = vmatmul.mubr.bf16.gmra.mrb[0].mxu0 %v1501
      %v2267 = vpop.f32.mrb[0].mxu0
      %v2268 = vadd.f32 0.0, %v2267
      %v2269 = vpop.f32.mrb[0].mxu0
      %v2270 = vpop.f32.mrb[0].mxu0
      %v2271 = vadd.f32 0.0, %v2270
      %v2272 = vpop.f32.mrb[0].mxu0
      %2273 = vmatprep.mubr.bf16.mxu0 0
      %2274 = vmatmul.mubr.bf16.gmra.mrb[0].mxu0 %v1504
      %v2275 = vpop.f32.mrb[0].mxu0
      %v2276 = vadd.f32 0.0, %v2275
      %v2277 = vpop.f32.mrb[0].mxu0
      %v2278 = vpop.f32.mrb[0].mxu0
      %v2279 = vadd.f32 0.0, %v2278
      %v2280 = vpop.f32.mrb[0].mxu0
      %2281 = vmatprep.mubr.bf16.mxu0 0
      %2282 = vmatmul.mubr.bf16.gmra.mrb[0].mxu0 %v1507
      %v2283 = vpop.f32.mrb[0].mxu0
      %v2284 = vadd.f32 0.0, %v2283
      %v2285 = vpop.f32.mrb[0].mxu0
      %v2286 = vpop.f32.mrb[0].mxu0
      %v2287 = vadd.f32 0.0, %v2286
      %v2288 = vpop.f32.mrb[0].mxu0
      %2289 = vmatprep.mubr.bf16.mxu0 0
      %2290 = vmatmul.mubr.bf16.gmra.mrb[0].mxu0 %v1510
      %v2291 = vpop.f32.mrb[0].mxu0
      %v2292 = vadd.f32 0.0, %v2291
      %v2293 = vpop.f32.mrb[0].mxu0
      %v2294 = vpop.f32.mrb[0].mxu0
      %v2295 = vadd.f32 0.0, %v2294
      %v2296 = vpop.f32.mrb[0].mxu0
      %2297 = vmatprep.mubr.bf16.mxu0 0
      %2298 = vmatmul.mubr.bf16.gmra.mrb[0].mxu0 %v1513
      %v2299 = vpop.f32.mrb[0].mxu0
      %v2300 = vadd.f32 0.0, %v2299
      %v2301 = vpop.f32.mrb[0].mxu0
      %v2302 = vpop.f32.mrb[0].mxu0
      %v2303 = vadd.f32 0.0, %v2302
      %v2304 = vpop.f32.mrb[0].mxu0
      %2305 = vmatprep.mubr.bf16.mxu0 0
      %2306 = vmatmul.mubr.bf16.gmra.mrb[0].mxu0 %v1516
      %v2307 = vpop.f32.mrb[0].mxu0
      %v2308 = vadd.f32 0.0, %v2307
      %v2309 = vpop.f32.mrb[0].mxu0
      %v2310 = vpop.f32.mrb[0].mxu0
      %v2311 = vadd.f32 0.0, %v2310
      %v2312 = vpop.f32.mrb[0].mxu0
      %2313 = vmatprep.mubr.bf16.mxu0 0
      %2314 = vmatmul.mubr.bf16.gmra.mrb[0].mxu0 %v2156
      %v2315 = vpop.f32.mrb[0].mxu0
      %v2316 = vadd.f32 0.0, %v2315
      %v2317 = vpop.f32.mrb[0].mxu0
      %v2318 = vpop.f32.mrb[0].mxu0
      %v2319 = vadd.f32 0.0, %v2318
      %v2320 = vpop.f32.mrb[0].mxu0
      %2321 = vdwg.mxu0
      %v2322 = vadd.f32 %v2112, %v2196
      %v2323 = vadd.f32 %v2113, %v2199
      %v2324 = vadd.f32 %v2114, %v2204
      %v2325 = vadd.f32 %v2115, %v2207
      %v2326 = vadd.f32 %v2116, %v2212
      %v2327 = vadd.f32 %v2117, %v2215
      %v2328 = vadd.f32 %v2118, %v2220
      %v2329 = vadd.f32 %v2119, %v2223
      %v2330 = vadd.f32 %v2120, %v2228
      %v2331 = vadd.f32 %v2121, %v2231
      %v2332 = vadd.f32 %v2122, %v2236
      %v2333 = vadd.f32 %v2123, %v2239
      %v2334 = vadd.f32 %v2124, %v2244
      %v2335 = vadd.f32 %v2125, %v2247
      %v2336 = vadd.f32 %v2126, %v2252
      %v2337 = vadd.f32 %v2127, %v2255
      %v2338 = vadd.f32 %v2128, %v2260
      %v2339 = vadd.f32 %v2129, %v2263
      %v2340 = vadd.f32 %v2130, %v2268
      %v2341 = vadd.f32 %v2131, %v2271
      %v2342 = vadd.f32 %v2132, %v2276
      %v2343 = vadd.f32 %v2133, %v2279
      %v2344 = vadd.f32 %v2134, %v2284
      %v2345 = vadd.f32 %v2135, %v2287
      %v2346 = vadd.f32 %v2136, %v2292
      %v2347 = vadd.f32 %v2137, %v2295
      %v2348 = vadd.f32 %v2138, %v2300
      %v2349 = vadd.f32 %v2139, %v2303
      %v2350 = vadd.f32 %v2140, %v2308
      %v2351 = vadd.f32 %v2141, %v2311
      %v2352 = vadd.f32 %v2142, %v2316
      %v2353 = vadd.f32 %v2143, %v2319
      %v2356 = vunpack.c.l.b16 %v337
      %v2357 = vunpack.c.l.b16 %v338
      %v2358 = vpack.c.b16 %v2357, %v2356
      %v2360 = vsel %vm785, %v2358, 0
      %v2363 = vsel %vm834, %v346, 0
      %2365 = vmatprep.subr.bf16.mxu0 0
      %2366 = vmatpush1.bf16.msra.mxu0 %v2363
      %2367 = vmatprep.subr.bf16.mxu0 0
      %2368 = vmatpush1.bf16.msra.mxu0 0
      %2369 = vmatprep.subr.bf16.mxu0 0
      %2370 = vmatpush1.bf16.msra.mxu0 0
      %2371 = vmatprep.subr.bf16.mxu0 0
      %2372 = vmatpush1.bf16.msra.mxu0 0
      %2373 = vmatprep.subr.bf16.mxu0 0
      %2374 = vmatpush1.bf16.msra.mxu0 0
      %2375 = vmatprep.subr.bf16.mxu0 0
      %2376 = vmatpush1.bf16.msra.mxu0 0
      %2377 = vmatprep.subr.bf16.mxu0 0
      %2378 = vmatpush1.bf16.msra.mxu0 0
      %2379 = vmatprep.subr.bf16.mxu0 0
      %2380 = vmatpush1.bf16.msra.mxu0 0
      %2381 = vmatprep.subr.bf16.mxu0 0
      %2382 = vmatpush1.bf16.msra.mxu0 0
      %2383 = vmatprep.subr.bf16.mxu0 0
      %2384 = vmatpush1.bf16.msra.mxu0 0
      %2385 = vmatprep.subr.bf16.mxu0 0
      %2386 = vmatpush1.bf16.msra.mxu0 0
      %2387 = vmatprep.subr.bf16.mxu0 0
      %2388 = vmatpush1.bf16.msra.mxu0 0
      %2389 = vmatprep.subr.bf16.mxu0 0
      %2390 = vmatpush1.bf16.msra.mxu0 0
      %2391 = vmatprep.subr.bf16.mxu0 0
      %2392 = vmatpush1.bf16.msra.mxu0 0
      %2393 = vmatprep.subr.bf16.mxu0 0
      %2394 = vmatpush1.bf16.msra.mxu0 0
      %2395 = vmatprep.subr.bf16.mxu0 0
      %2396 = vmatpush1.bf16.msra.mxu0 0
      %2397 = vmatprep.mubr.bf16.mxu0 0
      %2398 = vmatmul.mubr.bf16.gmra.mrb[0].mxu0 %v1086
      %v2399 = vpop.f32.mrb[0].mxu0
      %v2400 = vadd.f32 0.0, %v2399
      %v2401 = vpop.f32.mrb[0].mxu0
      %v2402 = vpop.f32.mrb[0].mxu0
      %v2403 = vadd.f32 0.0, %v2402
      %v2404 = vpop.f32.mrb[0].mxu0
      %2405 = vmatprep.mubr.bf16.mxu0 0
      %2406 = vmatmul.mubr.bf16.gmra.mrb[0].mxu0 %v1089
      %v2407 = vpop.f32.mrb[0].mxu0
      %v2408 = vadd.f32 0.0, %v2407
      %v2409 = vpop.f32.mrb[0].mxu0
      %v2410 = vpop.f32.mrb[0].mxu0
      %v2411 = vadd.f32 0.0, %v2410
      %v2412 = vpop.f32.mrb[0].mxu0
      %2413 = vmatprep.mubr.bf16.mxu0 0
      %2414 = vmatmul.mubr.bf16.gmra.mrb[0].mxu0 %v1092
      %v2415 = vpop.f32.mrb[0].mxu0
      %v2416 = vadd.f32 0.0, %v2415
      %v2417 = vpop.f32.mrb[0].mxu0
      %v2418 = vpop.f32.mrb[0].mxu0
      %v2419 = vadd.f32 0.0, %v2418
      %v2420 = vpop.f32.mrb[0].mxu0
      %2421 = vmatprep.mubr.bf16.mxu0 0
      %2422 = vmatmul.mubr.bf16.gmra.mrb[0].mxu0 %v1095
      %v2423 = vpop.f32.mrb[0].mxu0
      %v2424 = vadd.f32 0.0, %v2423
      %v2425 = vpop.f32.mrb[0].mxu0
      %v2426 = vpop.f32.mrb[0].mxu0
      %v2427 = vadd.f32 0.0, %v2426
      %v2428 = vpop.f32.mrb[0].mxu0
      %2429 = vmatprep.mubr.bf16.mxu0 0
      %2430 = vmatmul.mubr.bf16.gmra.mrb[0].mxu0 %v1098
      %v2431 = vpop.f32.mrb[0].mxu0
      %v2432 = vadd.f32 0.0, %v2431
      %v2433 = vpop.f32.mrb[0].mxu0
      %v2434 = vpop.f32.mrb[0].mxu0
      %v2435 = vadd.f32 0.0, %v2434
      %v2436 = vpop.f32.mrb[0].mxu0
      %2437 = vmatprep.mubr.bf16.mxu0 0
      %2438 = vmatmul.mubr.bf16.gmra.mrb[0].mxu0 %v1101
      %v2439 = vpop.f32.mrb[0].mxu0
      %v2440 = vadd.f32 0.0, %v2439
      %v2441 = vpop.f32.mrb[0].mxu0
      %v2442 = vpop.f32.mrb[0].mxu0
      %v2443 = vadd.f32 0.0, %v2442
      %v2444 = vpop.f32.mrb[0].mxu0
      %2445 = vmatprep.mubr.bf16.mxu0 0
      %2446 = vmatmul.mubr.bf16.gmra.mrb[0].mxu0 %v1104
      %v2447 = vpop.f32.mrb[0].mxu0
      %v2448 = vadd.f32 0.0, %v2447
      %v2449 = vpop.f32.mrb[0].mxu0
      %v2450 = vpop.f32.mrb[0].mxu0
      %v2451 = vadd.f32 0.0, %v2450
      %v2452 = vpop.f32.mrb[0].mxu0
      %2453 = vmatprep.mubr.bf16.mxu0 0
      %2454 = vmatmul.mubr.bf16.gmra.mrb[0].mxu0 %v1107
      %v2455 = vpop.f32.mrb[0].mxu0
      %v2456 = vadd.f32 0.0, %v2455
      %v2457 = vpop.f32.mrb[0].mxu0
      %v2458 = vpop.f32.mrb[0].mxu0
      %v2459 = vadd.f32 0.0, %v2458
      %v2460 = vpop.f32.mrb[0].mxu0
      %2461 = vmatprep.mubr.bf16.mxu0 0
      %2462 = vmatmul.mubr.bf16.gmra.mrb[0].mxu0 %v1110
      %v2463 = vpop.f32.mrb[0].mxu0
      %v2464 = vadd.f32 0.0, %v2463
      %v2465 = vpop.f32.mrb[0].mxu0
      %v2466 = vpop.f32.mrb[0].mxu0
      %v2467 = vadd.f32 0.0, %v2466
      %v2468 = vpop.f32.mrb[0].mxu0
      %2469 = vmatprep.mubr.bf16.mxu0 0
      %2470 = vmatmul.mubr.bf16.gmra.mrb[0].mxu0 %v1113
      %v2471 = vpop.f32.mrb[0].mxu0
      %v2472 = vadd.f32 0.0, %v2471
      %v2473 = vpop.f32.mrb[0].mxu0
      %v2474 = vpop.f32.mrb[0].mxu0
      %v2475 = vadd.f32 0.0, %v2474
      %v2476 = vpop.f32.mrb[0].mxu0
      %2477 = vmatprep.mubr.bf16.mxu0 0
      %2478 = vmatmul.mubr.bf16.gmra.mrb[0].mxu0 %v1116
      %v2479 = vpop.f32.mrb[0].mxu0
      %v2480 = vadd.f32 0.0, %v2479
      %v2481 = vpop.f32.mrb[0].mxu0
      %v2482 = vpop.f32.mrb[0].mxu0
      %v2483 = vadd.f32 0.0, %v2482
      %v2484 = vpop.f32.mrb[0].mxu0
      %2485 = vmatprep.mubr.bf16.mxu0 0
      %2486 = vmatmul.mubr.bf16.gmra.mrb[0].mxu0 %v1119
      %v2487 = vpop.f32.mrb[0].mxu0
      %v2488 = vadd.f32 0.0, %v2487
      %v2489 = vpop.f32.mrb[0].mxu0
      %v2490 = vpop.f32.mrb[0].mxu0
      %v2491 = vadd.f32 0.0, %v2490
      %v2492 = vpop.f32.mrb[0].mxu0
      %2493 = vmatprep.mubr.bf16.mxu0 0
      %2494 = vmatmul.mubr.bf16.gmra.mrb[0].mxu0 %v1122
      %v2495 = vpop.f32.mrb[0].mxu0
      %v2496 = vadd.f32 0.0, %v2495
      %v2497 = vpop.f32.mrb[0].mxu0
      %v2498 = vpop.f32.mrb[0].mxu0
      %v2499 = vadd.f32 0.0, %v2498
      %v2500 = vpop.f32.mrb[0].mxu0
      %2501 = vmatprep.mubr.bf16.mxu0 0
      %2502 = vmatmul.mubr.bf16.gmra.mrb[0].mxu0 %v1125
      %v2503 = vpop.f32.mrb[0].mxu0
      %v2504 = vadd.f32 0.0, %v2503
      %v2505 = vpop.f32.mrb[0].mxu0
      %v2506 = vpop.f32.mrb[0].mxu0
      %v2507 = vadd.f32 0.0, %v2506
      %v2508 = vpop.f32.mrb[0].mxu0
      %2509 = vmatprep.mubr.bf16.mxu0 0
      %2510 = vmatmul.mubr.bf16.gmra.mrb[0].mxu0 %v1720
      %v2511 = vpop.f32.mrb[0].mxu0
      %v2512 = vadd.f32 0.0, %v2511
      %v2513 = vpop.f32.mrb[0].mxu0
      %v2514 = vpop.f32.mrb[0].mxu0
      %v2515 = vadd.f32 0.0, %v2514
      %v2516 = vpop.f32.mrb[0].mxu0
      %2517 = vmatprep.mubr.bf16.mxu0 0
      %2518 = vmatmul.mubr.bf16.gmra.mrb[0].mxu0 %v2360
      %v2519 = vpop.f32.mrb[0].mxu0
      %v2520 = vadd.f32 0.0, %v2519
      %v2521 = vpop.f32.mrb[0].mxu0
      %v2522 = vpop.f32.mrb[0].mxu0
      %v2523 = vadd.f32 0.0, %v2522
      %v2524 = vpop.f32.mrb[0].mxu0
      %2525 = vdwg.mxu0
      %v2526 = vadd.f32 %v2322, %v2400
      %v2527 = vadd.f32 %v2323, %v2403
      %v2528 = vadd.f32 %v2324, %v2408
      %v2529 = vadd.f32 %v2325, %v2411
      %v2530 = vadd.f32 %v2326, %v2416
      %v2531 = vadd.f32 %v2327, %v2419
      %v2532 = vadd.f32 %v2328, %v2424
      %v2533 = vadd.f32 %v2329, %v2427
      %v2534 = vadd.f32 %v2330, %v2432
      %v2535 = vadd.f32 %v2331, %v2435
      %v2536 = vadd.f32 %v2332, %v2440
      %v2537 = vadd.f32 %v2333, %v2443
      %v2538 = vadd.f32 %v2334, %v2448
      %v2539 = vadd.f32 %v2335, %v2451
      %v2540 = vadd.f32 %v2336, %v2456
      %v2541 = vadd.f32 %v2337, %v2459
      %v2542 = vadd.f32 %v2338, %v2464
      %v2543 = vadd.f32 %v2339, %v2467
      %v2544 = vadd.f32 %v2340, %v2472
      %v2545 = vadd.f32 %v2341, %v2475
      %v2546 = vadd.f32 %v2342, %v2480
      %v2547 = vadd.f32 %v2343, %v2483
      %v2548 = vadd.f32 %v2344, %v2488
      %v2549 = vadd.f32 %v2345, %v2491
      %v2550 = vadd.f32 %v2346, %v2496
      %v2551 = vadd.f32 %v2347, %v2499
      %v2552 = vadd.f32 %v2348, %v2504
      %v2553 = vadd.f32 %v2349, %v2507
      %v2554 = vadd.f32 %v2350, %v2512
      %v2555 = vadd.f32 %v2351, %v2515
      %v2556 = vadd.f32 %v2352, %v2520
      %v2557 = vadd.f32 %v2353, %v2523
      %v2559 = vshrl.u32 %v337, 16
      %v2561 = vrot.slane %v2559, 4
      %v2562 = vshll.u32 %v337, 16
      %v2564 = vrot.slane %v2562, 5
      %v2565 = vor.u32 %v2561, %v2564
      %v2566 = vrot.slane %v2565, 4
      %v2568 = vshll.u32 %v338, 16
      %v2570 = vrot.slane %v2568, 5
      %v2571 = vsel %vm352, %v2566, %v2570
      %v2572 = vshrl.u32 %v338, 16
      %v2574 = vrot.slane %v2572, 4
      %v2575 = vor.u32 %v2574, %v2570
      %v2576 = vrot.slane %v2575, 4
      %v2578 = vshll.u32 %v339, 16
      %v2580 = vrot.slane %v2578, 5
      %v2581 = vsel %vm352, %v2576, %v2580
      %v2582 = vunpack.c.l.b16 %v2571
      %v2583 = vunpack.c.l.b16 %v2581
      %v2584 = vpack.c.b16 %v2583, %v2582
      %v2586 = vsel %vm785, %v2584, 0
      %v2589 = vsel %vm834, %v347, 0
      %2591 = vmatprep.subr.bf16.mxu0 0
      %2592 = vmatpush1.bf16.msra.mxu0 %v2589
      %2593 = vmatprep.subr.bf16.mxu0 0
      %2594 = vmatpush1.bf16.msra.mxu0 0
      %2595 = vmatprep.subr.bf16.mxu0 0
      %2596 = vmatpush1.bf16.msra.mxu0 0
      %2597 = vmatprep.subr.bf16.mxu0 0
      %2598 = vmatpush1.bf16.msra.mxu0 0
      %2599 = vmatprep.subr.bf16.mxu0 0
      %2600 = vmatpush1.bf16.msra.mxu0 0
      %2601 = vmatprep.subr.bf16.mxu0 0
      %2602 = vmatpush1.bf16.msra.mxu0 0
      %2603 = vmatprep.subr.bf16.mxu0 0
      %2604 = vmatpush1.bf16.msra.mxu0 0
      %2605 = vmatprep.subr.bf16.mxu0 0
      %2606 = vmatpush1.bf16.msra.mxu0 0
      %2607 = vmatprep.subr.bf16.mxu0 0
      %2608 = vmatpush1.bf16.msra.mxu0 0
      %2609 = vmatprep.subr.bf16.mxu0 0
      %2610 = vmatpush1.bf16.msra.mxu0 0
      %2611 = vmatprep.subr.bf16.mxu0 0
      %2612 = vmatpush1.bf16.msra.mxu0 0
      %2613 = vmatprep.subr.bf16.mxu0 0
      %2614 = vmatpush1.bf16.msra.mxu0 0
      %2615 = vmatprep.subr.bf16.mxu0 0
      %2616 = vmatpush1.bf16.msra.mxu0 0
      %2617 = vmatprep.subr.bf16.mxu0 0
      %2618 = vmatpush1.bf16.msra.mxu0 0
      %2619 = vmatprep.subr.bf16.mxu0 0
      %2620 = vmatpush1.bf16.msra.mxu0 0
      %2621 = vmatprep.subr.bf16.mxu0 0
      %2622 = vmatpush1.bf16.msra.mxu0 0
      %2623 = vmatprep.mubr.bf16.mxu0 0
      %2624 = vmatmul.mubr.bf16.gmra.mrb[0].mxu0 %v793
      %v2625 = vpop.f32.mrb[0].mxu0
      %v2626 = vadd.f32 0.0, %v2625
      %v2627 = vpop.f32.mrb[0].mxu0
      %v2628 = vpop.f32.mrb[0].mxu0
      %v2629 = vadd.f32 0.0, %v2628
      %v2630 = vpop.f32.mrb[0].mxu0
      %2631 = vmatprep.mubr.bf16.mxu0 0
      %2632 = vmatmul.mubr.bf16.gmra.mrb[0].mxu0 %v796
      %v2633 = vpop.f32.mrb[0].mxu0
      %v2634 = vadd.f32 0.0, %v2633
      %v2635 = vpop.f32.mrb[0].mxu0
      %v2636 = vpop.f32.mrb[0].mxu0
      %v2637 = vadd.f32 0.0, %v2636
      %v2638 = vpop.f32.mrb[0].mxu0
      %2639 = vmatprep.mubr.bf16.mxu0 0
      %2640 = vmatmul.mubr.bf16.gmra.mrb[0].mxu0 %v799
      %v2641 = vpop.f32.mrb[0].mxu0
      %v2642 = vadd.f32 0.0, %v2641
      %v2643 = vpop.f32.mrb[0].mxu0
      %v2644 = vpop.f32.mrb[0].mxu0
      %v2645 = vadd.f32 0.0, %v2644
      %v2646 = vpop.f32.mrb[0].mxu0
      %2647 = vmatprep.mubr.bf16.mxu0 0
      %2648 = vmatmul.mubr.bf16.gmra.mrb[0].mxu0 %v802
      %v2649 = vpop.f32.mrb[0].mxu0
      %v2650 = vadd.f32 0.0, %v2649
      %v2651 = vpop.f32.mrb[0].mxu0
      %v2652 = vpop.f32.mrb[0].mxu0
      %v2653 = vadd.f32 0.0, %v2652
      %v2654 = vpop.f32.mrb[0].mxu0
      %2655 = vmatprep.mubr.bf16.mxu0 0
      %2656 = vmatmul.mubr.bf16.gmra.mrb[0].mxu0 %v805
      %v2657 = vpop.f32.mrb[0].mxu0
      %v2658 = vadd.f32 0.0, %v2657
      %v2659 = vpop.f32.mrb[0].mxu0
      %v2660 = vpop.f32.mrb[0].mxu0
      %v2661 = vadd.f32 0.0, %v2660
      %v2662 = vpop.f32.mrb[0].mxu0
      %2663 = vmatprep.mubr.bf16.mxu0 0
      %2664 = vmatmul.mubr.bf16.gmra.mrb[0].mxu0 %v808
      %v2665 = vpop.f32.mrb[0].mxu0
      %v2666 = vadd.f32 0.0, %v2665
      %v2667 = vpop.f32.mrb[0].mxu0
      %v2668 = vpop.f32.mrb[0].mxu0
      %v2669 = vadd.f32 0.0, %v2668
      %v2670 = vpop.f32.mrb[0].mxu0
      %2671 = vmatprep.mubr.bf16.mxu0 0
      %2672 = vmatmul.mubr.bf16.gmra.mrb[0].mxu0 %v811
      %v2673 = vpop.f32.mrb[0].mxu0
      %v2674 = vadd.f32 0.0, %v2673
      %v2675 = vpop.f32.mrb[0].mxu0
      %v2676 = vpop.f32.mrb[0].mxu0
      %v2677 = vadd.f32 0.0, %v2676
      %v2678 = vpop.f32.mrb[0].mxu0
      %2679 = vmatprep.mubr.bf16.mxu0 0
      %2680 = vmatmul.mubr.bf16.gmra.mrb[0].mxu0 %v814
      %v2681 = vpop.f32.mrb[0].mxu0
      %v2682 = vadd.f32 0.0, %v2681
      %v2683 = vpop.f32.mrb[0].mxu0
      %v2684 = vpop.f32.mrb[0].mxu0
      %v2685 = vadd.f32 0.0, %v2684
      %v2686 = vpop.f32.mrb[0].mxu0
      %2687 = vmatprep.mubr.bf16.mxu0 0
      %2688 = vmatmul.mubr.bf16.gmra.mrb[0].mxu0 %v817
      %v2689 = vpop.f32.mrb[0].mxu0
      %v2690 = vadd.f32 0.0, %v2689
      %v2691 = vpop.f32.mrb[0].mxu0
      %v2692 = vpop.f32.mrb[0].mxu0
      %v2693 = vadd.f32 0.0, %v2692
      %v2694 = vpop.f32.mrb[0].mxu0
      %2695 = vmatprep.mubr.bf16.mxu0 0
      %2696 = vmatmul.mubr.bf16.gmra.mrb[0].mxu0 %v820
      %v2697 = vpop.f32.mrb[0].mxu0
      %v2698 = vadd.f32 0.0, %v2697
      %v2699 = vpop.f32.mrb[0].mxu0
      %v2700 = vpop.f32.mrb[0].mxu0
      %v2701 = vadd.f32 0.0, %v2700
      %v2702 = vpop.f32.mrb[0].mxu0
      %2703 = vmatprep.mubr.bf16.mxu0 0
      %2704 = vmatmul.mubr.bf16.gmra.mrb[0].mxu0 %v823
      %v2705 = vpop.f32.mrb[0].mxu0
      %v2706 = vadd.f32 0.0, %v2705
      %v2707 = vpop.f32.mrb[0].mxu0
      %v2708 = vpop.f32.mrb[0].mxu0
      %v2709 = vadd.f32 0.0, %v2708
      %v2710 = vpop.f32.mrb[0].mxu0
      %2711 = vmatprep.mubr.bf16.mxu0 0
      %2712 = vmatmul.mubr.bf16.gmra.mrb[0].mxu0 %v826
      %v2713 = vpop.f32.mrb[0].mxu0
      %v2714 = vadd.f32 0.0, %v2713
      %v2715 = vpop.f32.mrb[0].mxu0
      %v2716 = vpop.f32.mrb[0].mxu0
      %v2717 = vadd.f32 0.0, %v2716
      %v2718 = vpop.f32.mrb[0].mxu0
      %2719 = vmatprep.mubr.bf16.mxu0 0
      %2720 = vmatmul.mubr.bf16.gmra.mrb[0].mxu0 %v829
      %v2721 = vpop.f32.mrb[0].mxu0
      %v2722 = vadd.f32 0.0, %v2721
      %v2723 = vpop.f32.mrb[0].mxu0
      %v2724 = vpop.f32.mrb[0].mxu0
      %v2725 = vadd.f32 0.0, %v2724
      %v2726 = vpop.f32.mrb[0].mxu0
      %2727 = vmatprep.mubr.bf16.mxu0 0
      %2728 = vmatmul.mubr.bf16.gmra.mrb[0].mxu0 %v832
      %v2729 = vpop.f32.mrb[0].mxu0
      %v2730 = vadd.f32 0.0, %v2729
      %v2731 = vpop.f32.mrb[0].mxu0
      %v2732 = vpop.f32.mrb[0].mxu0
      %v2733 = vadd.f32 0.0, %v2732
      %v2734 = vpop.f32.mrb[0].mxu0
      %2735 = vmatprep.mubr.bf16.mxu0 0
      %2736 = vmatmul.mubr.bf16.gmra.mrb[0].mxu0 %v1946
      %v2737 = vpop.f32.mrb[0].mxu0
      %v2738 = vadd.f32 0.0, %v2737
      %v2739 = vpop.f32.mrb[0].mxu0
      %v2740 = vpop.f32.mrb[0].mxu0
      %v2741 = vadd.f32 0.0, %v2740
      %v2742 = vpop.f32.mrb[0].mxu0
      %2743 = vmatprep.mubr.bf16.mxu0 0
      %2744 = vmatmul.mubr.bf16.gmra.mrb[0].mxu0 %v2586
      %v2745 = vpop.f32.mrb[0].mxu0
      %v2746 = vadd.f32 0.0, %v2745
      %v2747 = vpop.f32.mrb[0].mxu0
      %v2748 = vpop.f32.mrb[0].mxu0
      %v2749 = vadd.f32 0.0, %v2748
      %v2750 = vpop.f32.mrb[0].mxu0
      %2751 = vdwg.mxu0
      %v2752 = vadd.f32 %v2526, %v2626
      %v2753 = vadd.f32 %v2527, %v2629
      %v2754 = vadd.f32 %v2528, %v2634
      %v2755 = vadd.f32 %v2529, %v2637
      %v2756 = vadd.f32 %v2530, %v2642
      %v2757 = vadd.f32 %v2531, %v2645
      %v2758 = vadd.f32 %v2532, %v2650
      %v2759 = vadd.f32 %v2533, %v2653
      %v2760 = vadd.f32 %v2534, %v2658
      %v2761 = vadd.f32 %v2535, %v2661
      %v2762 = vadd.f32 %v2536, %v2666
      %v2763 = vadd.f32 %v2537, %v2669
      %v2764 = vadd.f32 %v2538, %v2674
      %v2765 = vadd.f32 %v2539, %v2677
      %v2766 = vadd.f32 %v2540, %v2682
      %v2767 = vadd.f32 %v2541, %v2685
      %v2768 = vadd.f32 %v2542, %v2690
      %v2769 = vadd.f32 %v2543, %v2693
      %v2770 = vadd.f32 %v2544, %v2698
      %v2771 = vadd.f32 %v2545, %v2701
      %v2772 = vadd.f32 %v2546, %v2706
      %v2773 = vadd.f32 %v2547, %v2709
      %v2774 = vadd.f32 %v2548, %v2714
      %v2775 = vadd.f32 %v2549, %v2717
      %v2776 = vadd.f32 %v2550, %v2722
      %v2777 = vadd.f32 %v2551, %v2725
      %v2778 = vadd.f32 %v2552, %v2730
      %v2779 = vadd.f32 %v2553, %v2733
      %v2780 = vadd.f32 %v2554, %v2738
      %v2781 = vadd.f32 %v2555, %v2741
      %v2782 = vadd.f32 %v2556, %v2746
      %v2783 = vadd.f32 %v2557, %v2749
      %v2785 = vrot.slane %v337, 5
      %v2786 = vrot.slane %v2785, 4
      %v2787 = vrot.slane %v338, 5
      %v2788 = vsel %vm1309, %v2786, %v2787
      %v2789 = vrot.slane %v2787, 4
      %v2790 = vrot.slane %v339, 5
      %v2791 = vsel %vm1309, %v2789, %v2790
      %v2792 = vunpack.c.l.b16 %v2788
      %v2793 = vunpack.c.l.b16 %v2791
      %v2794 = vpack.c.b16 %v2793, %v2792
      %v2796 = vsel %vm785, %v2794, 0
      %v2799 = vsel %vm834, %v348, 0
      %2801 = vmatprep.subr.bf16.mxu0 0
      %2802 = vmatpush1.bf16.msra.mxu0 %v2799
      %2803 = vmatprep.subr.bf16.mxu0 0
      %2804 = vmatpush1.bf16.msra.mxu0 0
      %2805 = vmatprep.subr.bf16.mxu0 0
      %2806 = vmatpush1.bf16.msra.mxu0 0
      %2807 = vmatprep.subr.bf16.mxu0 0
      %2808 = vmatpush1.bf16.msra.mxu0 0
      %2809 = vmatprep.subr.bf16.mxu0 0
      %2810 = vmatpush1.bf16.msra.mxu0 0
      %2811 = vmatprep.subr.bf16.mxu0 0
      %2812 = vmatpush1.bf16.msra.mxu0 0
      %2813 = vmatprep.subr.bf16.mxu0 0
      %2814 = vmatpush1.bf16.msra.mxu0 0
      %2815 = vmatprep.subr.bf16.mxu0 0
      %2816 = vmatpush1.bf16.msra.mxu0 0
      %2817 = vmatprep.subr.bf16.mxu0 0
      %2818 = vmatpush1.bf16.msra.mxu0 0
      %2819 = vmatprep.subr.bf16.mxu0 0
      %2820 = vmatpush1.bf16.msra.mxu0 0
      %2821 = vmatprep.subr.bf16.mxu0 0
      %2822 = vmatpush1.bf16.msra.mxu0 0
      %2823 = vmatprep.subr.bf16.mxu0 0
      %2824 = vmatpush1.bf16.msra.mxu0 0
      %2825 = vmatprep.subr.bf16.mxu0 0
      %2826 = vmatpush1.bf16.msra.mxu0 0
      %2827 = vmatprep.subr.bf16.mxu0 0
      %2828 = vmatpush1.bf16.msra.mxu0 0
      %2829 = vmatprep.subr.bf16.mxu0 0
      %2830 = vmatpush1.bf16.msra.mxu0 0
      %2831 = vmatprep.subr.bf16.mxu0 0
      %2832 = vmatpush1.bf16.msra.mxu0 0
      %2833 = vmatprep.mubr.bf16.mxu0 0
      %2834 = vmatmul.mubr.bf16.gmra.mrb[0].mxu0 %v1477
      %v2835 = vpop.f32.mrb[0].mxu0
      %v2836 = vadd.f32 0.0, %v2835
      %v2837 = vpop.f32.mrb[0].mxu0
      %v2838 = vpop.f32.mrb[0].mxu0
      %v2839 = vadd.f32 0.0, %v2838
      %v2840 = vpop.f32.mrb[0].mxu0
      %2841 = vmatprep.mubr.bf16.mxu0 0
      %2842 = vmatmul.mubr.bf16.gmra.mrb[0].mxu0 %v1480
      %v2843 = vpop.f32.mrb[0].mxu0
      %v2844 = vadd.f32 0.0, %v2843
      %v2845 = vpop.f32.mrb[0].mxu0
      %v2846 = vpop.f32.mrb[0].mxu0
      %v2847 = vadd.f32 0.0, %v2846
      %v2848 = vpop.f32.mrb[0].mxu0
      %2849 = vmatprep.mubr.bf16.mxu0 0
      %2850 = vmatmul.mubr.bf16.gmra.mrb[0].mxu0 %v1483
      %v2851 = vpop.f32.mrb[0].mxu0
      %v2852 = vadd.f32 0.0, %v2851
      %v2853 = vpop.f32.mrb[0].mxu0
      %v2854 = vpop.f32.mrb[0].mxu0
      %v2855 = vadd.f32 0.0, %v2854
      %v2856 = vpop.f32.mrb[0].mxu0
      %2857 = vmatprep.mubr.bf16.mxu0 0
      %2858 = vmatmul.mubr.bf16.gmra.mrb[0].mxu0 %v1486
      %v2859 = vpop.f32.mrb[0].mxu0
      %v2860 = vadd.f32 0.0, %v2859
      %v2861 = vpop.f32.mrb[0].mxu0
      %v2862 = vpop.f32.mrb[0].mxu0
      %v2863 = vadd.f32 0.0, %v2862
      %v2864 = vpop.f32.mrb[0].mxu0
      %2865 = vmatprep.mubr.bf16.mxu0 0
      %2866 = vmatmul.mubr.bf16.gmra.mrb[0].mxu0 %v1489
      %v2867 = vpop.f32.mrb[0].mxu0
      %v2868 = vadd.f32 0.0, %v2867
      %v2869 = vpop.f32.mrb[0].mxu0
      %v2870 = vpop.f32.mrb[0].mxu0
      %v2871 = vadd.f32 0.0, %v2870
      %v2872 = vpop.f32.mrb[0].mxu0
      %2873 = vmatprep.mubr.bf16.mxu0 0
      %2874 = vmatmul.mubr.bf16.gmra.mrb[0].mxu0 %v1492
      %v2875 = vpop.f32.mrb[0].mxu0
      %v2876 = vadd.f32 0.0, %v2875
      %v2877 = vpop.f32.mrb[0].mxu0
      %v2878 = vpop.f32.mrb[0].mxu0
      %v2879 = vadd.f32 0.0, %v2878
      %v2880 = vpop.f32.mrb[0].mxu0
      %2881 = vmatprep.mubr.bf16.mxu0 0
      %2882 = vmatmul.mubr.bf16.gmra.mrb[0].mxu0 %v1495
      %v2883 = vpop.f32.mrb[0].mxu0
      %v2884 = vadd.f32 0.0, %v2883
      %v2885 = vpop.f32.mrb[0].mxu0
      %v2886 = vpop.f32.mrb[0].mxu0
      %v2887 = vadd.f32 0.0, %v2886
      %v2888 = vpop.f32.mrb[0].mxu0
      %2889 = vmatprep.mubr.bf16.mxu0 0
      %2890 = vmatmul.mubr.bf16.gmra.mrb[0].mxu0 %v1498
      %v2891 = vpop.f32.mrb[0].mxu0
      %v2892 = vadd.f32 0.0, %v2891
      %v2893 = vpop.f32.mrb[0].mxu0
      %v2894 = vpop.f32.mrb[0].mxu0
      %v2895 = vadd.f32 0.0, %v2894
      %v2896 = vpop.f32.mrb[0].mxu0
      %2897 = vmatprep.mubr.bf16.mxu0 0
      %2898 = vmatmul.mubr.bf16.gmra.mrb[0].mxu0 %v1501
      %v2899 = vpop.f32.mrb[0].mxu0
      %v2900 = vadd.f32 0.0, %v2899
      %v2901 = vpop.f32.mrb[0].mxu0
      %v2902 = vpop.f32.mrb[0].mxu0
      %v2903 = vadd.f32 0.0, %v2902
      %v2904 = vpop.f32.mrb[0].mxu0
      %2905 = vmatprep.mubr.bf16.mxu0 0
      %2906 = vmatmul.mubr.bf16.gmra.mrb[0].mxu0 %v1504
      %v2907 = vpop.f32.mrb[0].mxu0
      %v2908 = vadd.f32 0.0, %v2907
      %v2909 = vpop.f32.mrb[0].mxu0
      %v2910 = vpop.f32.mrb[0].mxu0
      %v2911 = vadd.f32 0.0, %v2910
      %v2912 = vpop.f32.mrb[0].mxu0
      %2913 = vmatprep.mubr.bf16.mxu0 0
      %2914 = vmatmul.mubr.bf16.gmra.mrb[0].mxu0 %v1507
      %v2915 = vpop.f32.mrb[0].mxu0
      %v2916 = vadd.f32 0.0, %v2915
      %v2917 = vpop.f32.mrb[0].mxu0
      %v2918 = vpop.f32.mrb[0].mxu0
      %v2919 = vadd.f32 0.0, %v2918
      %v2920 = vpop.f32.mrb[0].mxu0
      %2921 = vmatprep.mubr.bf16.mxu0 0
      %2922 = vmatmul.mubr.bf16.gmra.mrb[0].mxu0 %v1510
      %v2923 = vpop.f32.mrb[0].mxu0
      %v2924 = vadd.f32 0.0, %v2923
      %v2925 = vpop.f32.mrb[0].mxu0
      %v2926 = vpop.f32.mrb[0].mxu0
      %v2927 = vadd.f32 0.0, %v2926
      %v2928 = vpop.f32.mrb[0].mxu0
      %2929 = vmatprep.mubr.bf16.mxu0 0
      %2930 = vmatmul.mubr.bf16.gmra.mrb[0].mxu0 %v1513
      %v2931 = vpop.f32.mrb[0].mxu0
      %v2932 = vadd.f32 0.0, %v2931
      %v2933 = vpop.f32.mrb[0].mxu0
      %v2934 = vpop.f32.mrb[0].mxu0
      %v2935 = vadd.f32 0.0, %v2934
      %v2936 = vpop.f32.mrb[0].mxu0
      %2937 = vmatprep.mubr.bf16.mxu0 0
      %2938 = vmatmul.mubr.bf16.gmra.mrb[0].mxu0 %v1516
      %v2939 = vpop.f32.mrb[0].mxu0
      %v2940 = vadd.f32 0.0, %v2939
      %v2941 = vpop.f32.mrb[0].mxu0
      %v2942 = vpop.f32.mrb[0].mxu0
      %v2943 = vadd.f32 0.0, %v2942
      %v2944 = vpop.f32.mrb[0].mxu0
      %2945 = vmatprep.mubr.bf16.mxu0 0
      %2946 = vmatmul.mubr.bf16.gmra.mrb[0].mxu0 %v2156
      %v2947 = vpop.f32.mrb[0].mxu0
      %v2948 = vadd.f32 0.0, %v2947
      %v2949 = vpop.f32.mrb[0].mxu0
      %v2950 = vpop.f32.mrb[0].mxu0
      %v2951 = vadd.f32 0.0, %v2950
      %v2952 = vpop.f32.mrb[0].mxu0
      %2953 = vmatprep.mubr.bf16.mxu0 0
      %2954 = vmatmul.mubr.bf16.gmra.mrb[0].mxu0 %v2796
      %v2955 = vpop.f32.mrb[0].mxu0
      %v2956 = vadd.f32 0.0, %v2955
      %v2957 = vpop.f32.mrb[0].mxu0
      %v2958 = vpop.f32.mrb[0].mxu0
      %v2959 = vadd.f32 0.0, %v2958
      %v2960 = vpop.f32.mrb[0].mxu0
      %2961 = vdwg.mxu0
      %v2962 = vadd.f32 %v2752, %v2836
      %v2963 = vadd.f32 %v2753, %v2839
      %v2964 = vadd.f32 %v2754, %v2844
      %v2965 = vadd.f32 %v2755, %v2847
      %v2966 = vadd.f32 %v2756, %v2852
      %v2967 = vadd.f32 %v2757, %v2855
      %v2968 = vadd.f32 %v2758, %v2860
      %v2969 = vadd.f32 %v2759, %v2863
      %v2970 = vadd.f32 %v2760, %v2868
      %v2971 = vadd.f32 %v2761, %v2871
      %v2972 = vadd.f32 %v2762, %v2876
      %v2973 = vadd.f32 %v2763, %v2879
      %v2974 = vadd.f32 %v2764, %v2884
      %v2975 = vadd.f32 %v2765, %v2887
      %v2976 = vadd.f32 %v2766, %v2892
      %v2977 = vadd.f32 %v2767, %v2895
      %v2978 = vadd.f32 %v2768, %v2900
      %v2979 = vadd.f32 %v2769, %v2903
      %v2980 = vadd.f32 %v2770, %v2908
      %v2981 = vadd.f32 %v2771, %v2911
      %v2982 = vadd.f32 %v2772, %v2916
      %v2983 = vadd.f32 %v2773, %v2919
      %v2984 = vadd.f32 %v2774, %v2924
      %v2985 = vadd.f32 %v2775, %v2927
      %v2986 = vadd.f32 %v2776, %v2932
      %v2987 = vadd.f32 %v2777, %v2935
      %v2988 = vadd.f32 %v2778, %v2940
      %v2989 = vadd.f32 %v2779, %v2943
      %v2990 = vadd.f32 %v2780, %v2948
      %v2991 = vadd.f32 %v2781, %v2951
      %v2992 = vadd.f32 %v2782, %v2956
      %v2993 = vadd.f32 %v2783, %v2959
      %v2995 = vlaneseq
      %v2996 = vshrl.u32 %v2995, 7
      %v2997 = vsub.s32 0, %v2996
      %v2998 = vrot.slane %v349, %v2997
      %v3000 = vadd.f32 %v2962, %v2998
      %v3001 = vadd.f32 %v2963, %v2998
      %v3002 = vadd.f32 %v2964, %v2998
      %v3003 = vadd.f32 %v2965, %v2998
      %v3004 = vadd.f32 %v2966, %v2998
      %v3005 = vadd.f32 %v2967, %v2998
      %v3006 = vadd.f32 %v2968, %v2998
      %v3007 = vadd.f32 %v2969, %v2998
      %v3008 = vadd.f32 %v2970, %v2998
      %v3009 = vadd.f32 %v2971, %v2998
      %v3010 = vadd.f32 %v2972, %v2998
      %v3011 = vadd.f32 %v2973, %v2998
      %v3012 = vadd.f32 %v2974, %v2998
      %v3013 = vadd.f32 %v2975, %v2998
      %v3014 = vadd.f32 %v2976, %v2998
      %v3015 = vadd.f32 %v2977, %v2998
      %v3016 = vadd.f32 %v2978, %v2998
      %v3017 = vadd.f32 %v2979, %v2998
      %v3018 = vadd.f32 %v2980, %v2998
      %v3019 = vadd.f32 %v2981, %v2998
      %v3020 = vadd.f32 %v2982, %v2998
      %v3021 = vadd.f32 %v2983, %v2998
      %v3022 = vadd.f32 %v2984, %v2998
      %v3023 = vadd.f32 %v2985, %v2998
      %v3024 = vadd.f32 %v2986, %v2998
      %v3025 = vadd.f32 %v2987, %v2998
      %v3026 = vadd.f32 %v2988, %v2998
      %v3027 = vadd.f32 %v2989, %v2998
      %v3028 = vadd.f32 %v2990, %v2998
      %v3029 = vadd.f32 %v2991, %v2998
      %v3030 = vadd.f32 %v2992, %v2998
      %v3031 = vadd.f32 %v2993, %v2998
      %vm3032 = vcmp.ge.f32.partialorder %v3000, 0.0
      %vm3033 = vcmp.ge.f32.partialorder %v3001, 0.0
      %vm3034 = vcmp.ge.f32.partialorder %v3002, 0.0
      %vm3035 = vcmp.ge.f32.partialorder %v3003, 0.0
      %vm3036 = vcmp.ge.f32.partialorder %v3004, 0.0
      %vm3037 = vcmp.ge.f32.partialorder %v3005, 0.0
      %vm3038 = vcmp.ge.f32.partialorder %v3006, 0.0
      %vm3039 = vcmp.ge.f32.partialorder %v3007, 0.0
      %vm3040 = vcmp.ge.f32.partialorder %v3008, 0.0
      %vm3041 = vcmp.ge.f32.partialorder %v3009, 0.0
      %vm3042 = vcmp.ge.f32.partialorder %v3010, 0.0
      %vm3043 = vcmp.ge.f32.partialorder %v3011, 0.0
      %vm3044 = vcmp.ge.f32.partialorder %v3012, 0.0
      %vm3045 = vcmp.ge.f32.partialorder %v3013, 0.0
      %vm3046 = vcmp.ge.f32.partialorder %v3014, 0.0
      %vm3047 = vcmp.ge.f32.partialorder %v3015, 0.0
      %vm3048 = vcmp.ge.f32.partialorder %v3016, 0.0
      %vm3049 = vcmp.ge.f32.partialorder %v3017, 0.0
      %vm3050 = vcmp.ge.f32.partialorder %v3018, 0.0
      %vm3051 = vcmp.ge.f32.partialorder %v3019, 0.0
      %vm3052 = vcmp.ge.f32.partialorder %v3020, 0.0
      %vm3053 = vcmp.ge.f32.partialorder %v3021, 0.0
      %vm3054 = vcmp.ge.f32.partialorder %v3022, 0.0
      %vm3055 = vcmp.ge.f32.partialorder %v3023, 0.0
      %vm3056 = vcmp.ge.f32.partialorder %v3024, 0.0
      %vm3057 = vcmp.ge.f32.partialorder %v3025, 0.0
      %vm3058 = vcmp.ge.f32.partialorder %v3026, 0.0
      %vm3059 = vcmp.ge.f32.partialorder %v3027, 0.0
      %vm3060 = vcmp.ge.f32.partialorder %v3028, 0.0
      %vm3061 = vcmp.ge.f32.partialorder %v3029, 0.0
      %vm3062 = vcmp.ge.f32.partialorder %v3030, 0.0
      %vm3063 = vcmp.ge.f32.partialorder %v3031, 0.0
      %v3064 = vmul.f32 %v3000, 0.01
      %v3065 = vmul.f32 %v3001, 0.01
      %v3066 = vmul.f32 %v3002, 0.01
      %v3067 = vmul.f32 %v3003, 0.01
      %v3068 = vmul.f32 %v3004, 0.01
      %v3069 = vmul.f32 %v3005, 0.01
      %v3070 = vmul.f32 %v3006, 0.01
      %v3071 = vmul.f32 %v3007, 0.01
      %v3072 = vmul.f32 %v3008, 0.01
      %v3073 = vmul.f32 %v3009, 0.01
      %v3074 = vmul.f32 %v3010, 0.01
      %v3075 = vmul.f32 %v3011, 0.01
      %v3076 = vmul.f32 %v3012, 0.01
      %v3077 = vmul.f32 %v3013, 0.01
      %v3078 = vmul.f32 %v3014, 0.01
      %v3079 = vmul.f32 %v3015, 0.01
      %v3080 = vmul.f32 %v3016, 0.01
      %v3081 = vmul.f32 %v3017, 0.01
      %v3082 = vmul.f32 %v3018, 0.01
      %v3083 = vmul.f32 %v3019, 0.01
      %v3084 = vmul.f32 %v3020, 0.01
      %v3085 = vmul.f32 %v3021, 0.01
      %v3086 = vmul.f32 %v3022, 0.01
      %v3087 = vmul.f32 %v3023, 0.01
      %v3088 = vmul.f32 %v3024, 0.01
      %v3089 = vmul.f32 %v3025, 0.01
      %v3090 = vmul.f32 %v3026, 0.01
      %v3091 = vmul.f32 %v3027, 0.01
      %v3092 = vmul.f32 %v3028, 0.01
      %v3093 = vmul.f32 %v3029, 0.01
      %v3094 = vmul.f32 %v3030, 0.01
      %v3095 = vmul.f32 %v3031, 0.01
      %v3096 = vsel %vm3032, %v3000, %v3064
      %v3097 = vsel %vm3033, %v3001, %v3065
      %v3098 = vsel %vm3034, %v3002, %v3066
      %v3099 = vsel %vm3035, %v3003, %v3067
      %v3100 = vsel %vm3036, %v3004, %v3068
      %v3101 = vsel %vm3037, %v3005, %v3069
      %v3102 = vsel %vm3038, %v3006, %v3070
      %v3103 = vsel %vm3039, %v3007, %v3071
      %v3104 = vsel %vm3040, %v3008, %v3072
      %v3105 = vsel %vm3041, %v3009, %v3073
      %v3106 = vsel %vm3042, %v3010, %v3074
      %v3107 = vsel %vm3043, %v3011, %v3075
      %v3108 = vsel %vm3044, %v3012, %v3076
      %v3109 = vsel %vm3045, %v3013, %v3077
      %v3110 = vsel %vm3046, %v3014, %v3078
      %v3111 = vsel %vm3047, %v3015, %v3079
      %v3112 = vsel %vm3048, %v3016, %v3080
      %v3113 = vsel %vm3049, %v3017, %v3081
      %v3114 = vsel %vm3050, %v3018, %v3082
      %v3115 = vsel %vm3051, %v3019, %v3083
      %v3116 = vsel %vm3052, %v3020, %v3084
      %v3117 = vsel %vm3053, %v3021, %v3085
      %v3118 = vsel %vm3054, %v3022, %v3086
      %v3119 = vsel %vm3055, %v3023, %v3087
      %v3120 = vsel %vm3056, %v3024, %v3088
      %v3121 = vsel %vm3057, %v3025, %v3089
      %v3122 = vsel %vm3058, %v3026, %v3090
      %v3123 = vsel %vm3059, %v3027, %v3091
      %v3124 = vsel %vm3060, %v3028, %v3092
      %v3125 = vsel %vm3061, %v3029, %v3093
      %v3126 = vsel %vm3062, %v3030, %v3094
      %v3127 = vsel %vm3063, %v3031, %v3095
      %v3128 = vpack.c.bf16 %v3097, %v3096
      %v3129 = vpack.c.bf16 %v3099, %v3098
      %v3130 = vpack.c.bf16 %v3101, %v3100
      %v3131 = vpack.c.bf16 %v3103, %v3102
      %v3132 = vpack.c.bf16 %v3105, %v3104
      %v3133 = vpack.c.bf16 %v3107, %v3106
      %v3134 = vpack.c.bf16 %v3109, %v3108
      %v3135 = vpack.c.bf16 %v3111, %v3110
      %v3136 = vpack.c.bf16 %v3113, %v3112
      %v3137 = vpack.c.bf16 %v3115, %v3114
      %v3138 = vpack.c.bf16 %v3117, %v3116
      %v3139 = vpack.c.bf16 %v3119, %v3118
      %v3140 = vpack.c.bf16 %v3121, %v3120
      %v3141 = vpack.c.bf16 %v3123, %v3122
      %v3142 = vpack.c.bf16 %v3125, %v3124
      %v3143 = vpack.c.bf16 %v3127, %v3126
      %v3160 = vunpack.c.l.b16 %v3128
      %v3161 = vunpack.c.h.b16 %v3128
      %v3162 = vunpack.c.l.b16 %v3129
      %v3163 = vunpack.c.h.b16 %v3129
      %v3164 = vunpack.c.l.b16 %v3130
      %v3165 = vunpack.c.h.b16 %v3130
      %v3166 = vunpack.c.l.b16 %v3131
      %v3167 = vunpack.c.h.b16 %v3131
      %v3168 = vunpack.c.l.b16 %v3132
      %v3169 = vunpack.c.h.b16 %v3132
      %v3170 = vunpack.c.l.b16 %v3133
      %v3171 = vunpack.c.h.b16 %v3133
      %v3172 = vunpack.c.l.b16 %v3134
      %v3173 = vunpack.c.h.b16 %v3134
      %v3174 = vunpack.c.l.b16 %v3135
      %v3175 = vunpack.c.h.b16 %v3135
      %v3176 = vunpack.c.l.b16 %v3136
      %v3177 = vunpack.c.h.b16 %v3136
      %v3178 = vunpack.c.l.b16 %v3137
      %v3179 = vunpack.c.h.b16 %v3137
      %v3180 = vunpack.c.l.b16 %v3138
      %v3181 = vunpack.c.h.b16 %v3138
      %v3182 = vunpack.c.l.b16 %v3139
      %v3183 = vunpack.c.h.b16 %v3139
      %v3184 = vunpack.c.l.b16 %v3140
      %v3185 = vunpack.c.h.b16 %v3140
      %v3186 = vunpack.c.l.b16 %v3141
      %v3187 = vunpack.c.h.b16 %v3141
      %v3188 = vunpack.c.l.b16 %v3142
      %v3189 = vunpack.c.h.b16 %v3142
      %v3190 = vunpack.c.l.b16 %v3143
      %v3191 = vunpack.c.h.b16 %v3143
      %v3192 = vpack.c.b16 %v3160, %v3160
      %v3193 = vpack.c.b16 %v3161, %v3161
      %v3194 = vpack.c.b16 %v3162, %v3162
      %v3195 = vpack.c.b16 %v3163, %v3163
      %v3196 = vpack.c.b16 %v3164, %v3164
      %v3197 = vpack.c.b16 %v3165, %v3165
      %v3198 = vpack.c.b16 %v3166, %v3166
      %v3199 = vpack.c.b16 %v3167, %v3167
      %v3200 = vpack.c.b16 %v3168, %v3168
      %v3201 = vpack.c.b16 %v3169, %v3169
      %v3202 = vpack.c.b16 %v3170, %v3170
      %v3203 = vpack.c.b16 %v3171, %v3171
      %v3204 = vpack.c.b16 %v3172, %v3172
      %v3205 = vpack.c.b16 %v3173, %v3173
      %v3206 = vpack.c.b16 %v3174, %v3174
      %v3207 = vpack.c.b16 %v3175, %v3175
      %v3208 = vpack.c.b16 %v3176, %v3176
      %v3209 = vpack.c.b16 %v3177, %v3177
      %v3210 = vpack.c.b16 %v3178, %v3178
      %v3211 = vpack.c.b16 %v3179, %v3179
      %v3212 = vpack.c.b16 %v3180, %v3180
      %v3213 = vpack.c.b16 %v3181, %v3181
      %v3214 = vpack.c.b16 %v3182, %v3182
      %v3215 = vpack.c.b16 %v3183, %v3183
      %v3216 = vpack.c.b16 %v3184, %v3184
      %v3217 = vpack.c.b16 %v3185, %v3185
      %v3218 = vpack.c.b16 %v3186, %v3186
      %v3219 = vpack.c.b16 %v3187, %v3187
      %v3220 = vpack.c.b16 %v3188, %v3188
      %v3221 = vpack.c.b16 %v3189, %v3189
      %v3222 = vpack.c.b16 %v3190, %v3190
      %v3223 = vpack.c.b16 %v3191, %v3191
      %vm3224 = vsmask.f32 256
      %vm3225 = vsmask.f32 4368
      %vm3226 = vmor %vm3224, %vm3225
      %v3228 = vshrl.u32 %v3192, 16
      %v3230 = vrot.slane %v3228, 7
      %v3231 = vshll.u32 %v3192, 16
      %v3233 = vor.u32 %v3230, %v3231
      %v3234 = vrot.slane %v3230, 4
      %v3236 = vshrl.u32 %v3193, 16
      %v3238 = vrot.slane %v3236, 7
      %v3239 = vshll.u32 %v3193, 16
      %v3241 = vor.u32 %v3238, %v3239
      %v3242 = vsel %vm3226, %v3234, %v3241
      %v3243 = vrot.slane %v3238, 4
      %v3245 = vshrl.u32 %v3194, 16
      %v3247 = vrot.slane %v3245, 7
      %v3248 = vshll.u32 %v3194, 16
      %v3250 = vor.u32 %v3247, %v3248
      %v3251 = vrot.slane %v3247, 4
      %v3253 = vshrl.u32 %v3195, 16
      %v3255 = vrot.slane %v3253, 7
      %v3256 = vshll.u32 %v3195, 16
      %v3258 = vor.u32 %v3255, %v3256
      %v3259 = vsel %vm3226, %v3251, %v3258
      %v3260 = vrot.slane %v3255, 4
      %v3262 = vshrl.u32 %v3196, 16
      %v3264 = vrot.slane %v3262, 7
      %v3265 = vshll.u32 %v3196, 16
      %v3267 = vor.u32 %v3264, %v3265
      %v3268 = vrot.slane %v3264, 4
      %v3270 = vshrl.u32 %v3197, 16
      %v3272 = vrot.slane %v3270, 7
      %v3273 = vshll.u32 %v3197, 16
      %v3275 = vor.u32 %v3272, %v3273
      %v3276 = vsel %vm3226, %v3268, %v3275
      %v3277 = vrot.slane %v3272, 4
      %v3279 = vshrl.u32 %v3198, 16
      %v3281 = vrot.slane %v3279, 7
      %v3282 = vshll.u32 %v3198, 16
      %v3284 = vor.u32 %v3281, %v3282
      %v3285 = vrot.slane %v3281, 4
      %v3287 = vshrl.u32 %v3199, 16
      %v3289 = vrot.slane %v3287, 7
      %v3290 = vshll.u32 %v3199, 16
      %v3292 = vor.u32 %v3289, %v3290
      %v3293 = vsel %vm3226, %v3285, %v3292
      %v3294 = vrot.slane %v3289, 4
      %v3296 = vshrl.u32 %v3200, 16
      %v3298 = vrot.slane %v3296, 7
      %v3299 = vshll.u32 %v3200, 16
      %v3301 = vor.u32 %v3298, %v3299
      %v3302 = vrot.slane %v3298, 4
      %v3304 = vshrl.u32 %v3201, 16
      %v3306 = vrot.slane %v3304, 7
      %v3307 = vshll.u32 %v3201, 16
      %v3309 = vor.u32 %v3306, %v3307
      %v3310 = vsel %vm3226, %v3302, %v3309
      %v3311 = vrot.slane %v3306, 4
      %v3313 = vshrl.u32 %v3202, 16
      %v3315 = vrot.slane %v3313, 7
      %v3316 = vshll.u32 %v3202, 16
      %v3318 = vor.u32 %v3315, %v3316
      %v3319 = vrot.slane %v3315, 4
      %v3321 = vshrl.u32 %v3203, 16
      %v3323 = vrot.slane %v3321, 7
      %v3324 = vshll.u32 %v3203, 16
      %v3326 = vor.u32 %v3323, %v3324
      %v3327 = vsel %vm3226, %v3319, %v3326
      %v3328 = vrot.slane %v3323, 4
      %v3330 = vshrl.u32 %v3204, 16
      %v3332 = vrot.slane %v3330, 7
      %v3333 = vshll.u32 %v3204, 16
      %v3335 = vor.u32 %v3332, %v3333
      %v3336 = vrot.slane %v3332, 4
      %v3338 = vshrl.u32 %v3205, 16
      %v3340 = vrot.slane %v3338, 7
      %v3341 = vshll.u32 %v3205, 16
      %v3343 = vor.u32 %v3340, %v3341
      %v3344 = vsel %vm3226, %v3336, %v3343
      %v3345 = vrot.slane %v3340, 4
      %v3347 = vshrl.u32 %v3206, 16
      %v3349 = vrot.slane %v3347, 7
      %v3350 = vshll.u32 %v3206, 16
      %v3352 = vor.u32 %v3349, %v3350
      %v3353 = vrot.slane %v3349, 4
      %v3355 = vshrl.u32 %v3207, 16
      %v3357 = vrot.slane %v3355, 7
      %v3358 = vshll.u32 %v3207, 16
      %v3360 = vor.u32 %v3357, %v3358
      %v3361 = vsel %vm3226, %v3353, %v3360
      %v3362 = vrot.slane %v3357, 4
      %v3364 = vshrl.u32 %v3208, 16
      %v3366 = vrot.slane %v3364, 7
      %v3367 = vshll.u32 %v3208, 16
      %v3369 = vor.u32 %v3366, %v3367
      %v3370 = vrot.slane %v3366, 4
      %v3372 = vshrl.u32 %v3209, 16
      %v3374 = vrot.slane %v3372, 7
      %v3375 = vshll.u32 %v3209, 16
      %v3377 = vor.u32 %v3374, %v3375
      %v3378 = vsel %vm3226, %v3370, %v3377
      %v3379 = vrot.slane %v3374, 4
      %v3381 = vshrl.u32 %v3210, 16
      %v3383 = vrot.slane %v3381, 7
      %v3384 = vshll.u32 %v3210, 16
      %v3386 = vor.u32 %v3383, %v3384
      %v3387 = vrot.slane %v3383, 4
      %v3389 = vshrl.u32 %v3211, 16
      %v3391 = vrot.slane %v3389, 7
      %v3392 = vshll.u32 %v3211, 16
      %v3394 = vor.u32 %v3391, %v3392
      %v3395 = vsel %vm3226, %v3387, %v3394
      %v3396 = vrot.slane %v3391, 4
      %v3398 = vshrl.u32 %v3212, 16
      %v3400 = vrot.slane %v3398, 7
      %v3401 = vshll.u32 %v3212, 16
      %v3403 = vor.u32 %v3400, %v3401
      %v3404 = vrot.slane %v3400, 4
      %v3406 = vshrl.u32 %v3213, 16
      %v3408 = vrot.slane %v3406, 7
      %v3409 = vshll.u32 %v3213, 16
      %v3411 = vor.u32 %v3408, %v3409
      %v3412 = vsel %vm3226, %v3404, %v3411
      %v3413 = vrot.slane %v3408, 4
      %v3415 = vshrl.u32 %v3214, 16
      %v3417 = vrot.slane %v3415, 7
      %v3418 = vshll.u32 %v3214, 16
      %v3420 = vor.u32 %v3417, %v3418
      %v3421 = vrot.slane %v3417, 4
      %v3423 = vshrl.u32 %v3215, 16
      %v3425 = vrot.slane %v3423, 7
      %v3426 = vshll.u32 %v3215, 16
      %v3428 = vor.u32 %v3425, %v3426
      %v3429 = vsel %vm3226, %v3421, %v3428
      %v3430 = vrot.slane %v3425, 4
      %v3432 = vshrl.u32 %v3216, 16
      %v3434 = vrot.slane %v3432, 7
      %v3435 = vshll.u32 %v3216, 16
      %v3437 = vor.u32 %v3434, %v3435
      %v3438 = vrot.slane %v3434, 4
      %v3440 = vshrl.u32 %v3217, 16
      %v3442 = vrot.slane %v3440, 7
      %v3443 = vshll.u32 %v3217, 16
      %v3445 = vor.u32 %v3442, %v3443
      %v3446 = vsel %vm3226, %v3438, %v3445
      %v3447 = vrot.slane %v3442, 4
      %v3449 = vshrl.u32 %v3218, 16
      %v3451 = vrot.slane %v3449, 7
      %v3452 = vshll.u32 %v3218, 16
      %v3454 = vor.u32 %v3451, %v3452
      %v3455 = vrot.slane %v3451, 4
      %v3457 = vshrl.u32 %v3219, 16
      %v3459 = vrot.slane %v3457, 7
      %v3460 = vshll.u32 %v3219, 16
      %v3462 = vor.u32 %v3459, %v3460
      %v3463 = vsel %vm3226, %v3455, %v3462
      %v3464 = vrot.slane %v3459, 4
      %v3466 = vshrl.u32 %v3220, 16
      %v3468 = vrot.slane %v3466, 7
      %v3469 = vshll.u32 %v3220, 16
      %v3471 = vor.u32 %v3468, %v3469
      %v3472 = vrot.slane %v3468, 4
      %v3474 = vshrl.u32 %v3221, 16
      %v3476 = vrot.slane %v3474, 7
      %v3477 = vshll.u32 %v3221, 16
      %v3479 = vor.u32 %v3476, %v3477
      %v3480 = vsel %vm3226, %v3472, %v3479
      %v3481 = vrot.slane %v3476, 4
      %v3483 = vshrl.u32 %v3222, 16
      %v3485 = vrot.slane %v3483, 7
      %v3486 = vshll.u32 %v3222, 16
      %v3488 = vor.u32 %v3485, %v3486
      %v3489 = vrot.slane %v3485, 4
      %v3491 = vshrl.u32 %v3223, 16
      %v3493 = vrot.slane %v3491, 7
      %v3494 = vshll.u32 %v3223, 16
      %v3496 = vor.u32 %v3493, %v3494
      %v3497 = vsel %vm3226, %v3489, %v3496
      %v3498 = vrot.slane %v3493, 4
      %s3547 = scalar_lea.vmem [#allocation2], 12
      %vm3548 = vcmask 60416
      %vm3549 = vsmask.f32 7938
      %vm3550 = vmand %vm3548, %vm3549
      %v3551 = vld [vmem:[%s3547] sm:$0xf]
      %v3552 = vsel %vm3550, %v3233, %v3551
      %3553 = vst [vmem:[%s3547] sm:$0xf] %v3552
      %vm3554 = vcmask 60416
      %3555 = vst.msk [vmem:[%s3547 + $0x4] sm:$0xf] %vm3554, %v3242
      %vm3556 = vcmask 57344
      %vm3557 = vmand %vm3556, %vm3224
      %v3558 = vld [vmem:[%s3547 + $0x8] sm:$0x1]
      %v3559 = vsel %vm3557, %v3243, %v3558
      %3560 = vst [vmem:[%s3547 + $0x8] sm:$0x1] %v3559
      %v3561 = vld [vmem:[%s3547 + $0xc] sm:$0xf]
      %v3562 = vsel %vm3550, %v3250, %v3561
      %3563 = vst [vmem:[%s3547 + $0xc] sm:$0xf] %v3562
      %3564 = vst.msk [vmem:[%s3547 + $0x10] sm:$0xf] %vm3554, %v3259
      %v3565 = vld [vmem:[%s3547 + $0x14] sm:$0x1]
      %v3566 = vsel %vm3557, %v3260, %v3565
      %3567 = vst [vmem:[%s3547 + $0x14] sm:$0x1] %v3566
      %v3568 = vld [vmem:[%s3547 + $0x18] sm:$0xf]
      %v3569 = vsel %vm3550, %v3267, %v3568
      %3570 = vst [vmem:[%s3547 + $0x18] sm:$0xf] %v3569
      %3571 = vst.msk [vmem:[%s3547 + $0x1c] sm:$0xf] %vm3554, %v3276
      %v3572 = vld [vmem:[%s3547 + $0x20] sm:$0x1]
      %v3573 = vsel %vm3557, %v3277, %v3572
      %3574 = vst [vmem:[%s3547 + $0x20] sm:$0x1] %v3573
      %v3575 = vld [vmem:[%s3547 + $0x24] sm:$0xf]
      %v3576 = vsel %vm3550, %v3284, %v3575
      %3577 = vst [vmem:[%s3547 + $0x24] sm:$0xf] %v3576
      %3578 = vst.msk [vmem:[%s3547 + $0x28] sm:$0xf] %vm3554, %v3293
      %v3579 = vld [vmem:[%s3547 + $0x2c] sm:$0x1]
      %v3580 = vsel %vm3557, %v3294, %v3579
      %3581 = vst [vmem:[%s3547 + $0x2c] sm:$0x1] %v3580
      %v3582 = vld [vmem:[%s3547 + $0x30] sm:$0xf]
      %v3583 = vsel %vm3550, %v3301, %v3582
      %3584 = vst [vmem:[%s3547 + $0x30] sm:$0xf] %v3583
      %3585 = vst.msk [vmem:[%s3547 + $0x34] sm:$0xf] %vm3554, %v3310
      %v3586 = vld [vmem:[%s3547 + $0x38] sm:$0x1]
      %v3587 = vsel %vm3557, %v3311, %v3586
      %3588 = vst [vmem:[%s3547 + $0x38] sm:$0x1] %v3587
      %v3589 = vld [vmem:[%s3547 + $0x3c] sm:$0xf]
      %v3590 = vsel %vm3550, %v3318, %v3589
      %3591 = vst [vmem:[%s3547 + $0x3c] sm:$0xf] %v3590
      %3592 = vst.msk [vmem:[%s3547 + $0x40] sm:$0xf] %vm3554, %v3327
      %v3593 = vld [vmem:[%s3547 + $0x44] sm:$0x1]
      %v3594 = vsel %vm3557, %v3328, %v3593
      %3595 = vst [vmem:[%s3547 + $0x44] sm:$0x1] %v3594
      %v3596 = vld [vmem:[%s3547 + $0x48] sm:$0xf]
      %v3597 = vsel %vm3550, %v3335, %v3596
      %3598 = vst [vmem:[%s3547 + $0x48] sm:$0xf] %v3597
      %3599 = vst.msk [vmem:[%s3547 + $0x4c] sm:$0xf] %vm3554, %v3344
      %v3600 = vld [vmem:[%s3547 + $0x50] sm:$0x1]
      %v3601 = vsel %vm3557, %v3345, %v3600
      %3602 = vst [vmem:[%s3547 + $0x50] sm:$0x1] %v3601
      %v3603 = vld [vmem:[%s3547 + $0x54] sm:$0xf]
      %v3604 = vsel %vm3550, %v3352, %v3603
      %3605 = vst [vmem:[%s3547 + $0x54] sm:$0xf] %v3604
      %3606 = vst.msk [vmem:[%s3547 + $0x58] sm:$0xf] %vm3554, %v3361
      %v3607 = vld [vmem:[%s3547 + $0x5c] sm:$0x1]
      %v3608 = vsel %vm3557, %v3362, %v3607
      %3609 = vst [vmem:[%s3547 + $0x5c] sm:$0x1] %v3608
      %v3610 = vld [vmem:[%s3547 + $0x60] sm:$0xf]
      %v3611 = vsel %vm3550, %v3369, %v3610
      %3612 = vst [vmem:[%s3547 + $0x60] sm:$0xf] %v3611
      %3613 = vst.msk [vmem:[%s3547 + $0x64] sm:$0xf] %vm3554, %v3378
      %v3614 = vld [vmem:[%s3547 + $0x68] sm:$0x1]
      %v3615 = vsel %vm3557, %v3379, %v3614
      %3616 = vst [vmem:[%s3547 + $0x68] sm:$0x1] %v3615
      %v3617 = vld [vmem:[%s3547 + $0x6c] sm:$0xf]
      %v3618 = vsel %vm3550, %v3386, %v3617
      %3619 = vst [vmem:[%s3547 + $0x6c] sm:$0xf] %v3618
      %3620 = vst.msk [vmem:[%s3547 + $0x70] sm:$0xf] %vm3554, %v3395
      %v3621 = vld [vmem:[%s3547 + $0x74] sm:$0x1]
      %v3622 = vsel %vm3557, %v3396, %v3621
      %3623 = vst [vmem:[%s3547 + $0x74] sm:$0x1] %v3622
      %v3624 = vld [vmem:[%s3547 + $0x78] sm:$0xf]
      %v3625 = vsel %vm3550, %v3403, %v3624
      %3626 = vst [vmem:[%s3547 + $0x78] sm:$0xf] %v3625
      %3627 = vst.msk [vmem:[%s3547 + $0x7c] sm:$0xf] %vm3554, %v3412
      %v3628 = vld [vmem:[%s3547 + $0x80] sm:$0x1]
      %v3629 = vsel %vm3557, %v3413, %v3628
      %3630 = vst [vmem:[%s3547 + $0x80] sm:$0x1] %v3629
      %v3631 = vld [vmem:[%s3547 + $0x84] sm:$0xf]
      %v3632 = vsel %vm3550, %v3420, %v3631
      %3633 = vst [vmem:[%s3547 + $0x84] sm:$0xf] %v3632
      %3634 = vst.msk [vmem:[%s3547 + $0x88] sm:$0xf] %vm3554, %v3429
      %v3635 = vld [vmem:[%s3547 + $0x8c] sm:$0x1]
      %v3636 = vsel %vm3557, %v3430, %v3635
      %3637 = vst [vmem:[%s3547 + $0x8c] sm:$0x1] %v3636
      %v3638 = vld [vmem:[%s3547 + $0x90] sm:$0xf]
      %v3639 = vsel %vm3550, %v3437, %v3638
      %3640 = vst [vmem:[%s3547 + $0x90] sm:$0xf] %v3639
      %3641 = vst.msk [vmem:[%s3547 + $0x94] sm:$0xf] %vm3554, %v3446
      %v3642 = vld [vmem:[%s3547 + $0x98] sm:$0x1]
      %v3643 = vsel %vm3557, %v3447, %v3642
      %3644 = vst [vmem:[%s3547 + $0x98] sm:$0x1] %v3643
      %v3645 = vld [vmem:[%s3547 + $0x9c] sm:$0xf]
      %v3646 = vsel %vm3550, %v3454, %v3645
      %3647 = vst [vmem:[%s3547 + $0x9c] sm:$0xf] %v3646
      %3648 = vst.msk [vmem:[%s3547 + $0xa0] sm:$0xf] %vm3554, %v3463
      %v3649 = vld [vmem:[%s3547 + $0xa4] sm:$0x1]
      %v3650 = vsel %vm3557, %v3464, %v3649
      %3651 = vst [vmem:[%s3547 + $0xa4] sm:$0x1] %v3650
      %v3652 = vld [vmem:[%s3547 + $0xa8] sm:$0xf]
      %v3653 = vsel %vm3550, %v3471, %v3652
      %3654 = vst [vmem:[%s3547 + $0xa8] sm:$0xf] %v3653
      %3655 = vst.msk [vmem:[%s3547 + $0xac] sm:$0xf] %vm3554, %v3480
      %v3656 = vld [vmem:[%s3547 + $0xb0] sm:$0x1]
      %v3657 = vsel %vm3557, %v3481, %v3656
      %3658 = vst [vmem:[%s3547 + $0xb0] sm:$0x1] %v3657
      %v3659 = vld [vmem:[%s3547 + $0xb4] sm:$0xf]
      %v3660 = vsel %vm3550, %v3488, %v3659
      %3661 = vst [vmem:[%s3547 + $0xb4] sm:$0xf] %v3660
      %3662 = vst.msk [vmem:[%s3547 + $0xb8] sm:$0xf] %vm3554, %v3497
      %v3663 = vld [vmem:[%s3547 + $0xbc] sm:$0x1]
      %v3664 = vsel %vm3557, %v3498, %v3663
      %3665 = vst [vmem:[%s3547 + $0xbc] sm:$0x1] %v3664
      %v3666 = vld [vmem:[#allocation2] sm:$0xf]
      %v3667 = vld [vmem:[#allocation2 + $0x4] sm:$0xf]
      %v3668 = vld [vmem:[#allocation2 + $0x8] sm:$0x1]
      %v3669 = vld [vmem:[#allocation2 + $0xc] sm:$0xf]
      %v3670 = vld [vmem:[#allocation2 + $0x10] sm:$0xf]
      %v3671 = vld [vmem:[#allocation2 + $0x14] sm:$0x1]
      %v3672 = vld [vmem:[#allocation2 + $0x18] sm:$0xf]
      %v3673 = vld [vmem:[#allocation2 + $0x1c] sm:$0xf]
      %v3674 = vld [vmem:[#allocation2 + $0x20] sm:$0x1]
      %v3675 = vld [vmem:[#allocation2 + $0x24] sm:$0xf]
      %v3676 = vld [vmem:[#allocation2 + $0x28] sm:$0xf]
      %v3677 = vld [vmem:[#allocation2 + $0x2c] sm:$0x1]
      %v3678 = vld [vmem:[#allocation2 + $0x30] sm:$0xf]
      %v3679 = vld [vmem:[#allocation2 + $0x34] sm:$0xf]
      %v3680 = vld [vmem:[#allocation2 + $0x38] sm:$0x1]
      %v3681 = vld [vmem:[#allocation2 + $0x3c] sm:$0xf]
      %v3682 = vld [vmem:[#allocation2 + $0x40] sm:$0xf]
      %v3683 = vld [vmem:[#allocation2 + $0x44] sm:$0x1]
      %v3684 = vld [vmem:[#allocation2 + $0x48] sm:$0xf]
      %v3685 = vld [vmem:[#allocation2 + $0x4c] sm:$0xf]
      %v3686 = vld [vmem:[#allocation2 + $0x50] sm:$0x1]
      %v3687 = vld [vmem:[#allocation2 + $0x54] sm:$0xf]
      %v3688 = vld [vmem:[#allocation2 + $0x58] sm:$0xf]
      %v3689 = vld [vmem:[#allocation2 + $0x5c] sm:$0x1]
      %v3690 = vld [vmem:[#allocation2 + $0x60] sm:$0xf]
      %v3691 = vld [vmem:[#allocation2 + $0x64] sm:$0xf]
      %v3692 = vld [vmem:[#allocation2 + $0x68] sm:$0x1]
      %v3693 = vld [vmem:[#allocation2 + $0x6c] sm:$0xf]
      %v3694 = vld [vmem:[#allocation2 + $0x70] sm:$0xf]
      %v3695 = vld [vmem:[#allocation2 + $0x74] sm:$0x1]
      %v3696 = vld [vmem:[#allocation2 + $0x78] sm:$0xf]
      %v3697 = vld [vmem:[#allocation2 + $0x7c] sm:$0xf]
      %v3698 = vld [vmem:[#allocation2 + $0x80] sm:$0x1]
      %v3699 = vld [vmem:[#allocation2 + $0x84] sm:$0xf]
      %v3700 = vld [vmem:[#allocation2 + $0x88] sm:$0xf]
      %v3701 = vld [vmem:[#allocation2 + $0x8c] sm:$0x1]
      %v3702 = vld [vmem:[#allocation2 + $0x90] sm:$0xf]
      %v3703 = vld [vmem:[#allocation2 + $0x94] sm:$0xf]
      %v3704 = vld [vmem:[#allocation2 + $0x98] sm:$0x1]
      %v3705 = vld [vmem:[#allocation2 + $0x9c] sm:$0xf]
      %v3706 = vld [vmem:[#allocation2 + $0xa0] sm:$0xf]
      %v3707 = vld [vmem:[#allocation2 + $0xa4] sm:$0x1]
      %v3708 = vld [vmem:[#allocation2 + $0xa8] sm:$0xf]
      %v3709 = vld [vmem:[#allocation2 + $0xac] sm:$0xf]
      %v3710 = vld [vmem:[#allocation2 + $0xb0] sm:$0x1]
      %v3711 = vld [vmem:[#allocation2 + $0xb4] sm:$0xf]
      %v3712 = vld [vmem:[#allocation2 + $0xb8] sm:$0xf]
      %v3713 = vld [vmem:[#allocation2 + $0xbc] sm:$0x1]
      %v3714 = vld [vmem:[#allocation2 + $0xc0] sm:$0xf]
      %v3715 = vld [vmem:[#allocation2 + $0xc4] sm:$0xf]
      %v3716 = vld [vmem:[#allocation2 + $0xc8] sm:$0x1]
      %v3717 = vld [vmem:[#allocation2 + $0xcc] sm:$0xf]
      %v3718 = vld [vmem:[#allocation2 + $0xd0] sm:$0xf]
      %v3719 = vld [vmem:[#allocation2 + $0xd4] sm:$0x1]
      %v3720 = vld [vmem:[%s3] sm:$0xf]
      %v3721 = vld [vmem:[%s3 + $0x4] sm:$0xf]
      %v3722 = vld [vmem:[%s3 + $0x8] sm:$0xf]
      %v3723 = vld [vmem:[%s3 + $0xc] sm:$0xf]
      %v3724 = vld [vmem:[%s3 + $0x10] sm:$0xf]
      %v3725 = vld [vmem:[%s3 + $0x14] sm:$0xf]
      %v3726 = vld [vmem:[%s3 + $0x18] sm:$0xf]
      %v3727 = vld [vmem:[%s3 + $0x1c] sm:$0xf]
      %v3728 = vld [vmem:[%s3 + $0x20] sm:$0xf]
      %v3729 = vld [vmem:[%s4] sm:$0x1]
      %v3731 = vshrl.u32 %v3666, 16
      %v3733 = vrot.slane %v3731, 4
      %v3734 = vshll.u32 %v3666, 16
      %v3736 = vrot.slane %v3734, 5
      %v3737 = vor.u32 %v3733, %v3736
      %v3738 = vrot.slane %v3737, 4
      %v3740 = vshll.u32 %v3667, 16
      %v3742 = vrot.slane %v3740, 5
      %v3743 = vsel %vm352, %v3738, %v3742
      %v3744 = vshrl.u32 %v3667, 16
      %v3746 = vrot.slane %v3744, 4
      %v3747 = vor.u32 %v3746, %v3742
      %v3748 = vrot.slane %v3747, 4
      %v3750 = vshll.u32 %v3668, 16
      %v3752 = vrot.slane %v3750, 5
      %v3753 = vsel %vm352, %v3748, %v3752
      %v3755 = vshrl.u32 %v3669, 16
      %v3757 = vrot.slane %v3755, 4
      %v3758 = vshll.u32 %v3669, 16
      %v3760 = vrot.slane %v3758, 5
      %v3761 = vor.u32 %v3757, %v3760
      %v3762 = vrot.slane %v3761, 4
      %v3764 = vshll.u32 %v3670, 16
      %v3766 = vrot.slane %v3764, 5
      %v3767 = vsel %vm352, %v3762, %v3766
      %v3768 = vshrl.u32 %v3670, 16
      %v3770 = vrot.slane %v3768, 4
      %v3771 = vor.u32 %v3770, %v3766
      %v3772 = vrot.slane %v3771, 4
      %v3774 = vshll.u32 %v3671, 16
      %v3776 = vrot.slane %v3774, 5
      %v3777 = vsel %vm352, %v3772, %v3776
      %v3779 = vshrl.u32 %v3672, 16
      %v3781 = vrot.slane %v3779, 4
      %v3782 = vshll.u32 %v3672, 16
      %v3784 = vrot.slane %v3782, 5
      %v3785 = vor.u32 %v3781, %v3784
      %v3786 = vrot.slane %v3785, 4
      %v3788 = vshll.u32 %v3673, 16
      %v3790 = vrot.slane %v3788, 5
      %v3791 = vsel %vm352, %v3786, %v3790
      %v3792 = vshrl.u32 %v3673, 16
      %v3794 = vrot.slane %v3792, 4
      %v3795 = vor.u32 %v3794, %v3790
      %v3796 = vrot.slane %v3795, 4
      %v3798 = vshll.u32 %v3674, 16
      %v3800 = vrot.slane %v3798, 5
      %v3801 = vsel %vm352, %v3796, %v3800
      %v3803 = vshrl.u32 %v3675, 16
      %v3805 = vrot.slane %v3803, 4
      %v3806 = vshll.u32 %v3675, 16
      %v3808 = vrot.slane %v3806, 5
      %v3809 = vor.u32 %v3805, %v3808
      %v3810 = vrot.slane %v3809, 4
      %v3812 = vshll.u32 %v3676, 16
      %v3814 = vrot.slane %v3812, 5
      %v3815 = vsel %vm352, %v3810, %v3814
      %v3816 = vshrl.u32 %v3676, 16
      %v3818 = vrot.slane %v3816, 4
      %v3819 = vor.u32 %v3818, %v3814
      %v3820 = vrot.slane %v3819, 4
      %v3822 = vshll.u32 %v3677, 16
      %v3824 = vrot.slane %v3822, 5
      %v3825 = vsel %vm352, %v3820, %v3824
      %v3827 = vshrl.u32 %v3678, 16
      %v3829 = vrot.slane %v3827, 4
      %v3830 = vshll.u32 %v3678, 16
      %v3832 = vrot.slane %v3830, 5
      %v3833 = vor.u32 %v3829, %v3832
      %v3834 = vrot.slane %v3833, 4
      %v3836 = vshll.u32 %v3679, 16
      %v3838 = vrot.slane %v3836, 5
      %v3839 = vsel %vm352, %v3834, %v3838
      %v3840 = vshrl.u32 %v3679, 16
      %v3842 = vrot.slane %v3840, 4
      %v3843 = vor.u32 %v3842, %v3838
      %v3844 = vrot.slane %v3843, 4
      %v3846 = vshll.u32 %v3680, 16
      %v3848 = vrot.slane %v3846, 5
      %v3849 = vsel %vm352, %v3844, %v3848
      %v3851 = vshrl.u32 %v3681, 16
      %v3853 = vrot.slane %v3851, 4
      %v3854 = vshll.u32 %v3681, 16
      %v3856 = vrot.slane %v3854, 5
      %v3857 = vor.u32 %v3853, %v3856
      %v3858 = vrot.slane %v3857, 4
      %v3860 = vshll.u32 %v3682, 16
      %v3862 = vrot.slane %v3860, 5
      %v3863 = vsel %vm352, %v3858, %v3862
      %v3864 = vshrl.u32 %v3682, 16
      %v3866 = vrot.slane %v3864, 4
      %v3867 = vor.u32 %v3866, %v3862
      %v3868 = vrot.slane %v3867, 4
      %v3870 = vshll.u32 %v3683, 16
      %v3872 = vrot.slane %v3870, 5
      %v3873 = vsel %vm352, %v3868, %v3872
      %v3875 = vshrl.u32 %v3684, 16
      %v3877 = vrot.slane %v3875, 4
      %v3878 = vshll.u32 %v3684, 16
      %v3880 = vrot.slane %v3878, 5
      %v3881 = vor.u32 %v3877, %v3880
      %v3882 = vrot.slane %v3881, 4
      %v3884 = vshll.u32 %v3685, 16
      %v3886 = vrot.slane %v3884, 5
      %v3887 = vsel %vm352, %v3882, %v3886
      %v3888 = vshrl.u32 %v3685, 16
      %v3890 = vrot.slane %v3888, 4
      %v3891 = vor.u32 %v3890, %v3886
      %v3892 = vrot.slane %v3891, 4
      %v3894 = vshll.u32 %v3686, 16
      %v3896 = vrot.slane %v3894, 5
      %v3897 = vsel %vm352, %v3892, %v3896
      %v3899 = vshrl.u32 %v3687, 16
      %v3901 = vrot.slane %v3899, 4
      %v3902 = vshll.u32 %v3687, 16
      %v3904 = vrot.slane %v3902, 5
      %v3905 = vor.u32 %v3901, %v3904
      %v3906 = vrot.slane %v3905, 4
      %v3908 = vshll.u32 %v3688, 16
      %v3910 = vrot.slane %v3908, 5
      %v3911 = vsel %vm352, %v3906, %v3910
      %v3912 = vshrl.u32 %v3688, 16
      %v3914 = vrot.slane %v3912, 4
      %v3915 = vor.u32 %v3914, %v3910
      %v3916 = vrot.slane %v3915, 4
      %v3918 = vshll.u32 %v3689, 16
      %v3920 = vrot.slane %v3918, 5
      %v3921 = vsel %vm352, %v3916, %v3920
      %v3923 = vshrl.u32 %v3690, 16
      %v3925 = vrot.slane %v3923, 4
      %v3926 = vshll.u32 %v3690, 16
      %v3928 = vrot.slane %v3926, 5
      %v3929 = vor.u32 %v3925, %v3928
      %v3930 = vrot.slane %v3929, 4
      %v3932 = vshll.u32 %v3691, 16
      %v3934 = vrot.slane %v3932, 5
      %v3935 = vsel %vm352, %v3930, %v3934
      %v3936 = vshrl.u32 %v3691, 16
      %v3938 = vrot.slane %v3936, 4
      %v3939 = vor.u32 %v3938, %v3934
      %v3940 = vrot.slane %v3939, 4
      %v3942 = vshll.u32 %v3692, 16
      %v3944 = vrot.slane %v3942, 5
      %v3945 = vsel %vm352, %v3940, %v3944
      %v3947 = vshrl.u32 %v3693, 16
      %v3949 = vrot.slane %v3947, 4
      %v3950 = vshll.u32 %v3693, 16
      %v3952 = vrot.slane %v3950, 5
      %v3953 = vor.u32 %v3949, %v3952
      %v3954 = vrot.slane %v3953, 4
      %v3956 = vshll.u32 %v3694, 16
      %v3958 = vrot.slane %v3956, 5
      %v3959 = vsel %vm352, %v3954, %v3958
      %v3960 = vshrl.u32 %v3694, 16
      %v3962 = vrot.slane %v3960, 4
      %v3963 = vor.u32 %v3962, %v3958
      %v3964 = vrot.slane %v3963, 4
      %v3966 = vshll.u32 %v3695, 16
      %v3968 = vrot.slane %v3966, 5
      %v3969 = vsel %vm352, %v3964, %v3968
      %v3971 = vshrl.u32 %v3696, 16
      %v3973 = vrot.slane %v3971, 4
      %v3974 = vshll.u32 %v3696, 16
      %v3976 = vrot.slane %v3974, 5
      %v3977 = vor.u32 %v3973, %v3976
      %v3978 = vrot.slane %v3977, 4
      %v3980 = vshll.u32 %v3697, 16
      %v3982 = vrot.slane %v3980, 5
      %v3983 = vsel %vm352, %v3978, %v3982
      %v3984 = vshrl.u32 %v3697, 16
      %v3986 = vrot.slane %v3984, 4
      %v3987 = vor.u32 %v3986, %v3982
      %v3988 = vrot.slane %v3987, 4
      %v3990 = vshll.u32 %v3698, 16
      %v3992 = vrot.slane %v3990, 5
      %v3993 = vsel %vm352, %v3988, %v3992
      %v3995 = vshrl.u32 %v3699, 16
      %v3997 = vrot.slane %v3995, 4
      %v3998 = vshll.u32 %v3699, 16
      %v4000 = vrot.slane %v3998, 5
      %v4001 = vor.u32 %v3997, %v4000
      %v4002 = vrot.slane %v4001, 4
      %v4004 = vshll.u32 %v3700, 16
      %v4006 = vrot.slane %v4004, 5
      %v4007 = vsel %vm352, %v4002, %v4006
      %v4008 = vshrl.u32 %v3700, 16
      %v4010 = vrot.slane %v4008, 4
      %v4011 = vor.u32 %v4010, %v4006
      %v4012 = vrot.slane %v4011, 4
      %v4014 = vshll.u32 %v3701, 16
      %v4016 = vrot.slane %v4014, 5
      %v4017 = vsel %vm352, %v4012, %v4016
      %v4019 = vshrl.u32 %v3702, 16
      %v4021 = vrot.slane %v4019, 4
      %v4022 = vshll.u32 %v3702, 16
      %v4024 = vrot.slane %v4022, 5
      %v4025 = vor.u32 %v4021, %v4024
      %v4026 = vrot.slane %v4025, 4
      %v4028 = vshll.u32 %v3703, 16
      %v4030 = vrot.slane %v4028, 5
      %v4031 = vsel %vm352, %v4026, %v4030
      %v4032 = vshrl.u32 %v3703, 16
      %v4034 = vrot.slane %v4032, 4
      %v4035 = vor.u32 %v4034, %v4030
      %v4036 = vrot.slane %v4035, 4
      %v4038 = vshll.u32 %v3704, 16
      %v4040 = vrot.slane %v4038, 5
      %v4041 = vsel %vm352, %v4036, %v4040
      %v4043 = vshrl.u32 %v3705, 16
      %v4045 = vrot.slane %v4043, 4
      %v4046 = vshll.u32 %v3705, 16
      %v4048 = vrot.slane %v4046, 5
      %v4049 = vor.u32 %v4045, %v4048
      %v4050 = vrot.slane %v4049, 4
      %v4052 = vshll.u32 %v3706, 16
      %v4054 = vrot.slane %v4052, 5
      %v4055 = vsel %vm352, %v4050, %v4054
      %v4056 = vshrl.u32 %v3706, 16
      %v4058 = vrot.slane %v4056, 4
      %v4059 = vor.u32 %v4058, %v4054
      %v4060 = vrot.slane %v4059, 4
      %v4062 = vshll.u32 %v3707, 16
      %v4064 = vrot.slane %v4062, 5
      %v4065 = vsel %vm352, %v4060, %v4064
      %v4067 = vshrl.u32 %v3708, 16
      %v4069 = vrot.slane %v4067, 4
      %v4070 = vshll.u32 %v3708, 16
      %v4072 = vrot.slane %v4070, 5
      %v4073 = vor.u32 %v4069, %v4072
      %v4074 = vrot.slane %v4073, 4
      %v4076 = vshll.u32 %v3709, 16
      %v4078 = vrot.slane %v4076, 5
      %v4079 = vsel %vm352, %v4074, %v4078
      %v4080 = vshrl.u32 %v3709, 16
      %v4082 = vrot.slane %v4080, 4
      %v4083 = vor.u32 %v4082, %v4078
      %v4084 = vrot.slane %v4083, 4
      %v4086 = vshll.u32 %v3710, 16
      %v4088 = vrot.slane %v4086, 5
      %v4089 = vsel %vm352, %v4084, %v4088
      %v4091 = vshrl.u32 %v3711, 16
      %v4093 = vrot.slane %v4091, 4
      %v4094 = vshll.u32 %v3711, 16
      %v4096 = vrot.slane %v4094, 5
      %v4097 = vor.u32 %v4093, %v4096
      %v4098 = vrot.slane %v4097, 4
      %v4100 = vshll.u32 %v3712, 16
      %v4102 = vrot.slane %v4100, 5
      %v4103 = vsel %vm352, %v4098, %v4102
      %v4104 = vshrl.u32 %v3712, 16
      %v4106 = vrot.slane %v4104, 4
      %v4107 = vor.u32 %v4106, %v4102
      %v4108 = vrot.slane %v4107, 4
      %v4110 = vshll.u32 %v3713, 16
      %v4112 = vrot.slane %v4110, 5
      %v4113 = vsel %vm352, %v4108, %v4112
      %v4114 = vunpack.c.l.b16 %v3743
      %v4115 = vunpack.c.l.b16 %v3753
      %v4116 = vunpack.c.l.b16 %v3767
      %v4117 = vunpack.c.l.b16 %v3777
      %v4118 = vunpack.c.l.b16 %v3791
      %v4119 = vunpack.c.l.b16 %v3801
      %v4120 = vunpack.c.l.b16 %v3815
      %v4121 = vunpack.c.l.b16 %v3825
      %v4122 = vunpack.c.l.b16 %v3839
      %v4123 = vunpack.c.l.b16 %v3849
      %v4124 = vunpack.c.l.b16 %v3863
      %v4125 = vunpack.c.l.b16 %v3873
      %v4126 = vunpack.c.l.b16 %v3887
      %v4127 = vunpack.c.l.b16 %v3897
      %v4128 = vunpack.c.l.b16 %v3911
      %v4129 = vunpack.c.l.b16 %v3921
      %v4130 = vunpack.c.l.b16 %v3935
      %v4131 = vunpack.c.l.b16 %v3945
      %v4132 = vunpack.c.l.b16 %v3959
      %v4133 = vunpack.c.l.b16 %v3969
      %v4134 = vunpack.c.l.b16 %v3983
      %v4135 = vunpack.c.l.b16 %v3993
      %v4136 = vunpack.c.l.b16 %v4007
      %v4137 = vunpack.c.l.b16 %v4017
      %v4138 = vunpack.c.l.b16 %v4031
      %v4139 = vunpack.c.l.b16 %v4041
      %v4140 = vunpack.c.l.b16 %v4055
      %v4141 = vunpack.c.l.b16 %v4065
      %v4142 = vunpack.c.l.b16 %v4079
      %v4143 = vunpack.c.l.b16 %v4089
      %v4144 = vunpack.c.l.b16 %v4103
      %v4145 = vunpack.c.l.b16 %v4113
      %v4146 = vpack.c.b16 %v4115, %v4114
      %v4147 = vpack.c.b16 %v4117, %v4116
      %v4148 = vpack.c.b16 %v4119, %v4118
      %v4149 = vpack.c.b16 %v4121, %v4120
      %v4150 = vpack.c.b16 %v4123, %v4122
      %v4151 = vpack.c.b16 %v4125, %v4124
      %v4152 = vpack.c.b16 %v4127, %v4126
      %v4153 = vpack.c.b16 %v4129, %v4128
      %v4154 = vpack.c.b16 %v4131, %v4130
      %v4155 = vpack.c.b16 %v4133, %v4132
      %v4156 = vpack.c.b16 %v4135, %v4134
      %v4157 = vpack.c.b16 %v4137, %v4136
      %v4158 = vpack.c.b16 %v4139, %v4138
      %v4159 = vpack.c.b16 %v4141, %v4140
      %v4160 = vpack.c.b16 %v4143, %v4142
      %v4161 = vpack.c.b16 %v4145, %v4144
      %vm4162 = vcmask 64512
      %v4164 = vsel %vm4162, %v4146, 0
      %v4167 = vsel %vm4162, %v4147, 0
      %v4170 = vsel %vm4162, %v4148, 0
      %v4173 = vsel %vm4162, %v4149, 0
      %v4176 = vsel %vm4162, %v4150, 0
      %v4179 = vsel %vm4162, %v4151, 0
      %v4182 = vsel %vm4162, %v4152, 0
      %v4185 = vsel %vm4162, %v4153, 0
      %v4188 = vsel %vm4162, %v4154, 0
      %v4191 = vsel %vm4162, %v4155, 0
      %v4194 = vsel %vm4162, %v4156, 0
      %v4197 = vsel %vm4162, %v4157, 0
      %v4200 = vsel %vm4162, %v4158, 0
      %v4203 = vsel %vm4162, %v4159, 0
      %v4206 = vsel %vm4162, %v4160, 0
      %v4209 = vsel %vm4162, %v4161, 0
      %vm4211 = vcmask 1043456
      %v4213 = vsel %vm4211, %v3721, 0
      %4215 = vmatprep.subr.bf16.mxu0 0
      %4216 = vmatpush1.bf16.msra.mxu0 %v4213
      %4217 = vmatprep.subr.bf16.mxu0 0
      %4218 = vmatpush1.bf16.msra.mxu0 0
      %4219 = vmatprep.subr.bf16.mxu0 0
      %4220 = vmatpush1.bf16.msra.mxu0 0
      %4221 = vmatprep.subr.bf16.mxu0 0
      %4222 = vmatpush1.bf16.msra.mxu0 0
      %4223 = vmatprep.subr.bf16.mxu0 0
      %4224 = vmatpush1.bf16.msra.mxu0 0
      %4225 = vmatprep.subr.bf16.mxu0 0
      %4226 = vmatpush1.bf16.msra.mxu0 0
      %4227 = vmatprep.subr.bf16.mxu0 0
      %4228 = vmatpush1.bf16.msra.mxu0 0
      %4229 = vmatprep.subr.bf16.mxu0 0
      %4230 = vmatpush1.bf16.msra.mxu0 0
      %4231 = vmatprep.subr.bf16.mxu0 0
      %4232 = vmatpush1.bf16.msra.mxu0 0
      %4233 = vmatprep.subr.bf16.mxu0 0
      %4234 = vmatpush1.bf16.msra.mxu0 0
      %4235 = vmatprep.subr.bf16.mxu0 0
      %4236 = vmatpush1.bf16.msra.mxu0 0
      %4237 = vmatprep.subr.bf16.mxu0 0
      %4238 = vmatpush1.bf16.msra.mxu0 0
      %4239 = vmatprep.subr.bf16.mxu0 0
      %4240 = vmatpush1.bf16.msra.mxu0 0
      %4241 = vmatprep.subr.bf16.mxu0 0
      %4242 = vmatpush1.bf16.msra.mxu0 0
      %4243 = vmatprep.subr.bf16.mxu0 0
      %4244 = vmatpush1.bf16.msra.mxu0 0
      %4245 = vmatprep.subr.bf16.mxu0 0
      %4246 = vmatpush1.bf16.msra.mxu0 0
      %4247 = vmatprep.mubr.bf16.mxu0 0
      %4248 = vmatmul.mubr.bf16.gmra.mrb[0].mxu0 %v4164
      %v4249 = vpop.f32.mrb[0].mxu0
      %v4250 = vadd.f32 0.0, %v4249
      %v4251 = vpop.f32.mrb[0].mxu0
      %v4252 = vpop.f32.mrb[0].mxu0
      %v4253 = vadd.f32 0.0, %v4252
      %v4254 = vpop.f32.mrb[0].mxu0
      %4255 = vmatprep.mubr.bf16.mxu0 0
      %4256 = vmatmul.mubr.bf16.gmra.mrb[0].mxu0 %v4167
      %v4257 = vpop.f32.mrb[0].mxu0
      %v4258 = vadd.f32 0.0, %v4257
      %v4259 = vpop.f32.mrb[0].mxu0
      %v4260 = vpop.f32.mrb[0].mxu0
      %v4261 = vadd.f32 0.0, %v4260
      %v4262 = vpop.f32.mrb[0].mxu0
      %4263 = vmatprep.mubr.bf16.mxu0 0
      %4264 = vmatmul.mubr.bf16.gmra.mrb[0].mxu0 %v4170
      %v4265 = vpop.f32.mrb[0].mxu0
      %v4266 = vadd.f32 0.0, %v4265
      %v4267 = vpop.f32.mrb[0].mxu0
      %v4268 = vpop.f32.mrb[0].mxu0
      %v4269 = vadd.f32 0.0, %v4268
      %v4270 = vpop.f32.mrb[0].mxu0
      %4271 = vmatprep.mubr.bf16.mxu0 0
      %4272 = vmatmul.mubr.bf16.gmra.mrb[0].mxu0 %v4173
      %v4273 = vpop.f32.mrb[0].mxu0
      %v4274 = vadd.f32 0.0, %v4273
      %v4275 = vpop.f32.mrb[0].mxu0
      %v4276 = vpop.f32.mrb[0].mxu0
      %v4277 = vadd.f32 0.0, %v4276
      %v4278 = vpop.f32.mrb[0].mxu0
      %4279 = vmatprep.mubr.bf16.mxu0 0
      %4280 = vmatmul.mubr.bf16.gmra.mrb[0].mxu0 %v4176
      %v4281 = vpop.f32.mrb[0].mxu0
      %v4282 = vadd.f32 0.0, %v4281
      %v4283 = vpop.f32.mrb[0].mxu0
      %v4284 = vpop.f32.mrb[0].mxu0
      %v4285 = vadd.f32 0.0, %v4284
      %v4286 = vpop.f32.mrb[0].mxu0
      %4287 = vmatprep.mubr.bf16.mxu0 0
      %4288 = vmatmul.mubr.bf16.gmra.mrb[0].mxu0 %v4179
      %v4289 = vpop.f32.mrb[0].mxu0
      %v4290 = vadd.f32 0.0, %v4289
      %v4291 = vpop.f32.mrb[0].mxu0
      %v4292 = vpop.f32.mrb[0].mxu0
      %v4293 = vadd.f32 0.0, %v4292
      %v4294 = vpop.f32.mrb[0].mxu0
      %4295 = vmatprep.mubr.bf16.mxu0 0
      %4296 = vmatmul.mubr.bf16.gmra.mrb[0].mxu0 %v4182
      %v4297 = vpop.f32.mrb[0].mxu0
      %v4298 = vadd.f32 0.0, %v4297
      %v4299 = vpop.f32.mrb[0].mxu0
      %v4300 = vpop.f32.mrb[0].mxu0
      %v4301 = vadd.f32 0.0, %v4300
      %v4302 = vpop.f32.mrb[0].mxu0
      %4303 = vmatprep.mubr.bf16.mxu0 0
      %4304 = vmatmul.mubr.bf16.gmra.mrb[0].mxu0 %v4185
      %v4305 = vpop.f32.mrb[0].mxu0
      %v4306 = vadd.f32 0.0, %v4305
      %v4307 = vpop.f32.mrb[0].mxu0
      %v4308 = vpop.f32.mrb[0].mxu0
      %v4309 = vadd.f32 0.0, %v4308
      %v4310 = vpop.f32.mrb[0].mxu0
      %4311 = vmatprep.mubr.bf16.mxu0 0
      %4312 = vmatmul.mubr.bf16.gmra.mrb[0].mxu0 %v4188
      %v4313 = vpop.f32.mrb[0].mxu0
      %v4314 = vadd.f32 0.0, %v4313
      %v4315 = vpop.f32.mrb[0].mxu0
      %v4316 = vpop.f32.mrb[0].mxu0
      %v4317 = vadd.f32 0.0, %v4316
      %v4318 = vpop.f32.mrb[0].mxu0
      %4319 = vmatprep.mubr.bf16.mxu0 0
      %4320 = vmatmul.mubr.bf16.gmra.mrb[0].mxu0 %v4191
      %v4321 = vpop.f32.mrb[0].mxu0
      %v4322 = vadd.f32 0.0, %v4321
      %v4323 = vpop.f32.mrb[0].mxu0
      %v4324 = vpop.f32.mrb[0].mxu0
      %v4325 = vadd.f32 0.0, %v4324
      %v4326 = vpop.f32.mrb[0].mxu0
      %4327 = vmatprep.mubr.bf16.mxu0 0
      %4328 = vmatmul.mubr.bf16.gmra.mrb[0].mxu0 %v4194
      %v4329 = vpop.f32.mrb[0].mxu0
      %v4330 = vadd.f32 0.0, %v4329
      %v4331 = vpop.f32.mrb[0].mxu0
      %v4332 = vpop.f32.mrb[0].mxu0
      %v4333 = vadd.f32 0.0, %v4332
      %v4334 = vpop.f32.mrb[0].mxu0
      %4335 = vmatprep.mubr.bf16.mxu0 0
      %4336 = vmatmul.mubr.bf16.gmra.mrb[0].mxu0 %v4197
      %v4337 = vpop.f32.mrb[0].mxu0
      %v4338 = vadd.f32 0.0, %v4337
      %v4339 = vpop.f32.mrb[0].mxu0
      %v4340 = vpop.f32.mrb[0].mxu0
      %v4341 = vadd.f32 0.0, %v4340
      %v4342 = vpop.f32.mrb[0].mxu0
      %4343 = vmatprep.mubr.bf16.mxu0 0
      %4344 = vmatmul.mubr.bf16.gmra.mrb[0].mxu0 %v4200
      %v4345 = vpop.f32.mrb[0].mxu0
      %v4346 = vadd.f32 0.0, %v4345
      %v4347 = vpop.f32.mrb[0].mxu0
      %v4348 = vpop.f32.mrb[0].mxu0
      %v4349 = vadd.f32 0.0, %v4348
      %v4350 = vpop.f32.mrb[0].mxu0
      %4351 = vmatprep.mubr.bf16.mxu0 0
      %4352 = vmatmul.mubr.bf16.gmra.mrb[0].mxu0 %v4203
      %v4353 = vpop.f32.mrb[0].mxu0
      %v4354 = vadd.f32 0.0, %v4353
      %v4355 = vpop.f32.mrb[0].mxu0
      %v4356 = vpop.f32.mrb[0].mxu0
      %v4357 = vadd.f32 0.0, %v4356
      %v4358 = vpop.f32.mrb[0].mxu0
      %4359 = vmatprep.mubr.bf16.mxu0 0
      %4360 = vmatmul.mubr.bf16.gmra.mrb[0].mxu0 %v4206
      %v4361 = vpop.f32.mrb[0].mxu0
      %v4362 = vadd.f32 0.0, %v4361
      %v4363 = vpop.f32.mrb[0].mxu0
      %v4364 = vpop.f32.mrb[0].mxu0
      %v4365 = vadd.f32 0.0, %v4364
      %v4366 = vpop.f32.mrb[0].mxu0
      %4367 = vmatprep.mubr.bf16.mxu0 0
      %4368 = vmatmul.mubr.bf16.gmra.mrb[0].mxu0 %v4209
      %v4369 = vpop.f32.mrb[0].mxu0
      %v4370 = vadd.f32 0.0, %v4369
      %v4371 = vpop.f32.mrb[0].mxu0
      %v4372 = vpop.f32.mrb[0].mxu0
      %v4373 = vadd.f32 0.0, %v4372
      %v4374 = vpop.f32.mrb[0].mxu0
      %4375 = vdwg.mxu0
      %v4408 = vunpack.c.l.b16 %v3666
      %v4409 = vunpack.c.l.b16 %v3667
      %v4410 = vunpack.c.l.b16 %v3669
      %v4411 = vunpack.c.l.b16 %v3670
      %v4412 = vunpack.c.l.b16 %v3672
      %v4413 = vunpack.c.l.b16 %v3673
      %v4414 = vunpack.c.l.b16 %v3675
      %v4415 = vunpack.c.l.b16 %v3676
      %v4416 = vunpack.c.l.b16 %v3678
      %v4417 = vunpack.c.l.b16 %v3679
      %v4418 = vunpack.c.l.b16 %v3681
      %v4419 = vunpack.c.l.b16 %v3682
      %v4420 = vunpack.c.l.b16 %v3684
      %v4421 = vunpack.c.l.b16 %v3685
      %v4422 = vunpack.c.l.b16 %v3687
      %v4423 = vunpack.c.l.b16 %v3688
      %v4424 = vunpack.c.l.b16 %v3690
      %v4425 = vunpack.c.l.b16 %v3691
      %v4426 = vunpack.c.l.b16 %v3693
      %v4427 = vunpack.c.l.b16 %v3694
      %v4428 = vunpack.c.l.b16 %v3696
      %v4429 = vunpack.c.l.b16 %v3697
      %v4430 = vunpack.c.l.b16 %v3699
      %v4431 = vunpack.c.l.b16 %v3700
      %v4432 = vunpack.c.l.b16 %v3702
      %v4433 = vunpack.c.l.b16 %v3703
      %v4434 = vunpack.c.l.b16 %v3705
      %v4435 = vunpack.c.l.b16 %v3706
      %v4436 = vunpack.c.l.b16 %v3708
      %v4437 = vunpack.c.l.b16 %v3709
      %v4438 = vunpack.c.l.b16 %v3711
      %v4439 = vunpack.c.l.b16 %v3712
      %v4440 = vpack.c.b16 %v4409, %v4408
      %v4441 = vpack.c.b16 %v4411, %v4410
      %v4442 = vpack.c.b16 %v4413, %v4412
      %v4443 = vpack.c.b16 %v4415, %v4414
      %v4444 = vpack.c.b16 %v4417, %v4416
      %v4445 = vpack.c.b16 %v4419, %v4418
      %v4446 = vpack.c.b16 %v4421, %v4420
      %v4447 = vpack.c.b16 %v4423, %v4422
      %v4448 = vpack.c.b16 %v4425, %v4424
      %v4449 = vpack.c.b16 %v4427, %v4426
      %v4450 = vpack.c.b16 %v4429, %v4428
      %v4451 = vpack.c.b16 %v4431, %v4430
      %v4452 = vpack.c.b16 %v4433, %v4432
      %v4453 = vpack.c.b16 %v4435, %v4434
      %v4454 = vpack.c.b16 %v4437, %v4436
      %v4455 = vpack.c.b16 %v4439, %v4438
      %v4457 = vsel %vm4162, %v4440, 0
      %v4460 = vsel %vm4162, %v4441, 0
      %v4463 = vsel %vm4162, %v4442, 0
      %v4466 = vsel %vm4162, %v4443, 0
      %v4469 = vsel %vm4162, %v4444, 0
      %v4472 = vsel %vm4162, %v4445, 0
      %v4475 = vsel %vm4162, %v4446, 0
      %v4478 = vsel %vm4162, %v4447, 0
      %v4481 = vsel %vm4162, %v4448, 0
      %v4484 = vsel %vm4162, %v4449, 0
      %v4487 = vsel %vm4162, %v4450, 0
      %v4490 = vsel %vm4162, %v4451, 0
      %v4493 = vsel %vm4162, %v4452, 0
      %v4496 = vsel %vm4162, %v4453, 0
      %v4499 = vsel %vm4162, %v4454, 0
      %v4502 = vsel %vm4162, %v4455, 0
      %v4505 = vsel %vm4211, %v3720, 0
      %4507 = vmatprep.subr.bf16.mxu0 0
      %4508 = vmatpush1.bf16.msra.mxu0 %v4505
      %4509 = vmatprep.subr.bf16.mxu0 0
      %4510 = vmatpush1.bf16.msra.mxu0 0
      %4511 = vmatprep.subr.bf16.mxu0 0
      %4512 = vmatpush1.bf16.msra.mxu0 0
      %4513 = vmatprep.subr.bf16.mxu0 0
      %4514 = vmatpush1.bf16.msra.mxu0 0
      %4515 = vmatprep.subr.bf16.mxu0 0
      %4516 = vmatpush1.bf16.msra.mxu0 0
      %4517 = vmatprep.subr.bf16.mxu0 0
      %4518 = vmatpush1.bf16.msra.mxu0 0
      %4519 = vmatprep.subr.bf16.mxu0 0
      %4520 = vmatpush1.bf16.msra.mxu0 0
      %4521 = vmatprep.subr.bf16.mxu0 0
      %4522 = vmatpush1.bf16.msra.mxu0 0
      %4523 = vmatprep.subr.bf16.mxu0 0
      %4524 = vmatpush1.bf16.msra.mxu0 0
      %4525 = vmatprep.subr.bf16.mxu0 0
      %4526 = vmatpush1.bf16.msra.mxu0 0
      %4527 = vmatprep.subr.bf16.mxu0 0
      %4528 = vmatpush1.bf16.msra.mxu0 0
      %4529 = vmatprep.subr.bf16.mxu0 0
      %4530 = vmatpush1.bf16.msra.mxu0 0
      %4531 = vmatprep.subr.bf16.mxu0 0
      %4532 = vmatpush1.bf16.msra.mxu0 0
      %4533 = vmatprep.subr.bf16.mxu0 0
      %4534 = vmatpush1.bf16.msra.mxu0 0
      %4535 = vmatprep.subr.bf16.mxu0 0
      %4536 = vmatpush1.bf16.msra.mxu0 0
      %4537 = vmatprep.subr.bf16.mxu0 0
      %4538 = vmatpush1.bf16.msra.mxu0 0
      %4539 = vmatprep.mubr.bf16.mxu0 0
      %4540 = vmatmul.mubr.bf16.gmra.mrb[0].mxu0 %v4457
      %v4541 = vpop.f32.mrb[0].mxu0
      %v4542 = vadd.f32 %v4250, %v4541
      %v4543 = vpop.f32.mrb[0].mxu0
      %v4544 = vpop.f32.mrb[0].mxu0
      %v4545 = vadd.f32 %v4253, %v4544
      %v4546 = vpop.f32.mrb[0].mxu0
      %4547 = vmatprep.mubr.bf16.mxu0 0
      %4548 = vmatmul.mubr.bf16.gmra.mrb[0].mxu0 %v4460
      %v4549 = vpop.f32.mrb[0].mxu0
      %v4550 = vadd.f32 %v4258, %v4549
      %v4551 = vpop.f32.mrb[0].mxu0
      %v4552 = vpop.f32.mrb[0].mxu0
      %v4553 = vadd.f32 %v4261, %v4552
      %v4554 = vpop.f32.mrb[0].mxu0
      %4555 = vmatprep.mubr.bf16.mxu0 0
      %4556 = vmatmul.mubr.bf16.gmra.mrb[0].mxu0 %v4463
      %v4557 = vpop.f32.mrb[0].mxu0
      %v4558 = vadd.f32 %v4266, %v4557
      %v4559 = vpop.f32.mrb[0].mxu0
      %v4560 = vpop.f32.mrb[0].mxu0
      %v4561 = vadd.f32 %v4269, %v4560
      %v4562 = vpop.f32.mrb[0].mxu0
      %4563 = vmatprep.mubr.bf16.mxu0 0
      %4564 = vmatmul.mubr.bf16.gmra.mrb[0].mxu0 %v4466
      %v4565 = vpop.f32.mrb[0].mxu0
      %v4566 = vadd.f32 %v4274, %v4565
      %v4567 = vpop.f32.mrb[0].mxu0
      %v4568 = vpop.f32.mrb[0].mxu0
      %v4569 = vadd.f32 %v4277, %v4568
      %v4570 = vpop.f32.mrb[0].mxu0
      %4571 = vmatprep.mubr.bf16.mxu0 0
      %4572 = vmatmul.mubr.bf16.gmra.mrb[0].mxu0 %v4469
      %v4573 = vpop.f32.mrb[0].mxu0
      %v4574 = vadd.f32 %v4282, %v4573
      %v4575 = vpop.f32.mrb[0].mxu0
      %v4576 = vpop.f32.mrb[0].mxu0
      %v4577 = vadd.f32 %v4285, %v4576
      %v4578 = vpop.f32.mrb[0].mxu0
      %4579 = vmatprep.mubr.bf16.mxu0 0
      %4580 = vmatmul.mubr.bf16.gmra.mrb[0].mxu0 %v4472
      %v4581 = vpop.f32.mrb[0].mxu0
      %v4582 = vadd.f32 %v4290, %v4581
      %v4583 = vpop.f32.mrb[0].mxu0
      %v4584 = vpop.f32.mrb[0].mxu0
      %v4585 = vadd.f32 %v4293, %v4584
      %v4586 = vpop.f32.mrb[0].mxu0
      %4587 = vmatprep.mubr.bf16.mxu0 0
      %4588 = vmatmul.mubr.bf16.gmra.mrb[0].mxu0 %v4475
      %v4589 = vpop.f32.mrb[0].mxu0
      %v4590 = vadd.f32 %v4298, %v4589
      %v4591 = vpop.f32.mrb[0].mxu0
      %v4592 = vpop.f32.mrb[0].mxu0
      %v4593 = vadd.f32 %v4301, %v4592
      %v4594 = vpop.f32.mrb[0].mxu0
      %4595 = vmatprep.mubr.bf16.mxu0 0
      %4596 = vmatmul.mubr.bf16.gmra.mrb[0].mxu0 %v4478
      %v4597 = vpop.f32.mrb[0].mxu0
      %v4598 = vadd.f32 %v4306, %v4597
      %v4599 = vpop.f32.mrb[0].mxu0
      %v4600 = vpop.f32.mrb[0].mxu0
      %v4601 = vadd.f32 %v4309, %v4600
      %v4602 = vpop.f32.mrb[0].mxu0
      %4603 = vmatprep.mubr.bf16.mxu0 0
      %4604 = vmatmul.mubr.bf16.gmra.mrb[0].mxu0 %v4481
      %v4605 = vpop.f32.mrb[0].mxu0
      %v4606 = vadd.f32 %v4314, %v4605
      %v4607 = vpop.f32.mrb[0].mxu0
      %v4608 = vpop.f32.mrb[0].mxu0
      %v4609 = vadd.f32 %v4317, %v4608
      %v4610 = vpop.f32.mrb[0].mxu0
      %4611 = vmatprep.mubr.bf16.mxu0 0
      %4612 = vmatmul.mubr.bf16.gmra.mrb[0].mxu0 %v4484
      %v4613 = vpop.f32.mrb[0].mxu0
      %v4614 = vadd.f32 %v4322, %v4613
      %v4615 = vpop.f32.mrb[0].mxu0
      %v4616 = vpop.f32.mrb[0].mxu0
      %v4617 = vadd.f32 %v4325, %v4616
      %v4618 = vpop.f32.mrb[0].mxu0
      %4619 = vmatprep.mubr.bf16.mxu0 0
      %4620 = vmatmul.mubr.bf16.gmra.mrb[0].mxu0 %v4487
      %v4621 = vpop.f32.mrb[0].mxu0
      %v4622 = vadd.f32 %v4330, %v4621
      %v4623 = vpop.f32.mrb[0].mxu0
      %v4624 = vpop.f32.mrb[0].mxu0
      %v4625 = vadd.f32 %v4333, %v4624
      %v4626 = vpop.f32.mrb[0].mxu0
      %4627 = vmatprep.mubr.bf16.mxu0 0
      %4628 = vmatmul.mubr.bf16.gmra.mrb[0].mxu0 %v4490
      %v4629 = vpop.f32.mrb[0].mxu0
      %v4630 = vadd.f32 %v4338, %v4629
      %v4631 = vpop.f32.mrb[0].mxu0
      %v4632 = vpop.f32.mrb[0].mxu0
      %v4633 = vadd.f32 %v4341, %v4632
      %v4634 = vpop.f32.mrb[0].mxu0
      %4635 = vmatprep.mubr.bf16.mxu0 0
      %4636 = vmatmul.mubr.bf16.gmra.mrb[0].mxu0 %v4493
      %v4637 = vpop.f32.mrb[0].mxu0
      %v4638 = vadd.f32 %v4346, %v4637
      %v4639 = vpop.f32.mrb[0].mxu0
      %v4640 = vpop.f32.mrb[0].mxu0
      %v4641 = vadd.f32 %v4349, %v4640
      %v4642 = vpop.f32.mrb[0].mxu0
      %4643 = vmatprep.mubr.bf16.mxu0 0
      %4644 = vmatmul.mubr.bf16.gmra.mrb[0].mxu0 %v4496
      %v4645 = vpop.f32.mrb[0].mxu0
      %v4646 = vadd.f32 %v4354, %v4645
      %v4647 = vpop.f32.mrb[0].mxu0
      %v4648 = vpop.f32.mrb[0].mxu0
      %v4649 = vadd.f32 %v4357, %v4648
      %v4650 = vpop.f32.mrb[0].mxu0
      %4651 = vmatprep.mubr.bf16.mxu0 0
      %4652 = vmatmul.mubr.bf16.gmra.mrb[0].mxu0 %v4499
      %v4653 = vpop.f32.mrb[0].mxu0
      %v4654 = vadd.f32 %v4362, %v4653
      %v4655 = vpop.f32.mrb[0].mxu0
      %v4656 = vpop.f32.mrb[0].mxu0
      %v4657 = vadd.f32 %v4365, %v4656
      %v4658 = vpop.f32.mrb[0].mxu0
      %4659 = vmatprep.mubr.bf16.mxu0 0
      %4660 = vmatmul.mubr.bf16.gmra.mrb[0].mxu0 %v4502
      %v4661 = vpop.f32.mrb[0].mxu0
      %v4662 = vadd.f32 %v4370, %v4661
      %v4663 = vpop.f32.mrb[0].mxu0
      %v4664 = vpop.f32.mrb[0].mxu0
      %v4665 = vadd.f32 %v4373, %v4664
      %v4666 = vpop.f32.mrb[0].mxu0
      %4667 = vdwg.mxu0
      %v4684 = vrot.slane %v3666, 5
      %v4685 = vrot.slane %v4684, 4
      %v4686 = vrot.slane %v3667, 5
      %v4687 = vsel %vm1309, %v4685, %v4686
      %v4688 = vrot.slane %v4686, 4
      %v4689 = vrot.slane %v3668, 5
      %v4690 = vsel %vm1309, %v4688, %v4689
      %v4691 = vrot.slane %v3669, 5
      %v4692 = vrot.slane %v4691, 4
      %v4693 = vrot.slane %v3670, 5
      %v4694 = vsel %vm1309, %v4692, %v4693
      %v4695 = vrot.slane %v4693, 4
      %v4696 = vrot.slane %v3671, 5
      %v4697 = vsel %vm1309, %v4695, %v4696
      %v4698 = vrot.slane %v3672, 5
      %v4699 = vrot.slane %v4698, 4
      %v4700 = vrot.slane %v3673, 5
      %v4701 = vsel %vm1309, %v4699, %v4700
      %v4702 = vrot.slane %v4700, 4
      %v4703 = vrot.slane %v3674, 5
      %v4704 = vsel %vm1309, %v4702, %v4703
      %v4705 = vrot.slane %v3675, 5
      %v4706 = vrot.slane %v4705, 4
      %v4707 = vrot.slane %v3676, 5
      %v4708 = vsel %vm1309, %v4706, %v4707
      %v4709 = vrot.slane %v4707, 4
      %v4710 = vrot.slane %v3677, 5
      %v4711 = vsel %vm1309, %v4709, %v4710
      %v4712 = vrot.slane %v3678, 5
      %v4713 = vrot.slane %v4712, 4
      %v4714 = vrot.slane %v3679, 5
      %v4715 = vsel %vm1309, %v4713, %v4714
      %v4716 = vrot.slane %v4714, 4
      %v4717 = vrot.slane %v3680, 5
      %v4718 = vsel %vm1309, %v4716, %v4717
      %v4719 = vrot.slane %v3681, 5
      %v4720 = vrot.slane %v4719, 4
      %v4721 = vrot.slane %v3682, 5
      %v4722 = vsel %vm1309, %v4720, %v4721
      %v4723 = vrot.slane %v4721, 4
      %v4724 = vrot.slane %v3683, 5
      %v4725 = vsel %vm1309, %v4723, %v4724
      %v4726 = vrot.slane %v3684, 5
      %v4727 = vrot.slane %v4726, 4
      %v4728 = vrot.slane %v3685, 5
      %v4729 = vsel %vm1309, %v4727, %v4728
      %v4730 = vrot.slane %v4728, 4
      %v4731 = vrot.slane %v3686, 5
      %v4732 = vsel %vm1309, %v4730, %v4731
      %v4733 = vrot.slane %v3687, 5
      %v4734 = vrot.slane %v4733, 4
      %v4735 = vrot.slane %v3688, 5
      %v4736 = vsel %vm1309, %v4734, %v4735
      %v4737 = vrot.slane %v4735, 4
      %v4738 = vrot.slane %v3689, 5
      %v4739 = vsel %vm1309, %v4737, %v4738
      %v4740 = vrot.slane %v3690, 5
      %v4741 = vrot.slane %v4740, 4
      %v4742 = vrot.slane %v3691, 5
      %v4743 = vsel %vm1309, %v4741, %v4742
      %v4744 = vrot.slane %v4742, 4
      %v4745 = vrot.slane %v3692, 5
      %v4746 = vsel %vm1309, %v4744, %v4745
      %v4747 = vrot.slane %v3693, 5
      %v4748 = vrot.slane %v4747, 4
      %v4749 = vrot.slane %v3694, 5
      %v4750 = vsel %vm1309, %v4748, %v4749
      %v4751 = vrot.slane %v4749, 4
      %v4752 = vrot.slane %v3695, 5
      %v4753 = vsel %vm1309, %v4751, %v4752
      %v4754 = vrot.slane %v3696, 5
      %v4755 = vrot.slane %v4754, 4
      %v4756 = vrot.slane %v3697, 5
      %v4757 = vsel %vm1309, %v4755, %v4756
      %v4758 = vrot.slane %v4756, 4
      %v4759 = vrot.slane %v3698, 5
      %v4760 = vsel %vm1309, %v4758, %v4759
      %v4761 = vrot.slane %v3699, 5
      %v4762 = vrot.slane %v4761, 4
      %v4763 = vrot.slane %v3700, 5
      %v4764 = vsel %vm1309, %v4762, %v4763
      %v4765 = vrot.slane %v4763, 4
      %v4766 = vrot.slane %v3701, 5
      %v4767 = vsel %vm1309, %v4765, %v4766
      %v4768 = vrot.slane %v3702, 5
      %v4769 = vrot.slane %v4768, 4
      %v4770 = vrot.slane %v3703, 5
      %v4771 = vsel %vm1309, %v4769, %v4770
      %v4772 = vrot.slane %v4770, 4
      %v4773 = vrot.slane %v3704, 5
      %v4774 = vsel %vm1309, %v4772, %v4773
      %v4775 = vrot.slane %v3705, 5
      %v4776 = vrot.slane %v4775, 4
      %v4777 = vrot.slane %v3706, 5
      %v4778 = vsel %vm1309, %v4776, %v4777
      %v4779 = vrot.slane %v4777, 4
      %v4780 = vrot.slane %v3707, 5
      %v4781 = vsel %vm1309, %v4779, %v4780
      %v4782 = vrot.slane %v3708, 5
      %v4783 = vrot.slane %v4782, 4
      %v4784 = vrot.slane %v3709, 5
      %v4785 = vsel %vm1309, %v4783, %v4784
      %v4786 = vrot.slane %v4784, 4
      %v4787 = vrot.slane %v3710, 5
      %v4788 = vsel %vm1309, %v4786, %v4787
      %v4789 = vrot.slane %v3711, 5
      %v4790 = vrot.slane %v4789, 4
      %v4791 = vrot.slane %v3712, 5
      %v4792 = vsel %vm1309, %v4790, %v4791
      %v4793 = vrot.slane %v4791, 4
      %v4794 = vrot.slane %v3713, 5
      %v4795 = vsel %vm1309, %v4793, %v4794
      %v4796 = vunpack.c.l.b16 %v4687
      %v4797 = vunpack.c.l.b16 %v4690
      %v4798 = vunpack.c.l.b16 %v4694
      %v4799 = vunpack.c.l.b16 %v4697
      %v4800 = vunpack.c.l.b16 %v4701
      %v4801 = vunpack.c.l.b16 %v4704
      %v4802 = vunpack.c.l.b16 %v4708
      %v4803 = vunpack.c.l.b16 %v4711
      %v4804 = vunpack.c.l.b16 %v4715
      %v4805 = vunpack.c.l.b16 %v4718
      %v4806 = vunpack.c.l.b16 %v4722
      %v4807 = vunpack.c.l.b16 %v4725
      %v4808 = vunpack.c.l.b16 %v4729
      %v4809 = vunpack.c.l.b16 %v4732
      %v4810 = vunpack.c.l.b16 %v4736
      %v4811 = vunpack.c.l.b16 %v4739
      %v4812 = vunpack.c.l.b16 %v4743
      %v4813 = vunpack.c.l.b16 %v4746
      %v4814 = vunpack.c.l.b16 %v4750
      %v4815 = vunpack.c.l.b16 %v4753
      %v4816 = vunpack.c.l.b16 %v4757
      %v4817 = vunpack.c.l.b16 %v4760
      %v4818 = vunpack.c.l.b16 %v4764
      %v4819 = vunpack.c.l.b16 %v4767
      %v4820 = vunpack.c.l.b16 %v4771
      %v4821 = vunpack.c.l.b16 %v4774
      %v4822 = vunpack.c.l.b16 %v4778
      %v4823 = vunpack.c.l.b16 %v4781
      %v4824 = vunpack.c.l.b16 %v4785
      %v4825 = vunpack.c.l.b16 %v4788
      %v4826 = vunpack.c.l.b16 %v4792
      %v4827 = vunpack.c.l.b16 %v4795
      %v4828 = vpack.c.b16 %v4797, %v4796
      %v4829 = vpack.c.b16 %v4799, %v4798
      %v4830 = vpack.c.b16 %v4801, %v4800
      %v4831 = vpack.c.b16 %v4803, %v4802
      %v4832 = vpack.c.b16 %v4805, %v4804
      %v4833 = vpack.c.b16 %v4807, %v4806
      %v4834 = vpack.c.b16 %v4809, %v4808
      %v4835 = vpack.c.b16 %v4811, %v4810
      %v4836 = vpack.c.b16 %v4813, %v4812
      %v4837 = vpack.c.b16 %v4815, %v4814
      %v4838 = vpack.c.b16 %v4817, %v4816
      %v4839 = vpack.c.b16 %v4819, %v4818
      %v4840 = vpack.c.b16 %v4821, %v4820
      %v4841 = vpack.c.b16 %v4823, %v4822
      %v4842 = vpack.c.b16 %v4825, %v4824
      %v4843 = vpack.c.b16 %v4827, %v4826
      %v4845 = vsel %vm4162, %v4828, 0
      %v4848 = vsel %vm4162, %v4829, 0
      %v4851 = vsel %vm4162, %v4830, 0
      %v4854 = vsel %vm4162, %v4831, 0
      %v4857 = vsel %vm4162, %v4832, 0
      %v4860 = vsel %vm4162, %v4833, 0
      %v4863 = vsel %vm4162, %v4834, 0
      %v4866 = vsel %vm4162, %v4835, 0
      %v4869 = vsel %vm4162, %v4836, 0
      %v4872 = vsel %vm4162, %v4837, 0
      %v4875 = vsel %vm4162, %v4838, 0
      %v4878 = vsel %vm4162, %v4839, 0
      %v4881 = vsel %vm4162, %v4840, 0
      %v4884 = vsel %vm4162, %v4841, 0
      %v4887 = vsel %vm4162, %v4842, 0
      %v4890 = vsel %vm4162, %v4843, 0
      %v4893 = vsel %vm4211, %v3722, 0
      %4895 = vmatprep.subr.bf16.mxu0 0
      %4896 = vmatpush1.bf16.msra.mxu0 %v4893
      %4897 = vmatprep.subr.bf16.mxu0 0
      %4898 = vmatpush1.bf16.msra.mxu0 0
      %4899 = vmatprep.subr.bf16.mxu0 0
      %4900 = vmatpush1.bf16.msra.mxu0 0
      %4901 = vmatprep.subr.bf16.mxu0 0
      %4902 = vmatpush1.bf16.msra.mxu0 0
      %4903 = vmatprep.subr.bf16.mxu0 0
      %4904 = vmatpush1.bf16.msra.mxu0 0
      %4905 = vmatprep.subr.bf16.mxu0 0
      %4906 = vmatpush1.bf16.msra.mxu0 0
      %4907 = vmatprep.subr.bf16.mxu0 0
      %4908 = vmatpush1.bf16.msra.mxu0 0
      %4909 = vmatprep.subr.bf16.mxu0 0
      %4910 = vmatpush1.bf16.msra.mxu0 0
      %4911 = vmatprep.subr.bf16.mxu0 0
      %4912 = vmatpush1.bf16.msra.mxu0 0
      %4913 = vmatprep.subr.bf16.mxu0 0
      %4914 = vmatpush1.bf16.msra.mxu0 0
      %4915 = vmatprep.subr.bf16.mxu0 0
      %4916 = vmatpush1.bf16.msra.mxu0 0
      %4917 = vmatprep.subr.bf16.mxu0 0
      %4918 = vmatpush1.bf16.msra.mxu0 0
      %4919 = vmatprep.subr.bf16.mxu0 0
      %4920 = vmatpush1.bf16.msra.mxu0 0
      %4921 = vmatprep.subr.bf16.mxu0 0
      %4922 = vmatpush1.bf16.msra.mxu0 0
      %4923 = vmatprep.subr.bf16.mxu0 0
      %4924 = vmatpush1.bf16.msra.mxu0 0
      %4925 = vmatprep.subr.bf16.mxu0 0
      %4926 = vmatpush1.bf16.msra.mxu0 0
      %4927 = vmatprep.mubr.bf16.mxu0 0
      %4928 = vmatmul.mubr.bf16.gmra.mrb[0].mxu0 %v4845
      %v4929 = vpop.f32.mrb[0].mxu0
      %v4930 = vadd.f32 0.0, %v4929
      %v4931 = vpop.f32.mrb[0].mxu0
      %v4932 = vpop.f32.mrb[0].mxu0
      %v4933 = vadd.f32 0.0, %v4932
      %v4934 = vpop.f32.mrb[0].mxu0
      %4935 = vmatprep.mubr.bf16.mxu0 0
      %4936 = vmatmul.mubr.bf16.gmra.mrb[0].mxu0 %v4848
      %v4937 = vpop.f32.mrb[0].mxu0
      %v4938 = vadd.f32 0.0, %v4937
      %v4939 = vpop.f32.mrb[0].mxu0
      %v4940 = vpop.f32.mrb[0].mxu0
      %v4941 = vadd.f32 0.0, %v4940
      %v4942 = vpop.f32.mrb[0].mxu0
      %4943 = vmatprep.mubr.bf16.mxu0 0
      %4944 = vmatmul.mubr.bf16.gmra.mrb[0].mxu0 %v4851
      %v4945 = vpop.f32.mrb[0].mxu0
      %v4946 = vadd.f32 0.0, %v4945
      %v4947 = vpop.f32.mrb[0].mxu0
      %v4948 = vpop.f32.mrb[0].mxu0
      %v4949 = vadd.f32 0.0, %v4948
      %v4950 = vpop.f32.mrb[0].mxu0
      %4951 = vmatprep.mubr.bf16.mxu0 0
      %4952 = vmatmul.mubr.bf16.gmra.mrb[0].mxu0 %v4854
      %v4953 = vpop.f32.mrb[0].mxu0
      %v4954 = vadd.f32 0.0, %v4953
      %v4955 = vpop.f32.mrb[0].mxu0
      %v4956 = vpop.f32.mrb[0].mxu0
      %v4957 = vadd.f32 0.0, %v4956
      %v4958 = vpop.f32.mrb[0].mxu0
      %4959 = vmatprep.mubr.bf16.mxu0 0
      %4960 = vmatmul.mubr.bf16.gmra.mrb[0].mxu0 %v4857
      %v4961 = vpop.f32.mrb[0].mxu0
      %v4962 = vadd.f32 0.0, %v4961
      %v4963 = vpop.f32.mrb[0].mxu0
      %v4964 = vpop.f32.mrb[0].mxu0
      %v4965 = vadd.f32 0.0, %v4964
      %v4966 = vpop.f32.mrb[0].mxu0
      %4967 = vmatprep.mubr.bf16.mxu0 0
      %4968 = vmatmul.mubr.bf16.gmra.mrb[0].mxu0 %v4860
      %v4969 = vpop.f32.mrb[0].mxu0
      %v4970 = vadd.f32 0.0, %v4969
      %v4971 = vpop.f32.mrb[0].mxu0
      %v4972 = vpop.f32.mrb[0].mxu0
      %v4973 = vadd.f32 0.0, %v4972
      %v4974 = vpop.f32.mrb[0].mxu0
      %4975 = vmatprep.mubr.bf16.mxu0 0
      %4976 = vmatmul.mubr.bf16.gmra.mrb[0].mxu0 %v4863
      %v4977 = vpop.f32.mrb[0].mxu0
      %v4978 = vadd.f32 0.0, %v4977
      %v4979 = vpop.f32.mrb[0].mxu0
      %v4980 = vpop.f32.mrb[0].mxu0
      %v4981 = vadd.f32 0.0, %v4980
      %v4982 = vpop.f32.mrb[0].mxu0
      %4983 = vmatprep.mubr.bf16.mxu0 0
      %4984 = vmatmul.mubr.bf16.gmra.mrb[0].mxu0 %v4866
      %v4985 = vpop.f32.mrb[0].mxu0
      %v4986 = vadd.f32 0.0, %v4985
      %v4987 = vpop.f32.mrb[0].mxu0
      %v4988 = vpop.f32.mrb[0].mxu0
      %v4989 = vadd.f32 0.0, %v4988
      %v4990 = vpop.f32.mrb[0].mxu0
      %4991 = vmatprep.mubr.bf16.mxu0 0
      %4992 = vmatmul.mubr.bf16.gmra.mrb[0].mxu0 %v4869
      %v4993 = vpop.f32.mrb[0].mxu0
      %v4994 = vadd.f32 0.0, %v4993
      %v4995 = vpop.f32.mrb[0].mxu0
      %v4996 = vpop.f32.mrb[0].mxu0
      %v4997 = vadd.f32 0.0, %v4996
      %v4998 = vpop.f32.mrb[0].mxu0
      %4999 = vmatprep.mubr.bf16.mxu0 0
      %5000 = vmatmul.mubr.bf16.gmra.mrb[0].mxu0 %v4872
      %v5001 = vpop.f32.mrb[0].mxu0
      %v5002 = vadd.f32 0.0, %v5001
      %v5003 = vpop.f32.mrb[0].mxu0
      %v5004 = vpop.f32.mrb[0].mxu0
      %v5005 = vadd.f32 0.0, %v5004
      %v5006 = vpop.f32.mrb[0].mxu0
      %5007 = vmatprep.mubr.bf16.mxu0 0
      %5008 = vmatmul.mubr.bf16.gmra.mrb[0].mxu0 %v4875
      %v5009 = vpop.f32.mrb[0].mxu0
      %v5010 = vadd.f32 0.0, %v5009
      %v5011 = vpop.f32.mrb[0].mxu0
      %v5012 = vpop.f32.mrb[0].mxu0
      %v5013 = vadd.f32 0.0, %v5012
      %v5014 = vpop.f32.mrb[0].mxu0
      %5015 = vmatprep.mubr.bf16.mxu0 0
      %5016 = vmatmul.mubr.bf16.gmra.mrb[0].mxu0 %v4878
      %v5017 = vpop.f32.mrb[0].mxu0
      %v5018 = vadd.f32 0.0, %v5017
      %v5019 = vpop.f32.mrb[0].mxu0
      %v5020 = vpop.f32.mrb[0].mxu0
      %v5021 = vadd.f32 0.0, %v5020
      %v5022 = vpop.f32.mrb[0].mxu0
      %5023 = vmatprep.mubr.bf16.mxu0 0
      %5024 = vmatmul.mubr.bf16.gmra.mrb[0].mxu0 %v4881
      %v5025 = vpop.f32.mrb[0].mxu0
      %v5026 = vadd.f32 0.0, %v5025
      %v5027 = vpop.f32.mrb[0].mxu0
      %v5028 = vpop.f32.mrb[0].mxu0
      %v5029 = vadd.f32 0.0, %v5028
      %v5030 = vpop.f32.mrb[0].mxu0
      %5031 = vmatprep.mubr.bf16.mxu0 0
      %5032 = vmatmul.mubr.bf16.gmra.mrb[0].mxu0 %v4884
      %v5033 = vpop.f32.mrb[0].mxu0
      %v5034 = vadd.f32 0.0, %v5033
      %v5035 = vpop.f32.mrb[0].mxu0
      %v5036 = vpop.f32.mrb[0].mxu0
      %v5037 = vadd.f32 0.0, %v5036
      %v5038 = vpop.f32.mrb[0].mxu0
      %5039 = vmatprep.mubr.bf16.mxu0 0
      %5040 = vmatmul.mubr.bf16.gmra.mrb[0].mxu0 %v4887
      %v5041 = vpop.f32.mrb[0].mxu0
      %v5042 = vadd.f32 0.0, %v5041
      %v5043 = vpop.f32.mrb[0].mxu0
      %v5044 = vpop.f32.mrb[0].mxu0
      %v5045 = vadd.f32 0.0, %v5044
      %v5046 = vpop.f32.mrb[0].mxu0
      %5047 = vmatprep.mubr.bf16.mxu0 0
      %5048 = vmatmul.mubr.bf16.gmra.mrb[0].mxu0 %v4890
      %v5049 = vpop.f32.mrb[0].mxu0
      %v5050 = vadd.f32 0.0, %v5049
      %v5051 = vpop.f32.mrb[0].mxu0
      %v5052 = vpop.f32.mrb[0].mxu0
      %v5053 = vadd.f32 0.0, %v5052
      %v5054 = vpop.f32.mrb[0].mxu0
      %5055 = vdwg.mxu0
      %v5056 = vadd.f32 %v4542, %v4930
      %v5057 = vadd.f32 %v4545, %v4933
      %v5058 = vadd.f32 %v4550, %v4938
      %v5059 = vadd.f32 %v4553, %v4941
      %v5060 = vadd.f32 %v4558, %v4946
      %v5061 = vadd.f32 %v4561, %v4949
      %v5062 = vadd.f32 %v4566, %v4954
      %v5063 = vadd.f32 %v4569, %v4957
      %v5064 = vadd.f32 %v4574, %v4962
      %v5065 = vadd.f32 %v4577, %v4965
      %v5066 = vadd.f32 %v4582, %v4970
      %v5067 = vadd.f32 %v4585, %v4973
      %v5068 = vadd.f32 %v4590, %v4978
      %v5069 = vadd.f32 %v4593, %v4981
      %v5070 = vadd.f32 %v4598, %v4986
      %v5071 = vadd.f32 %v4601, %v4989
      %v5072 = vadd.f32 %v4606, %v4994
      %v5073 = vadd.f32 %v4609, %v4997
      %v5074 = vadd.f32 %v4614, %v5002
      %v5075 = vadd.f32 %v4617, %v5005
      %v5076 = vadd.f32 %v4622, %v5010
      %v5077 = vadd.f32 %v4625, %v5013
      %v5078 = vadd.f32 %v4630, %v5018
      %v5079 = vadd.f32 %v4633, %v5021
      %v5080 = vadd.f32 %v4638, %v5026
      %v5081 = vadd.f32 %v4641, %v5029
      %v5082 = vadd.f32 %v4646, %v5034
      %v5083 = vadd.f32 %v4649, %v5037
      %v5084 = vadd.f32 %v4654, %v5042
      %v5085 = vadd.f32 %v4657, %v5045
      %v5086 = vadd.f32 %v4662, %v5050
      %v5087 = vadd.f32 %v4665, %v5053
      %v5090 = vunpack.c.l.b16 %v3714
      %v5091 = vunpack.c.l.b16 %v3715
      %v5092 = vpack.c.b16 %v5091, %v5090
      %v5094 = vsel %vm4162, %v5092, 0
      %v5097 = vsel %vm4211, %v3723, 0
      %5099 = vmatprep.subr.bf16.mxu0 0
      %5100 = vmatpush1.bf16.msra.mxu0 %v5097
      %5101 = vmatprep.subr.bf16.mxu0 0
      %5102 = vmatpush1.bf16.msra.mxu0 0
      %5103 = vmatprep.subr.bf16.mxu0 0
      %5104 = vmatpush1.bf16.msra.mxu0 0
      %5105 = vmatprep.subr.bf16.mxu0 0
      %5106 = vmatpush1.bf16.msra.mxu0 0
      %5107 = vmatprep.subr.bf16.mxu0 0
      %5108 = vmatpush1.bf16.msra.mxu0 0
      %5109 = vmatprep.subr.bf16.mxu0 0
      %5110 = vmatpush1.bf16.msra.mxu0 0
      %5111 = vmatprep.subr.bf16.mxu0 0
      %5112 = vmatpush1.bf16.msra.mxu0 0
      %5113 = vmatprep.subr.bf16.mxu0 0
      %5114 = vmatpush1.bf16.msra.mxu0 0
      %5115 = vmatprep.subr.bf16.mxu0 0
      %5116 = vmatpush1.bf16.msra.mxu0 0
      %5117 = vmatprep.subr.bf16.mxu0 0
      %5118 = vmatpush1.bf16.msra.mxu0 0
      %5119 = vmatprep.subr.bf16.mxu0 0
      %5120 = vmatpush1.bf16.msra.mxu0 0
      %5121 = vmatprep.subr.bf16.mxu0 0
      %5122 = vmatpush1.bf16.msra.mxu0 0
      %5123 = vmatprep.subr.bf16.mxu0 0
      %5124 = vmatpush1.bf16.msra.mxu0 0
      %5125 = vmatprep.subr.bf16.mxu0 0
      %5126 = vmatpush1.bf16.msra.mxu0 0
      %5127 = vmatprep.subr.bf16.mxu0 0
      %5128 = vmatpush1.bf16.msra.mxu0 0
      %5129 = vmatprep.subr.bf16.mxu0 0
      %5130 = vmatpush1.bf16.msra.mxu0 0
      %5131 = vmatprep.mubr.bf16.mxu0 0
      %5132 = vmatmul.mubr.bf16.gmra.mrb[0].mxu0 %v4460
      %v5133 = vpop.f32.mrb[0].mxu0
      %v5134 = vadd.f32 0.0, %v5133
      %v5135 = vpop.f32.mrb[0].mxu0
      %v5136 = vpop.f32.mrb[0].mxu0
      %v5137 = vadd.f32 0.0, %v5136
      %v5138 = vpop.f32.mrb[0].mxu0
      %5139 = vmatprep.mubr.bf16.mxu0 0
      %5140 = vmatmul.mubr.bf16.gmra.mrb[0].mxu0 %v4463
      %v5141 = vpop.f32.mrb[0].mxu0
      %v5142 = vadd.f32 0.0, %v5141
      %v5143 = vpop.f32.mrb[0].mxu0
      %v5144 = vpop.f32.mrb[0].mxu0
      %v5145 = vadd.f32 0.0, %v5144
      %v5146 = vpop.f32.mrb[0].mxu0
      %5147 = vmatprep.mubr.bf16.mxu0 0
      %5148 = vmatmul.mubr.bf16.gmra.mrb[0].mxu0 %v4466
      %v5149 = vpop.f32.mrb[0].mxu0
      %v5150 = vadd.f32 0.0, %v5149
      %v5151 = vpop.f32.mrb[0].mxu0
      %v5152 = vpop.f32.mrb[0].mxu0
      %v5153 = vadd.f32 0.0, %v5152
      %v5154 = vpop.f32.mrb[0].mxu0
      %5155 = vmatprep.mubr.bf16.mxu0 0
      %5156 = vmatmul.mubr.bf16.gmra.mrb[0].mxu0 %v4469
      %v5157 = vpop.f32.mrb[0].mxu0
      %v5158 = vadd.f32 0.0, %v5157
      %v5159 = vpop.f32.mrb[0].mxu0
      %v5160 = vpop.f32.mrb[0].mxu0
      %v5161 = vadd.f32 0.0, %v5160
      %v5162 = vpop.f32.mrb[0].mxu0
      %5163 = vmatprep.mubr.bf16.mxu0 0
      %5164 = vmatmul.mubr.bf16.gmra.mrb[0].mxu0 %v4472
      %v5165 = vpop.f32.mrb[0].mxu0
      %v5166 = vadd.f32 0.0, %v5165
      %v5167 = vpop.f32.mrb[0].mxu0
      %v5168 = vpop.f32.mrb[0].mxu0
      %v5169 = vadd.f32 0.0, %v5168
      %v5170 = vpop.f32.mrb[0].mxu0
      %5171 = vmatprep.mubr.bf16.mxu0 0
      %5172 = vmatmul.mubr.bf16.gmra.mrb[0].mxu0 %v4475
      %v5173 = vpop.f32.mrb[0].mxu0
      %v5174 = vadd.f32 0.0, %v5173
      %v5175 = vpop.f32.mrb[0].mxu0
      %v5176 = vpop.f32.mrb[0].mxu0
      %v5177 = vadd.f32 0.0, %v5176
      %v5178 = vpop.f32.mrb[0].mxu0
      %5179 = vmatprep.mubr.bf16.mxu0 0
      %5180 = vmatmul.mubr.bf16.gmra.mrb[0].mxu0 %v4478
      %v5181 = vpop.f32.mrb[0].mxu0
      %v5182 = vadd.f32 0.0, %v5181
      %v5183 = vpop.f32.mrb[0].mxu0
      %v5184 = vpop.f32.mrb[0].mxu0
      %v5185 = vadd.f32 0.0, %v5184
      %v5186 = vpop.f32.mrb[0].mxu0
      %5187 = vmatprep.mubr.bf16.mxu0 0
      %5188 = vmatmul.mubr.bf16.gmra.mrb[0].mxu0 %v4481
      %v5189 = vpop.f32.mrb[0].mxu0
      %v5190 = vadd.f32 0.0, %v5189
      %v5191 = vpop.f32.mrb[0].mxu0
      %v5192 = vpop.f32.mrb[0].mxu0
      %v5193 = vadd.f32 0.0, %v5192
      %v5194 = vpop.f32.mrb[0].mxu0
      %5195 = vmatprep.mubr.bf16.mxu0 0
      %5196 = vmatmul.mubr.bf16.gmra.mrb[0].mxu0 %v4484
      %v5197 = vpop.f32.mrb[0].mxu0
      %v5198 = vadd.f32 0.0, %v5197
      %v5199 = vpop.f32.mrb[0].mxu0
      %v5200 = vpop.f32.mrb[0].mxu0
      %v5201 = vadd.f32 0.0, %v5200
      %v5202 = vpop.f32.mrb[0].mxu0
      %5203 = vmatprep.mubr.bf16.mxu0 0
      %5204 = vmatmul.mubr.bf16.gmra.mrb[0].mxu0 %v4487
      %v5205 = vpop.f32.mrb[0].mxu0
      %v5206 = vadd.f32 0.0, %v5205
      %v5207 = vpop.f32.mrb[0].mxu0
      %v5208 = vpop.f32.mrb[0].mxu0
      %v5209 = vadd.f32 0.0, %v5208
      %v5210 = vpop.f32.mrb[0].mxu0
      %5211 = vmatprep.mubr.bf16.mxu0 0
      %5212 = vmatmul.mubr.bf16.gmra.mrb[0].mxu0 %v4490
      %v5213 = vpop.f32.mrb[0].mxu0
      %v5214 = vadd.f32 0.0, %v5213
      %v5215 = vpop.f32.mrb[0].mxu0
      %v5216 = vpop.f32.mrb[0].mxu0
      %v5217 = vadd.f32 0.0, %v5216
      %v5218 = vpop.f32.mrb[0].mxu0
      %5219 = vmatprep.mubr.bf16.mxu0 0
      %5220 = vmatmul.mubr.bf16.gmra.mrb[0].mxu0 %v4493
      %v5221 = vpop.f32.mrb[0].mxu0
      %v5222 = vadd.f32 0.0, %v5221
      %v5223 = vpop.f32.mrb[0].mxu0
      %v5224 = vpop.f32.mrb[0].mxu0
      %v5225 = vadd.f32 0.0, %v5224
      %v5226 = vpop.f32.mrb[0].mxu0
      %5227 = vmatprep.mubr.bf16.mxu0 0
      %5228 = vmatmul.mubr.bf16.gmra.mrb[0].mxu0 %v4496
      %v5229 = vpop.f32.mrb[0].mxu0
      %v5230 = vadd.f32 0.0, %v5229
      %v5231 = vpop.f32.mrb[0].mxu0
      %v5232 = vpop.f32.mrb[0].mxu0
      %v5233 = vadd.f32 0.0, %v5232
      %v5234 = vpop.f32.mrb[0].mxu0
      %5235 = vmatprep.mubr.bf16.mxu0 0
      %5236 = vmatmul.mubr.bf16.gmra.mrb[0].mxu0 %v4499
      %v5237 = vpop.f32.mrb[0].mxu0
      %v5238 = vadd.f32 0.0, %v5237
      %v5239 = vpop.f32.mrb[0].mxu0
      %v5240 = vpop.f32.mrb[0].mxu0
      %v5241 = vadd.f32 0.0, %v5240
      %v5242 = vpop.f32.mrb[0].mxu0
      %5243 = vmatprep.mubr.bf16.mxu0 0
      %5244 = vmatmul.mubr.bf16.gmra.mrb[0].mxu0 %v4502
      %v5245 = vpop.f32.mrb[0].mxu0
      %v5246 = vadd.f32 0.0, %v5245
      %v5247 = vpop.f32.mrb[0].mxu0
      %v5248 = vpop.f32.mrb[0].mxu0
      %v5249 = vadd.f32 0.0, %v5248
      %v5250 = vpop.f32.mrb[0].mxu0
      %5251 = vmatprep.mubr.bf16.mxu0 0
      %5252 = vmatmul.mubr.bf16.gmra.mrb[0].mxu0 %v5094
      %v5253 = vpop.f32.mrb[0].mxu0
      %v5254 = vadd.f32 0.0, %v5253
      %v5255 = vpop.f32.mrb[0].mxu0
      %v5256 = vpop.f32.mrb[0].mxu0
      %v5257 = vadd.f32 0.0, %v5256
      %v5258 = vpop.f32.mrb[0].mxu0
      %5259 = vdwg.mxu0
      %v5260 = vadd.f32 %v5056, %v5134
      %v5261 = vadd.f32 %v5057, %v5137
      %v5262 = vadd.f32 %v5058, %v5142
      %v5263 = vadd.f32 %v5059, %v5145
      %v5264 = vadd.f32 %v5060, %v5150
      %v5265 = vadd.f32 %v5061, %v5153
      %v5266 = vadd.f32 %v5062, %v5158
      %v5267 = vadd.f32 %v5063, %v5161
      %v5268 = vadd.f32 %v5064, %v5166
      %v5269 = vadd.f32 %v5065, %v5169
      %v5270 = vadd.f32 %v5066, %v5174
      %v5271 = vadd.f32 %v5067, %v5177
      %v5272 = vadd.f32 %v5068, %v5182
      %v5273 = vadd.f32 %v5069, %v5185
      %v5274 = vadd.f32 %v5070, %v5190
      %v5275 = vadd.f32 %v5071, %v5193
      %v5276 = vadd.f32 %v5072, %v5198
      %v5277 = vadd.f32 %v5073, %v5201
      %v5278 = vadd.f32 %v5074, %v5206
      %v5279 = vadd.f32 %v5075, %v5209
      %v5280 = vadd.f32 %v5076, %v5214
      %v5281 = vadd.f32 %v5077, %v5217
      %v5282 = vadd.f32 %v5078, %v5222
      %v5283 = vadd.f32 %v5079, %v5225
      %v5284 = vadd.f32 %v5080, %v5230
      %v5285 = vadd.f32 %v5081, %v5233
      %v5286 = vadd.f32 %v5082, %v5238
      %v5287 = vadd.f32 %v5083, %v5241
      %v5288 = vadd.f32 %v5084, %v5246
      %v5289 = vadd.f32 %v5085, %v5249
      %v5290 = vadd.f32 %v5086, %v5254
      %v5291 = vadd.f32 %v5087, %v5257
      %v5293 = vshrl.u32 %v3714, 16
      %v5295 = vrot.slane %v5293, 4
      %v5296 = vshll.u32 %v3714, 16
      %v5298 = vrot.slane %v5296, 5
      %v5299 = vor.u32 %v5295, %v5298
      %v5300 = vrot.slane %v5299, 4
      %v5302 = vshll.u32 %v3715, 16
      %v5304 = vrot.slane %v5302, 5
      %v5305 = vsel %vm352, %v5300, %v5304
      %v5306 = vshrl.u32 %v3715, 16
      %v5308 = vrot.slane %v5306, 4
      %v5309 = vor.u32 %v5308, %v5304
      %v5310 = vrot.slane %v5309, 4
      %v5312 = vshll.u32 %v3716, 16
      %v5314 = vrot.slane %v5312, 5
      %v5315 = vsel %vm352, %v5310, %v5314
      %v5316 = vunpack.c.l.b16 %v5305
      %v5317 = vunpack.c.l.b16 %v5315
      %v5318 = vpack.c.b16 %v5317, %v5316
      %v5320 = vsel %vm4162, %v5318, 0
      %v5323 = vsel %vm4211, %v3724, 0
      %5325 = vmatprep.subr.bf16.mxu0 0
      %5326 = vmatpush1.bf16.msra.mxu0 %v5323
      %5327 = vmatprep.subr.bf16.mxu0 0
      %5328 = vmatpush1.bf16.msra.mxu0 0
      %5329 = vmatprep.subr.bf16.mxu0 0
      %5330 = vmatpush1.bf16.msra.mxu0 0
      %5331 = vmatprep.subr.bf16.mxu0 0
      %5332 = vmatpush1.bf16.msra.mxu0 0
      %5333 = vmatprep.subr.bf16.mxu0 0
      %5334 = vmatpush1.bf16.msra.mxu0 0
      %5335 = vmatprep.subr.bf16.mxu0 0
      %5336 = vmatpush1.bf16.msra.mxu0 0
      %5337 = vmatprep.subr.bf16.mxu0 0
      %5338 = vmatpush1.bf16.msra.mxu0 0
      %5339 = vmatprep.subr.bf16.mxu0 0
      %5340 = vmatpush1.bf16.msra.mxu0 0
      %5341 = vmatprep.subr.bf16.mxu0 0
      %5342 = vmatpush1.bf16.msra.mxu0 0
      %5343 = vmatprep.subr.bf16.mxu0 0
      %5344 = vmatpush1.bf16.msra.mxu0 0
      %5345 = vmatprep.subr.bf16.mxu0 0
      %5346 = vmatpush1.bf16.msra.mxu0 0
      %5347 = vmatprep.subr.bf16.mxu0 0
      %5348 = vmatpush1.bf16.msra.mxu0 0
      %5349 = vmatprep.subr.bf16.mxu0 0
      %5350 = vmatpush1.bf16.msra.mxu0 0
      %5351 = vmatprep.subr.bf16.mxu0 0
      %5352 = vmatpush1.bf16.msra.mxu0 0
      %5353 = vmatprep.subr.bf16.mxu0 0
      %5354 = vmatpush1.bf16.msra.mxu0 0
      %5355 = vmatprep.subr.bf16.mxu0 0
      %5356 = vmatpush1.bf16.msra.mxu0 0
      %5357 = vmatprep.mubr.bf16.mxu0 0
      %5358 = vmatmul.mubr.bf16.gmra.mrb[0].mxu0 %v4167
      %v5359 = vpop.f32.mrb[0].mxu0
      %v5360 = vadd.f32 0.0, %v5359
      %v5361 = vpop.f32.mrb[0].mxu0
      %v5362 = vpop.f32.mrb[0].mxu0
      %v5363 = vadd.f32 0.0, %v5362
      %v5364 = vpop.f32.mrb[0].mxu0
      %5365 = vmatprep.mubr.bf16.mxu0 0
      %5366 = vmatmul.mubr.bf16.gmra.mrb[0].mxu0 %v4170
      %v5367 = vpop.f32.mrb[0].mxu0
      %v5368 = vadd.f32 0.0, %v5367
      %v5369 = vpop.f32.mrb[0].mxu0
      %v5370 = vpop.f32.mrb[0].mxu0
      %v5371 = vadd.f32 0.0, %v5370
      %v5372 = vpop.f32.mrb[0].mxu0
      %5373 = vmatprep.mubr.bf16.mxu0 0
      %5374 = vmatmul.mubr.bf16.gmra.mrb[0].mxu0 %v4173
      %v5375 = vpop.f32.mrb[0].mxu0
      %v5376 = vadd.f32 0.0, %v5375
      %v5377 = vpop.f32.mrb[0].mxu0
      %v5378 = vpop.f32.mrb[0].mxu0
      %v5379 = vadd.f32 0.0, %v5378
      %v5380 = vpop.f32.mrb[0].mxu0
      %5381 = vmatprep.mubr.bf16.mxu0 0
      %5382 = vmatmul.mubr.bf16.gmra.mrb[0].mxu0 %v4176
      %v5383 = vpop.f32.mrb[0].mxu0
      %v5384 = vadd.f32 0.0, %v5383
      %v5385 = vpop.f32.mrb[0].mxu0
      %v5386 = vpop.f32.mrb[0].mxu0
      %v5387 = vadd.f32 0.0, %v5386
      %v5388 = vpop.f32.mrb[0].mxu0
      %5389 = vmatprep.mubr.bf16.mxu0 0
      %5390 = vmatmul.mubr.bf16.gmra.mrb[0].mxu0 %v4179
      %v5391 = vpop.f32.mrb[0].mxu0
      %v5392 = vadd.f32 0.0, %v5391
      %v5393 = vpop.f32.mrb[0].mxu0
      %v5394 = vpop.f32.mrb[0].mxu0
      %v5395 = vadd.f32 0.0, %v5394
      %v5396 = vpop.f32.mrb[0].mxu0
      %5397 = vmatprep.mubr.bf16.mxu0 0
      %5398 = vmatmul.mubr.bf16.gmra.mrb[0].mxu0 %v4182
      %v5399 = vpop.f32.mrb[0].mxu0
      %v5400 = vadd.f32 0.0, %v5399
      %v5401 = vpop.f32.mrb[0].mxu0
      %v5402 = vpop.f32.mrb[0].mxu0
      %v5403 = vadd.f32 0.0, %v5402
      %v5404 = vpop.f32.mrb[0].mxu0
      %5405 = vmatprep.mubr.bf16.mxu0 0
      %5406 = vmatmul.mubr.bf16.gmra.mrb[0].mxu0 %v4185
      %v5407 = vpop.f32.mrb[0].mxu0
      %v5408 = vadd.f32 0.0, %v5407
      %v5409 = vpop.f32.mrb[0].mxu0
      %v5410 = vpop.f32.mrb[0].mxu0
      %v5411 = vadd.f32 0.0, %v5410
      %v5412 = vpop.f32.mrb[0].mxu0
      %5413 = vmatprep.mubr.bf16.mxu0 0
      %5414 = vmatmul.mubr.bf16.gmra.mrb[0].mxu0 %v4188
      %v5415 = vpop.f32.mrb[0].mxu0
      %v5416 = vadd.f32 0.0, %v5415
      %v5417 = vpop.f32.mrb[0].mxu0
      %v5418 = vpop.f32.mrb[0].mxu0
      %v5419 = vadd.f32 0.0, %v5418
      %v5420 = vpop.f32.mrb[0].mxu0
      %5421 = vmatprep.mubr.bf16.mxu0 0
      %5422 = vmatmul.mubr.bf16.gmra.mrb[0].mxu0 %v4191
      %v5423 = vpop.f32.mrb[0].mxu0
      %v5424 = vadd.f32 0.0, %v5423
      %v5425 = vpop.f32.mrb[0].mxu0
      %v5426 = vpop.f32.mrb[0].mxu0
      %v5427 = vadd.f32 0.0, %v5426
      %v5428 = vpop.f32.mrb[0].mxu0
      %5429 = vmatprep.mubr.bf16.mxu0 0
      %5430 = vmatmul.mubr.bf16.gmra.mrb[0].mxu0 %v4194
      %v5431 = vpop.f32.mrb[0].mxu0
      %v5432 = vadd.f32 0.0, %v5431
      %v5433 = vpop.f32.mrb[0].mxu0
      %v5434 = vpop.f32.mrb[0].mxu0
      %v5435 = vadd.f32 0.0, %v5434
      %v5436 = vpop.f32.mrb[0].mxu0
      %5437 = vmatprep.mubr.bf16.mxu0 0
      %5438 = vmatmul.mubr.bf16.gmra.mrb[0].mxu0 %v4197
      %v5439 = vpop.f32.mrb[0].mxu0
      %v5440 = vadd.f32 0.0, %v5439
      %v5441 = vpop.f32.mrb[0].mxu0
      %v5442 = vpop.f32.mrb[0].mxu0
      %v5443 = vadd.f32 0.0, %v5442
      %v5444 = vpop.f32.mrb[0].mxu0
      %5445 = vmatprep.mubr.bf16.mxu0 0
      %5446 = vmatmul.mubr.bf16.gmra.mrb[0].mxu0 %v4200
      %v5447 = vpop.f32.mrb[0].mxu0
      %v5448 = vadd.f32 0.0, %v5447
      %v5449 = vpop.f32.mrb[0].mxu0
      %v5450 = vpop.f32.mrb[0].mxu0
      %v5451 = vadd.f32 0.0, %v5450
      %v5452 = vpop.f32.mrb[0].mxu0
      %5453 = vmatprep.mubr.bf16.mxu0 0
      %5454 = vmatmul.mubr.bf16.gmra.mrb[0].mxu0 %v4203
      %v5455 = vpop.f32.mrb[0].mxu0
      %v5456 = vadd.f32 0.0, %v5455
      %v5457 = vpop.f32.mrb[0].mxu0
      %v5458 = vpop.f32.mrb[0].mxu0
      %v5459 = vadd.f32 0.0, %v5458
      %v5460 = vpop.f32.mrb[0].mxu0
      %5461 = vmatprep.mubr.bf16.mxu0 0
      %5462 = vmatmul.mubr.bf16.gmra.mrb[0].mxu0 %v4206
      %v5463 = vpop.f32.mrb[0].mxu0
      %v5464 = vadd.f32 0.0, %v5463
      %v5465 = vpop.f32.mrb[0].mxu0
      %v5466 = vpop.f32.mrb[0].mxu0
      %v5467 = vadd.f32 0.0, %v5466
      %v5468 = vpop.f32.mrb[0].mxu0
      %5469 = vmatprep.mubr.bf16.mxu0 0
      %5470 = vmatmul.mubr.bf16.gmra.mrb[0].mxu0 %v4209
      %v5471 = vpop.f32.mrb[0].mxu0
      %v5472 = vadd.f32 0.0, %v5471
      %v5473 = vpop.f32.mrb[0].mxu0
      %v5474 = vpop.f32.mrb[0].mxu0
      %v5475 = vadd.f32 0.0, %v5474
      %v5476 = vpop.f32.mrb[0].mxu0
      %5477 = vmatprep.mubr.bf16.mxu0 0
      %5478 = vmatmul.mubr.bf16.gmra.mrb[0].mxu0 %v5320
      %v5479 = vpop.f32.mrb[0].mxu0
      %v5480 = vadd.f32 0.0, %v5479
      %v5481 = vpop.f32.mrb[0].mxu0
      %v5482 = vpop.f32.mrb[0].mxu0
      %v5483 = vadd.f32 0.0, %v5482
      %v5484 = vpop.f32.mrb[0].mxu0
      %5485 = vdwg.mxu0
      %v5486 = vadd.f32 %v5260, %v5360
      %v5487 = vadd.f32 %v5261, %v5363
      %v5488 = vadd.f32 %v5262, %v5368
      %v5489 = vadd.f32 %v5263, %v5371
      %v5490 = vadd.f32 %v5264, %v5376
      %v5491 = vadd.f32 %v5265, %v5379
      %v5492 = vadd.f32 %v5266, %v5384
      %v5493 = vadd.f32 %v5267, %v5387
      %v5494 = vadd.f32 %v5268, %v5392
      %v5495 = vadd.f32 %v5269, %v5395
      %v5496 = vadd.f32 %v5270, %v5400
      %v5497 = vadd.f32 %v5271, %v5403
      %v5498 = vadd.f32 %v5272, %v5408
      %v5499 = vadd.f32 %v5273, %v5411
      %v5500 = vadd.f32 %v5274, %v5416
      %v5501 = vadd.f32 %v5275, %v5419
      %v5502 = vadd.f32 %v5276, %v5424
      %v5503 = vadd.f32 %v5277, %v5427
      %v5504 = vadd.f32 %v5278, %v5432
      %v5505 = vadd.f32 %v5279, %v5435
      %v5506 = vadd.f32 %v5280, %v5440
      %v5507 = vadd.f32 %v5281, %v5443
      %v5508 = vadd.f32 %v5282, %v5448
      %v5509 = vadd.f32 %v5283, %v5451
      %v5510 = vadd.f32 %v5284, %v5456
      %v5511 = vadd.f32 %v5285, %v5459
      %v5512 = vadd.f32 %v5286, %v5464
      %v5513 = vadd.f32 %v5287, %v5467
      %v5514 = vadd.f32 %v5288, %v5472
      %v5515 = vadd.f32 %v5289, %v5475
      %v5516 = vadd.f32 %v5290, %v5480
      %v5517 = vadd.f32 %v5291, %v5483
      %v5519 = vrot.slane %v3714, 5
      %v5520 = vrot.slane %v5519, 4
      %v5521 = vrot.slane %v3715, 5
      %v5522 = vsel %vm1309, %v5520, %v5521
      %v5523 = vrot.slane %v5521, 4
      %v5524 = vrot.slane %v3716, 5
      %v5525 = vsel %vm1309, %v5523, %v5524
      %v5526 = vunpack.c.l.b16 %v5522
      %v5527 = vunpack.c.l.b16 %v5525
      %v5528 = vpack.c.b16 %v5527, %v5526
      %v5530 = vsel %vm4162, %v5528, 0
      %v5533 = vsel %vm4211, %v3725, 0
      %5535 = vmatprep.subr.bf16.mxu0 0
      %5536 = vmatpush1.bf16.msra.mxu0 %v5533
      %5537 = vmatprep.subr.bf16.mxu0 0
      %5538 = vmatpush1.bf16.msra.mxu0 0
      %5539 = vmatprep.subr.bf16.mxu0 0
      %5540 = vmatpush1.bf16.msra.mxu0 0
      %5541 = vmatprep.subr.bf16.mxu0 0
      %5542 = vmatpush1.bf16.msra.mxu0 0
      %5543 = vmatprep.subr.bf16.mxu0 0
      %5544 = vmatpush1.bf16.msra.mxu0 0
      %5545 = vmatprep.subr.bf16.mxu0 0
      %5546 = vmatpush1.bf16.msra.mxu0 0
      %5547 = vmatprep.subr.bf16.mxu0 0
      %5548 = vmatpush1.bf16.msra.mxu0 0
      %5549 = vmatprep.subr.bf16.mxu0 0
      %5550 = vmatpush1.bf16.msra.mxu0 0
      %5551 = vmatprep.subr.bf16.mxu0 0
      %5552 = vmatpush1.bf16.msra.mxu0 0
      %5553 = vmatprep.subr.bf16.mxu0 0
      %5554 = vmatpush1.bf16.msra.mxu0 0
      %5555 = vmatprep.subr.bf16.mxu0 0
      %5556 = vmatpush1.bf16.msra.mxu0 0
      %5557 = vmatprep.subr.bf16.mxu0 0
      %5558 = vmatpush1.bf16.msra.mxu0 0
      %5559 = vmatprep.subr.bf16.mxu0 0
      %5560 = vmatpush1.bf16.msra.mxu0 0
      %5561 = vmatprep.subr.bf16.mxu0 0
      %5562 = vmatpush1.bf16.msra.mxu0 0
      %5563 = vmatprep.subr.bf16.mxu0 0
      %5564 = vmatpush1.bf16.msra.mxu0 0
      %5565 = vmatprep.subr.bf16.mxu0 0
      %5566 = vmatpush1.bf16.msra.mxu0 0
      %5567 = vmatprep.mubr.bf16.mxu0 0
      %5568 = vmatmul.mubr.bf16.gmra.mrb[0].mxu0 %v4848
      %v5569 = vpop.f32.mrb[0].mxu0
      %v5570 = vadd.f32 0.0, %v5569
      %v5571 = vpop.f32.mrb[0].mxu0
      %v5572 = vpop.f32.mrb[0].mxu0
      %v5573 = vadd.f32 0.0, %v5572
      %v5574 = vpop.f32.mrb[0].mxu0
      %5575 = vmatprep.mubr.bf16.mxu0 0
      %5576 = vmatmul.mubr.bf16.gmra.mrb[0].mxu0 %v4851
      %v5577 = vpop.f32.mrb[0].mxu0
      %v5578 = vadd.f32 0.0, %v5577
      %v5579 = vpop.f32.mrb[0].mxu0
      %v5580 = vpop.f32.mrb[0].mxu0
      %v5581 = vadd.f32 0.0, %v5580
      %v5582 = vpop.f32.mrb[0].mxu0
      %5583 = vmatprep.mubr.bf16.mxu0 0
      %5584 = vmatmul.mubr.bf16.gmra.mrb[0].mxu0 %v4854
      %v5585 = vpop.f32.mrb[0].mxu0
      %v5586 = vadd.f32 0.0, %v5585
      %v5587 = vpop.f32.mrb[0].mxu0
      %v5588 = vpop.f32.mrb[0].mxu0
      %v5589 = vadd.f32 0.0, %v5588
      %v5590 = vpop.f32.mrb[0].mxu0
      %5591 = vmatprep.mubr.bf16.mxu0 0
      %5592 = vmatmul.mubr.bf16.gmra.mrb[0].mxu0 %v4857
      %v5593 = vpop.f32.mrb[0].mxu0
      %v5594 = vadd.f32 0.0, %v5593
      %v5595 = vpop.f32.mrb[0].mxu0
      %v5596 = vpop.f32.mrb[0].mxu0
      %v5597 = vadd.f32 0.0, %v5596
      %v5598 = vpop.f32.mrb[0].mxu0
      %5599 = vmatprep.mubr.bf16.mxu0 0
      %5600 = vmatmul.mubr.bf16.gmra.mrb[0].mxu0 %v4860
      %v5601 = vpop.f32.mrb[0].mxu0
      %v5602 = vadd.f32 0.0, %v5601
      %v5603 = vpop.f32.mrb[0].mxu0
      %v5604 = vpop.f32.mrb[0].mxu0
      %v5605 = vadd.f32 0.0, %v5604
      %v5606 = vpop.f32.mrb[0].mxu0
      %5607 = vmatprep.mubr.bf16.mxu0 0
      %5608 = vmatmul.mubr.bf16.gmra.mrb[0].mxu0 %v4863
      %v5609 = vpop.f32.mrb[0].mxu0
      %v5610 = vadd.f32 0.0, %v5609
      %v5611 = vpop.f32.mrb[0].mxu0
      %v5612 = vpop.f32.mrb[0].mxu0
      %v5613 = vadd.f32 0.0, %v5612
      %v5614 = vpop.f32.mrb[0].mxu0
      %5615 = vmatprep.mubr.bf16.mxu0 0
      %5616 = vmatmul.mubr.bf16.gmra.mrb[0].mxu0 %v4866
      %v5617 = vpop.f32.mrb[0].mxu0
      %v5618 = vadd.f32 0.0, %v5617
      %v5619 = vpop.f32.mrb[0].mxu0
      %v5620 = vpop.f32.mrb[0].mxu0
      %v5621 = vadd.f32 0.0, %v5620
      %v5622 = vpop.f32.mrb[0].mxu0
      %5623 = vmatprep.mubr.bf16.mxu0 0
      %5624 = vmatmul.mubr.bf16.gmra.mrb[0].mxu0 %v4869
      %v5625 = vpop.f32.mrb[0].mxu0
      %v5626 = vadd.f32 0.0, %v5625
      %v5627 = vpop.f32.mrb[0].mxu0
      %v5628 = vpop.f32.mrb[0].mxu0
      %v5629 = vadd.f32 0.0, %v5628
      %v5630 = vpop.f32.mrb[0].mxu0
      %5631 = vmatprep.mubr.bf16.mxu0 0
      %5632 = vmatmul.mubr.bf16.gmra.mrb[0].mxu0 %v4872
      %v5633 = vpop.f32.mrb[0].mxu0
      %v5634 = vadd.f32 0.0, %v5633
      %v5635 = vpop.f32.mrb[0].mxu0
      %v5636 = vpop.f32.mrb[0].mxu0
      %v5637 = vadd.f32 0.0, %v5636
      %v5638 = vpop.f32.mrb[0].mxu0
      %5639 = vmatprep.mubr.bf16.mxu0 0
      %5640 = vmatmul.mubr.bf16.gmra.mrb[0].mxu0 %v4875
      %v5641 = vpop.f32.mrb[0].mxu0
      %v5642 = vadd.f32 0.0, %v5641
      %v5643 = vpop.f32.mrb[0].mxu0
      %v5644 = vpop.f32.mrb[0].mxu0
      %v5645 = vadd.f32 0.0, %v5644
      %v5646 = vpop.f32.mrb[0].mxu0
      %5647 = vmatprep.mubr.bf16.mxu0 0
      %5648 = vmatmul.mubr.bf16.gmra.mrb[0].mxu0 %v4878
      %v5649 = vpop.f32.mrb[0].mxu0
      %v5650 = vadd.f32 0.0, %v5649
      %v5651 = vpop.f32.mrb[0].mxu0
      %v5652 = vpop.f32.mrb[0].mxu0
      %v5653 = vadd.f32 0.0, %v5652
      %v5654 = vpop.f32.mrb[0].mxu0
      %5655 = vmatprep.mubr.bf16.mxu0 0
      %5656 = vmatmul.mubr.bf16.gmra.mrb[0].mxu0 %v4881
      %v5657 = vpop.f32.mrb[0].mxu0
      %v5658 = vadd.f32 0.0, %v5657
      %v5659 = vpop.f32.mrb[0].mxu0
      %v5660 = vpop.f32.mrb[0].mxu0
      %v5661 = vadd.f32 0.0, %v5660
      %v5662 = vpop.f32.mrb[0].mxu0
      %5663 = vmatprep.mubr.bf16.mxu0 0
      %5664 = vmatmul.mubr.bf16.gmra.mrb[0].mxu0 %v4884
      %v5665 = vpop.f32.mrb[0].mxu0
      %v5666 = vadd.f32 0.0, %v5665
      %v5667 = vpop.f32.mrb[0].mxu0
      %v5668 = vpop.f32.mrb[0].mxu0
      %v5669 = vadd.f32 0.0, %v5668
      %v5670 = vpop.f32.mrb[0].mxu0
      %5671 = vmatprep.mubr.bf16.mxu0 0
      %5672 = vmatmul.mubr.bf16.gmra.mrb[0].mxu0 %v4887
      %v5673 = vpop.f32.mrb[0].mxu0
      %v5674 = vadd.f32 0.0, %v5673
      %v5675 = vpop.f32.mrb[0].mxu0
      %v5676 = vpop.f32.mrb[0].mxu0
      %v5677 = vadd.f32 0.0, %v5676
      %v5678 = vpop.f32.mrb[0].mxu0
      %5679 = vmatprep.mubr.bf16.mxu0 0
      %5680 = vmatmul.mubr.bf16.gmra.mrb[0].mxu0 %v4890
      %v5681 = vpop.f32.mrb[0].mxu0
      %v5682 = vadd.f32 0.0, %v5681
      %v5683 = vpop.f32.mrb[0].mxu0
      %v5684 = vpop.f32.mrb[0].mxu0
      %v5685 = vadd.f32 0.0, %v5684
      %v5686 = vpop.f32.mrb[0].mxu0
      %5687 = vmatprep.mubr.bf16.mxu0 0
      %5688 = vmatmul.mubr.bf16.gmra.mrb[0].mxu0 %v5530
      %v5689 = vpop.f32.mrb[0].mxu0
      %v5690 = vadd.f32 0.0, %v5689
      %v5691 = vpop.f32.mrb[0].mxu0
      %v5692 = vpop.f32.mrb[0].mxu0
      %v5693 = vadd.f32 0.0, %v5692
      %v5694 = vpop.f32.mrb[0].mxu0
      %5695 = vdwg.mxu0
      %v5696 = vadd.f32 %v5486, %v5570
      %v5697 = vadd.f32 %v5487, %v5573
      %v5698 = vadd.f32 %v5488, %v5578
      %v5699 = vadd.f32 %v5489, %v5581
      %v5700 = vadd.f32 %v5490, %v5586
      %v5701 = vadd.f32 %v5491, %v5589
      %v5702 = vadd.f32 %v5492, %v5594
      %v5703 = vadd.f32 %v5493, %v5597
      %v5704 = vadd.f32 %v5494, %v5602
      %v5705 = vadd.f32 %v5495, %v5605
      %v5706 = vadd.f32 %v5496, %v5610
      %v5707 = vadd.f32 %v5497, %v5613
      %v5708 = vadd.f32 %v5498, %v5618
      %v5709 = vadd.f32 %v5499, %v5621
      %v5710 = vadd.f32 %v5500, %v5626
      %v5711 = vadd.f32 %v5501, %v5629
      %v5712 = vadd.f32 %v5502, %v5634
      %v5713 = vadd.f32 %v5503, %v5637
      %v5714 = vadd.f32 %v5504, %v5642
      %v5715 = vadd.f32 %v5505, %v5645
      %v5716 = vadd.f32 %v5506, %v5650
      %v5717 = vadd.f32 %v5507, %v5653
      %v5718 = vadd.f32 %v5508, %v5658
      %v5719 = vadd.f32 %v5509, %v5661
      %v5720 = vadd.f32 %v5510, %v5666
      %v5721 = vadd.f32 %v5511, %v5669
      %v5722 = vadd.f32 %v5512, %v5674
      %v5723 = vadd.f32 %v5513, %v5677
      %v5724 = vadd.f32 %v5514, %v5682
      %v5725 = vadd.f32 %v5515, %v5685
      %v5726 = vadd.f32 %v5516, %v5690
      %v5727 = vadd.f32 %v5517, %v5693
      %v5730 = vunpack.c.l.b16 %v3717
      %v5731 = vunpack.c.l.b16 %v3718
      %v5732 = vpack.c.b16 %v5731, %v5730
      %v5734 = vsel %vm4162, %v5732, 0
      %v5737 = vsel %vm4211, %v3726, 0
      %5739 = vmatprep.subr.bf16.mxu0 0
      %5740 = vmatpush1.bf16.msra.mxu0 %v5737
      %5741 = vmatprep.subr.bf16.mxu0 0
      %5742 = vmatpush1.bf16.msra.mxu0 0
      %5743 = vmatprep.subr.bf16.mxu0 0
      %5744 = vmatpush1.bf16.msra.mxu0 0
      %5745 = vmatprep.subr.bf16.mxu0 0
      %5746 = vmatpush1.bf16.msra.mxu0 0
      %5747 = vmatprep.subr.bf16.mxu0 0
      %5748 = vmatpush1.bf16.msra.mxu0 0
      %5749 = vmatprep.subr.bf16.mxu0 0
      %5750 = vmatpush1.bf16.msra.mxu0 0
      %5751 = vmatprep.subr.bf16.mxu0 0
      %5752 = vmatpush1.bf16.msra.mxu0 0
      %5753 = vmatprep.subr.bf16.mxu0 0
      %5754 = vmatpush1.bf16.msra.mxu0 0
      %5755 = vmatprep.subr.bf16.mxu0 0
      %5756 = vmatpush1.bf16.msra.mxu0 0
      %5757 = vmatprep.subr.bf16.mxu0 0
      %5758 = vmatpush1.bf16.msra.mxu0 0
      %5759 = vmatprep.subr.bf16.mxu0 0
      %5760 = vmatpush1.bf16.msra.mxu0 0
      %5761 = vmatprep.subr.bf16.mxu0 0
      %5762 = vmatpush1.bf16.msra.mxu0 0
      %5763 = vmatprep.subr.bf16.mxu0 0
      %5764 = vmatpush1.bf16.msra.mxu0 0
      %5765 = vmatprep.subr.bf16.mxu0 0
      %5766 = vmatpush1.bf16.msra.mxu0 0
      %5767 = vmatprep.subr.bf16.mxu0 0
      %5768 = vmatpush1.bf16.msra.mxu0 0
      %5769 = vmatprep.subr.bf16.mxu0 0
      %5770 = vmatpush1.bf16.msra.mxu0 0
      %5771 = vmatprep.mubr.bf16.mxu0 0
      %5772 = vmatmul.mubr.bf16.gmra.mrb[0].mxu0 %v4463
      %v5773 = vpop.f32.mrb[0].mxu0
      %v5774 = vadd.f32 0.0, %v5773
      %v5775 = vpop.f32.mrb[0].mxu0
      %v5776 = vpop.f32.mrb[0].mxu0
      %v5777 = vadd.f32 0.0, %v5776
      %v5778 = vpop.f32.mrb[0].mxu0
      %5779 = vmatprep.mubr.bf16.mxu0 0
      %5780 = vmatmul.mubr.bf16.gmra.mrb[0].mxu0 %v4466
      %v5781 = vpop.f32.mrb[0].mxu0
      %v5782 = vadd.f32 0.0, %v5781
      %v5783 = vpop.f32.mrb[0].mxu0
      %v5784 = vpop.f32.mrb[0].mxu0
      %v5785 = vadd.f32 0.0, %v5784
      %v5786 = vpop.f32.mrb[0].mxu0
      %5787 = vmatprep.mubr.bf16.mxu0 0
      %5788 = vmatmul.mubr.bf16.gmra.mrb[0].mxu0 %v4469
      %v5789 = vpop.f32.mrb[0].mxu0
      %v5790 = vadd.f32 0.0, %v5789
      %v5791 = vpop.f32.mrb[0].mxu0
      %v5792 = vpop.f32.mrb[0].mxu0
      %v5793 = vadd.f32 0.0, %v5792
      %v5794 = vpop.f32.mrb[0].mxu0
      %5795 = vmatprep.mubr.bf16.mxu0 0
      %5796 = vmatmul.mubr.bf16.gmra.mrb[0].mxu0 %v4472
      %v5797 = vpop.f32.mrb[0].mxu0
      %v5798 = vadd.f32 0.0, %v5797
      %v5799 = vpop.f32.mrb[0].mxu0
      %v5800 = vpop.f32.mrb[0].mxu0
      %v5801 = vadd.f32 0.0, %v5800
      %v5802 = vpop.f32.mrb[0].mxu0
      %5803 = vmatprep.mubr.bf16.mxu0 0
      %5804 = vmatmul.mubr.bf16.gmra.mrb[0].mxu0 %v4475
      %v5805 = vpop.f32.mrb[0].mxu0
      %v5806 = vadd.f32 0.0, %v5805
      %v5807 = vpop.f32.mrb[0].mxu0
      %v5808 = vpop.f32.mrb[0].mxu0
      %v5809 = vadd.f32 0.0, %v5808
      %v5810 = vpop.f32.mrb[0].mxu0
      %5811 = vmatprep.mubr.bf16.mxu0 0
      %5812 = vmatmul.mubr.bf16.gmra.mrb[0].mxu0 %v4478
      %v5813 = vpop.f32.mrb[0].mxu0
      %v5814 = vadd.f32 0.0, %v5813
      %v5815 = vpop.f32.mrb[0].mxu0
      %v5816 = vpop.f32.mrb[0].mxu0
      %v5817 = vadd.f32 0.0, %v5816
      %v5818 = vpop.f32.mrb[0].mxu0
      %5819 = vmatprep.mubr.bf16.mxu0 0
      %5820 = vmatmul.mubr.bf16.gmra.mrb[0].mxu0 %v4481
      %v5821 = vpop.f32.mrb[0].mxu0
      %v5822 = vadd.f32 0.0, %v5821
      %v5823 = vpop.f32.mrb[0].mxu0
      %v5824 = vpop.f32.mrb[0].mxu0
      %v5825 = vadd.f32 0.0, %v5824
      %v5826 = vpop.f32.mrb[0].mxu0
      %5827 = vmatprep.mubr.bf16.mxu0 0
      %5828 = vmatmul.mubr.bf16.gmra.mrb[0].mxu0 %v4484
      %v5829 = vpop.f32.mrb[0].mxu0
      %v5830 = vadd.f32 0.0, %v5829
      %v5831 = vpop.f32.mrb[0].mxu0
      %v5832 = vpop.f32.mrb[0].mxu0
      %v5833 = vadd.f32 0.0, %v5832
      %v5834 = vpop.f32.mrb[0].mxu0
      %5835 = vmatprep.mubr.bf16.mxu0 0
      %5836 = vmatmul.mubr.bf16.gmra.mrb[0].mxu0 %v4487
      %v5837 = vpop.f32.mrb[0].mxu0
      %v5838 = vadd.f32 0.0, %v5837
      %v5839 = vpop.f32.mrb[0].mxu0
      %v5840 = vpop.f32.mrb[0].mxu0
      %v5841 = vadd.f32 0.0, %v5840
      %v5842 = vpop.f32.mrb[0].mxu0
      %5843 = vmatprep.mubr.bf16.mxu0 0
      %5844 = vmatmul.mubr.bf16.gmra.mrb[0].mxu0 %v4490
      %v5845 = vpop.f32.mrb[0].mxu0
      %v5846 = vadd.f32 0.0, %v5845
      %v5847 = vpop.f32.mrb[0].mxu0
      %v5848 = vpop.f32.mrb[0].mxu0
      %v5849 = vadd.f32 0.0, %v5848
      %v5850 = vpop.f32.mrb[0].mxu0
      %5851 = vmatprep.mubr.bf16.mxu0 0
      %5852 = vmatmul.mubr.bf16.gmra.mrb[0].mxu0 %v4493
      %v5853 = vpop.f32.mrb[0].mxu0
      %v5854 = vadd.f32 0.0, %v5853
      %v5855 = vpop.f32.mrb[0].mxu0
      %v5856 = vpop.f32.mrb[0].mxu0
      %v5857 = vadd.f32 0.0, %v5856
      %v5858 = vpop.f32.mrb[0].mxu0
      %5859 = vmatprep.mubr.bf16.mxu0 0
      %5860 = vmatmul.mubr.bf16.gmra.mrb[0].mxu0 %v4496
      %v5861 = vpop.f32.mrb[0].mxu0
      %v5862 = vadd.f32 0.0, %v5861
      %v5863 = vpop.f32.mrb[0].mxu0
      %v5864 = vpop.f32.mrb[0].mxu0
      %v5865 = vadd.f32 0.0, %v5864
      %v5866 = vpop.f32.mrb[0].mxu0
      %5867 = vmatprep.mubr.bf16.mxu0 0
      %5868 = vmatmul.mubr.bf16.gmra.mrb[0].mxu0 %v4499
      %v5869 = vpop.f32.mrb[0].mxu0
      %v5870 = vadd.f32 0.0, %v5869
      %v5871 = vpop.f32.mrb[0].mxu0
      %v5872 = vpop.f32.mrb[0].mxu0
      %v5873 = vadd.f32 0.0, %v5872
      %v5874 = vpop.f32.mrb[0].mxu0
      %5875 = vmatprep.mubr.bf16.mxu0 0
      %5876 = vmatmul.mubr.bf16.gmra.mrb[0].mxu0 %v4502
      %v5877 = vpop.f32.mrb[0].mxu0
      %v5878 = vadd.f32 0.0, %v5877
      %v5879 = vpop.f32.mrb[0].mxu0
      %v5880 = vpop.f32.mrb[0].mxu0
      %v5881 = vadd.f32 0.0, %v5880
      %v5882 = vpop.f32.mrb[0].mxu0
      %5883 = vmatprep.mubr.bf16.mxu0 0
      %5884 = vmatmul.mubr.bf16.gmra.mrb[0].mxu0 %v5094
      %v5885 = vpop.f32.mrb[0].mxu0
      %v5886 = vadd.f32 0.0, %v5885
      %v5887 = vpop.f32.mrb[0].mxu0
      %v5888 = vpop.f32.mrb[0].mxu0
      %v5889 = vadd.f32 0.0, %v5888
      %v5890 = vpop.f32.mrb[0].mxu0
      %5891 = vmatprep.mubr.bf16.mxu0 0
      %5892 = vmatmul.mubr.bf16.gmra.mrb[0].mxu0 %v5734
      %v5893 = vpop.f32.mrb[0].mxu0
      %v5894 = vadd.f32 0.0, %v5893
      %v5895 = vpop.f32.mrb[0].mxu0
      %v5896 = vpop.f32.mrb[0].mxu0
      %v5897 = vadd.f32 0.0, %v5896
      %v5898 = vpop.f32.mrb[0].mxu0
      %5899 = vdwg.mxu0
      %v5900 = vadd.f32 %v5696, %v5774
      %v5901 = vadd.f32 %v5697, %v5777
      %v5902 = vadd.f32 %v5698, %v5782
      %v5903 = vadd.f32 %v5699, %v5785
      %v5904 = vadd.f32 %v5700, %v5790
      %v5905 = vadd.f32 %v5701, %v5793
      %v5906 = vadd.f32 %v5702, %v5798
      %v5907 = vadd.f32 %v5703, %v5801
      %v5908 = vadd.f32 %v5704, %v5806
      %v5909 = vadd.f32 %v5705, %v5809
      %v5910 = vadd.f32 %v5706, %v5814
      %v5911 = vadd.f32 %v5707, %v5817
      %v5912 = vadd.f32 %v5708, %v5822
      %v5913 = vadd.f32 %v5709, %v5825
      %v5914 = vadd.f32 %v5710, %v5830
      %v5915 = vadd.f32 %v5711, %v5833
      %v5916 = vadd.f32 %v5712, %v5838
      %v5917 = vadd.f32 %v5713, %v5841
      %v5918 = vadd.f32 %v5714, %v5846
      %v5919 = vadd.f32 %v5715, %v5849
      %v5920 = vadd.f32 %v5716, %v5854
      %v5921 = vadd.f32 %v5717, %v5857
      %v5922 = vadd.f32 %v5718, %v5862
      %v5923 = vadd.f32 %v5719, %v5865
      %v5924 = vadd.f32 %v5720, %v5870
      %v5925 = vadd.f32 %v5721, %v5873
      %v5926 = vadd.f32 %v5722, %v5878
      %v5927 = vadd.f32 %v5723, %v5881
      %v5928 = vadd.f32 %v5724, %v5886
      %v5929 = vadd.f32 %v5725, %v5889
      %v5930 = vadd.f32 %v5726, %v5894
      %v5931 = vadd.f32 %v5727, %v5897
      %v5933 = vshrl.u32 %v3717, 16
      %v5935 = vrot.slane %v5933, 4
      %v5936 = vshll.u32 %v3717, 16
      %v5938 = vrot.slane %v5936, 5
      %v5939 = vor.u32 %v5935, %v5938
      %v5940 = vrot.slane %v5939, 4
      %v5942 = vshll.u32 %v3718, 16
      %v5944 = vrot.slane %v5942, 5
      %v5945 = vsel %vm352, %v5940, %v5944
      %v5946 = vshrl.u32 %v3718, 16
      %v5948 = vrot.slane %v5946, 4
      %v5949 = vor.u32 %v5948, %v5944
      %v5950 = vrot.slane %v5949, 4
      %v5952 = vshll.u32 %v3719, 16
      %v5954 = vrot.slane %v5952, 5
      %v5955 = vsel %vm352, %v5950, %v5954
      %v5956 = vunpack.c.l.b16 %v5945
      %v5957 = vunpack.c.l.b16 %v5955
      %v5958 = vpack.c.b16 %v5957, %v5956
      %v5960 = vsel %vm4162, %v5958, 0
      %v5963 = vsel %vm4211, %v3727, 0
      %5965 = vmatprep.subr.bf16.mxu0 0
      %5966 = vmatpush1.bf16.msra.mxu0 %v5963
      %5967 = vmatprep.subr.bf16.mxu0 0
      %5968 = vmatpush1.bf16.msra.mxu0 0
      %5969 = vmatprep.subr.bf16.mxu0 0
      %5970 = vmatpush1.bf16.msra.mxu0 0
      %5971 = vmatprep.subr.bf16.mxu0 0
      %5972 = vmatpush1.bf16.msra.mxu0 0
      %5973 = vmatprep.subr.bf16.mxu0 0
      %5974 = vmatpush1.bf16.msra.mxu0 0
      %5975 = vmatprep.subr.bf16.mxu0 0
      %5976 = vmatpush1.bf16.msra.mxu0 0
      %5977 = vmatprep.subr.bf16.mxu0 0
      %5978 = vmatpush1.bf16.msra.mxu0 0
      %5979 = vmatprep.subr.bf16.mxu0 0
      %5980 = vmatpush1.bf16.msra.mxu0 0
      %5981 = vmatprep.subr.bf16.mxu0 0
      %5982 = vmatpush1.bf16.msra.mxu0 0
      %5983 = vmatprep.subr.bf16.mxu0 0
      %5984 = vmatpush1.bf16.msra.mxu0 0
      %5985 = vmatprep.subr.bf16.mxu0 0
      %5986 = vmatpush1.bf16.msra.mxu0 0
      %5987 = vmatprep.subr.bf16.mxu0 0
      %5988 = vmatpush1.bf16.msra.mxu0 0
      %5989 = vmatprep.subr.bf16.mxu0 0
      %5990 = vmatpush1.bf16.msra.mxu0 0
      %5991 = vmatprep.subr.bf16.mxu0 0
      %5992 = vmatpush1.bf16.msra.mxu0 0
      %5993 = vmatprep.subr.bf16.mxu0 0
      %5994 = vmatpush1.bf16.msra.mxu0 0
      %5995 = vmatprep.subr.bf16.mxu0 0
      %5996 = vmatpush1.bf16.msra.mxu0 0
      %5997 = vmatprep.mubr.bf16.mxu0 0
      %5998 = vmatmul.mubr.bf16.gmra.mrb[0].mxu0 %v4170
      %v5999 = vpop.f32.mrb[0].mxu0
      %v6000 = vadd.f32 0.0, %v5999
      %v6001 = vpop.f32.mrb[0].mxu0
      %v6002 = vpop.f32.mrb[0].mxu0
      %v6003 = vadd.f32 0.0, %v6002
      %v6004 = vpop.f32.mrb[0].mxu0
      %6005 = vmatprep.mubr.bf16.mxu0 0
      %6006 = vmatmul.mubr.bf16.gmra.mrb[0].mxu0 %v4173
      %v6007 = vpop.f32.mrb[0].mxu0
      %v6008 = vadd.f32 0.0, %v6007
      %v6009 = vpop.f32.mrb[0].mxu0
      %v6010 = vpop.f32.mrb[0].mxu0
      %v6011 = vadd.f32 0.0, %v6010
      %v6012 = vpop.f32.mrb[0].mxu0
      %6013 = vmatprep.mubr.bf16.mxu0 0
      %6014 = vmatmul.mubr.bf16.gmra.mrb[0].mxu0 %v4176
      %v6015 = vpop.f32.mrb[0].mxu0
      %v6016 = vadd.f32 0.0, %v6015
      %v6017 = vpop.f32.mrb[0].mxu0
      %v6018 = vpop.f32.mrb[0].mxu0
      %v6019 = vadd.f32 0.0, %v6018
      %v6020 = vpop.f32.mrb[0].mxu0
      %6021 = vmatprep.mubr.bf16.mxu0 0
      %6022 = vmatmul.mubr.bf16.gmra.mrb[0].mxu0 %v4179
      %v6023 = vpop.f32.mrb[0].mxu0
      %v6024 = vadd.f32 0.0, %v6023
      %v6025 = vpop.f32.mrb[0].mxu0
      %v6026 = vpop.f32.mrb[0].mxu0
      %v6027 = vadd.f32 0.0, %v6026
      %v6028 = vpop.f32.mrb[0].mxu0
      %6029 = vmatprep.mubr.bf16.mxu0 0
      %6030 = vmatmul.mubr.bf16.gmra.mrb[0].mxu0 %v4182
      %v6031 = vpop.f32.mrb[0].mxu0
      %v6032 = vadd.f32 0.0, %v6031
      %v6033 = vpop.f32.mrb[0].mxu0
      %v6034 = vpop.f32.mrb[0].mxu0
      %v6035 = vadd.f32 0.0, %v6034
      %v6036 = vpop.f32.mrb[0].mxu0
      %6037 = vmatprep.mubr.bf16.mxu0 0
      %6038 = vmatmul.mubr.bf16.gmra.mrb[0].mxu0 %v4185
      %v6039 = vpop.f32.mrb[0].mxu0
      %v6040 = vadd.f32 0.0, %v6039
      %v6041 = vpop.f32.mrb[0].mxu0
      %v6042 = vpop.f32.mrb[0].mxu0
      %v6043 = vadd.f32 0.0, %v6042
      %v6044 = vpop.f32.mrb[0].mxu0
      %6045 = vmatprep.mubr.bf16.mxu0 0
      %6046 = vmatmul.mubr.bf16.gmra.mrb[0].mxu0 %v4188
      %v6047 = vpop.f32.mrb[0].mxu0
      %v6048 = vadd.f32 0.0, %v6047
      %v6049 = vpop.f32.mrb[0].mxu0
      %v6050 = vpop.f32.mrb[0].mxu0
      %v6051 = vadd.f32 0.0, %v6050
      %v6052 = vpop.f32.mrb[0].mxu0
      %6053 = vmatprep.mubr.bf16.mxu0 0
      %6054 = vmatmul.mubr.bf16.gmra.mrb[0].mxu0 %v4191
      %v6055 = vpop.f32.mrb[0].mxu0
      %v6056 = vadd.f32 0.0, %v6055
      %v6057 = vpop.f32.mrb[0].mxu0
      %v6058 = vpop.f32.mrb[0].mxu0
      %v6059 = vadd.f32 0.0, %v6058
      %v6060 = vpop.f32.mrb[0].mxu0
      %6061 = vmatprep.mubr.bf16.mxu0 0
      %6062 = vmatmul.mubr.bf16.gmra.mrb[0].mxu0 %v4194
      %v6063 = vpop.f32.mrb[0].mxu0
      %v6064 = vadd.f32 0.0, %v6063
      %v6065 = vpop.f32.mrb[0].mxu0
      %v6066 = vpop.f32.mrb[0].mxu0
      %v6067 = vadd.f32 0.0, %v6066
      %v6068 = vpop.f32.mrb[0].mxu0
      %6069 = vmatprep.mubr.bf16.mxu0 0
      %6070 = vmatmul.mubr.bf16.gmra.mrb[0].mxu0 %v4197
      %v6071 = vpop.f32.mrb[0].mxu0
      %v6072 = vadd.f32 0.0, %v6071
      %v6073 = vpop.f32.mrb[0].mxu0
      %v6074 = vpop.f32.mrb[0].mxu0
      %v6075 = vadd.f32 0.0, %v6074
      %v6076 = vpop.f32.mrb[0].mxu0
      %6077 = vmatprep.mubr.bf16.mxu0 0
      %6078 = vmatmul.mubr.bf16.gmra.mrb[0].mxu0 %v4200
      %v6079 = vpop.f32.mrb[0].mxu0
      %v6080 = vadd.f32 0.0, %v6079
      %v6081 = vpop.f32.mrb[0].mxu0
      %v6082 = vpop.f32.mrb[0].mxu0
      %v6083 = vadd.f32 0.0, %v6082
      %v6084 = vpop.f32.mrb[0].mxu0
      %6085 = vmatprep.mubr.bf16.mxu0 0
      %6086 = vmatmul.mubr.bf16.gmra.mrb[0].mxu0 %v4203
      %v6087 = vpop.f32.mrb[0].mxu0
      %v6088 = vadd.f32 0.0, %v6087
      %v6089 = vpop.f32.mrb[0].mxu0
      %v6090 = vpop.f32.mrb[0].mxu0
      %v6091 = vadd.f32 0.0, %v6090
      %v6092 = vpop.f32.mrb[0].mxu0
      %6093 = vmatprep.mubr.bf16.mxu0 0
      %6094 = vmatmul.mubr.bf16.gmra.mrb[0].mxu0 %v4206
      %v6095 = vpop.f32.mrb[0].mxu0
      %v6096 = vadd.f32 0.0, %v6095
      %v6097 = vpop.f32.mrb[0].mxu0
      %v6098 = vpop.f32.mrb[0].mxu0
      %v6099 = vadd.f32 0.0, %v6098
      %v6100 = vpop.f32.mrb[0].mxu0
      %6101 = vmatprep.mubr.bf16.mxu0 0
      %6102 = vmatmul.mubr.bf16.gmra.mrb[0].mxu0 %v4209
      %v6103 = vpop.f32.mrb[0].mxu0
      %v6104 = vadd.f32 0.0, %v6103
      %v6105 = vpop.f32.mrb[0].mxu0
      %v6106 = vpop.f32.mrb[0].mxu0
      %v6107 = vadd.f32 0.0, %v6106
      %v6108 = vpop.f32.mrb[0].mxu0
      %6109 = vmatprep.mubr.bf16.mxu0 0
      %6110 = vmatmul.mubr.bf16.gmra.mrb[0].mxu0 %v5320
      %v6111 = vpop.f32.mrb[0].mxu0
      %v6112 = vadd.f32 0.0, %v6111
      %v6113 = vpop.f32.mrb[0].mxu0
      %v6114 = vpop.f32.mrb[0].mxu0
      %v6115 = vadd.f32 0.0, %v6114
      %v6116 = vpop.f32.mrb[0].mxu0
      %6117 = vmatprep.mubr.bf16.mxu0 0
      %6118 = vmatmul.mubr.bf16.gmra.mrb[0].mxu0 %v5960
      %v6119 = vpop.f32.mrb[0].mxu0
      %v6120 = vadd.f32 0.0, %v6119
      %v6121 = vpop.f32.mrb[0].mxu0
      %v6122 = vpop.f32.mrb[0].mxu0
      %v6123 = vadd.f32 0.0, %v6122
      %v6124 = vpop.f32.mrb[0].mxu0
      %6125 = vdwg.mxu0
      %v6126 = vadd.f32 %v5900, %v6000
      %v6127 = vadd.f32 %v5901, %v6003
      %v6128 = vadd.f32 %v5902, %v6008
      %v6129 = vadd.f32 %v5903, %v6011
      %v6130 = vadd.f32 %v5904, %v6016
      %v6131 = vadd.f32 %v5905, %v6019
      %v6132 = vadd.f32 %v5906, %v6024
      %v6133 = vadd.f32 %v5907, %v6027
      %v6134 = vadd.f32 %v5908, %v6032
      %v6135 = vadd.f32 %v5909, %v6035
      %v6136 = vadd.f32 %v5910, %v6040
      %v6137 = vadd.f32 %v5911, %v6043
      %v6138 = vadd.f32 %v5912, %v6048
      %v6139 = vadd.f32 %v5913, %v6051
      %v6140 = vadd.f32 %v5914, %v6056
      %v6141 = vadd.f32 %v5915, %v6059
      %v6142 = vadd.f32 %v5916, %v6064
      %v6143 = vadd.f32 %v5917, %v6067
      %v6144 = vadd.f32 %v5918, %v6072
      %v6145 = vadd.f32 %v5919, %v6075
      %v6146 = vadd.f32 %v5920, %v6080
      %v6147 = vadd.f32 %v5921, %v6083
      %v6148 = vadd.f32 %v5922, %v6088
      %v6149 = vadd.f32 %v5923, %v6091
      %v6150 = vadd.f32 %v5924, %v6096
      %v6151 = vadd.f32 %v5925, %v6099
      %v6152 = vadd.f32 %v5926, %v6104
      %v6153 = vadd.f32 %v5927, %v6107
      %v6154 = vadd.f32 %v5928, %v6112
      %v6155 = vadd.f32 %v5929, %v6115
      %v6156 = vadd.f32 %v5930, %v6120
      %v6157 = vadd.f32 %v5931, %v6123
      %v6159 = vrot.slane %v3717, 5
      %v6160 = vrot.slane %v6159, 4
      %v6161 = vrot.slane %v3718, 5
      %v6162 = vsel %vm1309, %v6160, %v6161
      %v6163 = vrot.slane %v6161, 4
      %v6164 = vrot.slane %v3719, 5
      %v6165 = vsel %vm1309, %v6163, %v6164
      %v6166 = vunpack.c.l.b16 %v6162
      %v6167 = vunpack.c.l.b16 %v6165
      %v6168 = vpack.c.b16 %v6167, %v6166
      %v6170 = vsel %vm4162, %v6168, 0
      %v6173 = vsel %vm4211, %v3728, 0
      %6175 = vmatprep.subr.bf16.mxu0 0
      %6176 = vmatpush1.bf16.msra.mxu0 %v6173
      %6177 = vmatprep.subr.bf16.mxu0 0
      %6178 = vmatpush1.bf16.msra.mxu0 0
      %6179 = vmatprep.subr.bf16.mxu0 0
      %6180 = vmatpush1.bf16.msra.mxu0 0
      %6181 = vmatprep.subr.bf16.mxu0 0
      %6182 = vmatpush1.bf16.msra.mxu0 0
      %6183 = vmatprep.subr.bf16.mxu0 0
      %6184 = vmatpush1.bf16.msra.mxu0 0
      %6185 = vmatprep.subr.bf16.mxu0 0
      %6186 = vmatpush1.bf16.msra.mxu0 0
      %6187 = vmatprep.subr.bf16.mxu0 0
      %6188 = vmatpush1.bf16.msra.mxu0 0
      %6189 = vmatprep.subr.bf16.mxu0 0
      %6190 = vmatpush1.bf16.msra.mxu0 0
      %6191 = vmatprep.subr.bf16.mxu0 0
      %6192 = vmatpush1.bf16.msra.mxu0 0
      %6193 = vmatprep.subr.bf16.mxu0 0
      %6194 = vmatpush1.bf16.msra.mxu0 0
      %6195 = vmatprep.subr.bf16.mxu0 0
      %6196 = vmatpush1.bf16.msra.mxu0 0
      %6197 = vmatprep.subr.bf16.mxu0 0
      %6198 = vmatpush1.bf16.msra.mxu0 0
      %6199 = vmatprep.subr.bf16.mxu0 0
      %6200 = vmatpush1.bf16.msra.mxu0 0
      %6201 = vmatprep.subr.bf16.mxu0 0
      %6202 = vmatpush1.bf16.msra.mxu0 0
      %6203 = vmatprep.subr.bf16.mxu0 0
      %6204 = vmatpush1.bf16.msra.mxu0 0
      %6205 = vmatprep.subr.bf16.mxu0 0
      %6206 = vmatpush1.bf16.msra.mxu0 0
      %6207 = vmatprep.mubr.bf16.mxu0 0
      %6208 = vmatmul.mubr.bf16.gmra.mrb[0].mxu0 %v4851
      %v6209 = vpop.f32.mrb[0].mxu0
      %v6210 = vadd.f32 0.0, %v6209
      %v6211 = vpop.f32.mrb[0].mxu0
      %v6212 = vpop.f32.mrb[0].mxu0
      %v6213 = vadd.f32 0.0, %v6212
      %v6214 = vpop.f32.mrb[0].mxu0
      %6215 = vmatprep.mubr.bf16.mxu0 0
      %6216 = vmatmul.mubr.bf16.gmra.mrb[0].mxu0 %v4854
      %v6217 = vpop.f32.mrb[0].mxu0
      %v6218 = vadd.f32 0.0, %v6217
      %v6219 = vpop.f32.mrb[0].mxu0
      %v6220 = vpop.f32.mrb[0].mxu0
      %v6221 = vadd.f32 0.0, %v6220
      %v6222 = vpop.f32.mrb[0].mxu0
      %6223 = vmatprep.mubr.bf16.mxu0 0
      %6224 = vmatmul.mubr.bf16.gmra.mrb[0].mxu0 %v4857
      %v6225 = vpop.f32.mrb[0].mxu0
      %v6226 = vadd.f32 0.0, %v6225
      %v6227 = vpop.f32.mrb[0].mxu0
      %v6228 = vpop.f32.mrb[0].mxu0
      %v6229 = vadd.f32 0.0, %v6228
      %v6230 = vpop.f32.mrb[0].mxu0
      %6231 = vmatprep.mubr.bf16.mxu0 0
      %6232 = vmatmul.mubr.bf16.gmra.mrb[0].mxu0 %v4860
      %v6233 = vpop.f32.mrb[0].mxu0
      %v6234 = vadd.f32 0.0, %v6233
      %v6235 = vpop.f32.mrb[0].mxu0
      %v6236 = vpop.f32.mrb[0].mxu0
      %v6237 = vadd.f32 0.0, %v6236
      %v6238 = vpop.f32.mrb[0].mxu0
      %6239 = vmatprep.mubr.bf16.mxu0 0
      %6240 = vmatmul.mubr.bf16.gmra.mrb[0].mxu0 %v4863
      %v6241 = vpop.f32.mrb[0].mxu0
      %v6242 = vadd.f32 0.0, %v6241
      %v6243 = vpop.f32.mrb[0].mxu0
      %v6244 = vpop.f32.mrb[0].mxu0
      %v6245 = vadd.f32 0.0, %v6244
      %v6246 = vpop.f32.mrb[0].mxu0
      %6247 = vmatprep.mubr.bf16.mxu0 0
      %6248 = vmatmul.mubr.bf16.gmra.mrb[0].mxu0 %v4866
      %v6249 = vpop.f32.mrb[0].mxu0
      %v6250 = vadd.f32 0.0, %v6249
      %v6251 = vpop.f32.mrb[0].mxu0
      %v6252 = vpop.f32.mrb[0].mxu0
      %v6253 = vadd.f32 0.0, %v6252
      %v6254 = vpop.f32.mrb[0].mxu0
      %6255 = vmatprep.mubr.bf16.mxu0 0
      %6256 = vmatmul.mubr.bf16.gmra.mrb[0].mxu0 %v4869
      %v6257 = vpop.f32.mrb[0].mxu0
      %v6258 = vadd.f32 0.0, %v6257
      %v6259 = vpop.f32.mrb[0].mxu0
      %v6260 = vpop.f32.mrb[0].mxu0
      %v6261 = vadd.f32 0.0, %v6260
      %v6262 = vpop.f32.mrb[0].mxu0
      %6263 = vmatprep.mubr.bf16.mxu0 0
      %6264 = vmatmul.mubr.bf16.gmra.mrb[0].mxu0 %v4872
      %v6265 = vpop.f32.mrb[0].mxu0
      %v6266 = vadd.f32 0.0, %v6265
      %v6267 = vpop.f32.mrb[0].mxu0
      %v6268 = vpop.f32.mrb[0].mxu0
      %v6269 = vadd.f32 0.0, %v6268
      %v6270 = vpop.f32.mrb[0].mxu0
      %6271 = vmatprep.mubr.bf16.mxu0 0
      %6272 = vmatmul.mubr.bf16.gmra.mrb[0].mxu0 %v4875
      %v6273 = vpop.f32.mrb[0].mxu0
      %v6274 = vadd.f32 0.0, %v6273
      %v6275 = vpop.f32.mrb[0].mxu0
      %v6276 = vpop.f32.mrb[0].mxu0
      %v6277 = vadd.f32 0.0, %v6276
      %v6278 = vpop.f32.mrb[0].mxu0
      %6279 = vmatprep.mubr.bf16.mxu0 0
      %6280 = vmatmul.mubr.bf16.gmra.mrb[0].mxu0 %v4878
      %v6281 = vpop.f32.mrb[0].mxu0
      %v6282 = vadd.f32 0.0, %v6281
      %v6283 = vpop.f32.mrb[0].mxu0
      %v6284 = vpop.f32.mrb[0].mxu0
      %v6285 = vadd.f32 0.0, %v6284
      %v6286 = vpop.f32.mrb[0].mxu0
      %6287 = vmatprep.mubr.bf16.mxu0 0
      %6288 = vmatmul.mubr.bf16.gmra.mrb[0].mxu0 %v4881
      %v6289 = vpop.f32.mrb[0].mxu0
      %v6290 = vadd.f32 0.0, %v6289
      %v6291 = vpop.f32.mrb[0].mxu0
      %v6292 = vpop.f32.mrb[0].mxu0
      %v6293 = vadd.f32 0.0, %v6292
      %v6294 = vpop.f32.mrb[0].mxu0
      %6295 = vmatprep.mubr.bf16.mxu0 0
      %6296 = vmatmul.mubr.bf16.gmra.mrb[0].mxu0 %v4884
      %v6297 = vpop.f32.mrb[0].mxu0
      %v6298 = vadd.f32 0.0, %v6297
      %v6299 = vpop.f32.mrb[0].mxu0
      %v6300 = vpop.f32.mrb[0].mxu0
      %v6301 = vadd.f32 0.0, %v6300
      %v6302 = vpop.f32.mrb[0].mxu0
      %6303 = vmatprep.mubr.bf16.mxu0 0
      %6304 = vmatmul.mubr.bf16.gmra.mrb[0].mxu0 %v4887
      %v6305 = vpop.f32.mrb[0].mxu0
      %v6306 = vadd.f32 0.0, %v6305
      %v6307 = vpop.f32.mrb[0].mxu0
      %v6308 = vpop.f32.mrb[0].mxu0
      %v6309 = vadd.f32 0.0, %v6308
      %v6310 = vpop.f32.mrb[0].mxu0
      %6311 = vmatprep.mubr.bf16.mxu0 0
      %6312 = vmatmul.mubr.bf16.gmra.mrb[0].mxu0 %v4890
      %v6313 = vpop.f32.mrb[0].mxu0
      %v6314 = vadd.f32 0.0, %v6313
      %v6315 = vpop.f32.mrb[0].mxu0
      %v6316 = vpop.f32.mrb[0].mxu0
      %v6317 = vadd.f32 0.0, %v6316
      %v6318 = vpop.f32.mrb[0].mxu0
      %6319 = vmatprep.mubr.bf16.mxu0 0
      %6320 = vmatmul.mubr.bf16.gmra.mrb[0].mxu0 %v5530
      %v6321 = vpop.f32.mrb[0].mxu0
      %v6322 = vadd.f32 0.0, %v6321
      %v6323 = vpop.f32.mrb[0].mxu0
      %v6324 = vpop.f32.mrb[0].mxu0
      %v6325 = vadd.f32 0.0, %v6324
      %v6326 = vpop.f32.mrb[0].mxu0
      %6327 = vmatprep.mubr.bf16.mxu0 0
      %6328 = vmatmul.mubr.bf16.gmra.mrb[0].mxu0 %v6170
      %v6329 = vpop.f32.mrb[0].mxu0
      %v6330 = vadd.f32 0.0, %v6329
      %v6331 = vpop.f32.mrb[0].mxu0
      %v6332 = vpop.f32.mrb[0].mxu0
      %v6333 = vadd.f32 0.0, %v6332
      %v6334 = vpop.f32.mrb[0].mxu0
      %6335 = vdwg.mxu0
      %v6336 = vadd.f32 %v6126, %v6210
      %v6337 = vadd.f32 %v6127, %v6213
      %v6338 = vadd.f32 %v6128, %v6218
      %v6339 = vadd.f32 %v6129, %v6221
      %v6340 = vadd.f32 %v6130, %v6226
      %v6341 = vadd.f32 %v6131, %v6229
      %v6342 = vadd.f32 %v6132, %v6234
      %v6343 = vadd.f32 %v6133, %v6237
      %v6344 = vadd.f32 %v6134, %v6242
      %v6345 = vadd.f32 %v6135, %v6245
      %v6346 = vadd.f32 %v6136, %v6250
      %v6347 = vadd.f32 %v6137, %v6253
      %v6348 = vadd.f32 %v6138, %v6258
      %v6349 = vadd.f32 %v6139, %v6261
      %v6350 = vadd.f32 %v6140, %v6266
      %v6351 = vadd.f32 %v6141, %v6269
      %v6352 = vadd.f32 %v6142, %v6274
      %v6353 = vadd.f32 %v6143, %v6277
      %v6354 = vadd.f32 %v6144, %v6282
      %v6355 = vadd.f32 %v6145, %v6285
      %v6356 = vadd.f32 %v6146, %v6290
      %v6357 = vadd.f32 %v6147, %v6293
      %v6358 = vadd.f32 %v6148, %v6298
      %v6359 = vadd.f32 %v6149, %v6301
      %v6360 = vadd.f32 %v6150, %v6306
      %v6361 = vadd.f32 %v6151, %v6309
      %v6362 = vadd.f32 %v6152, %v6314
      %v6363 = vadd.f32 %v6153, %v6317
      %v6364 = vadd.f32 %v6154, %v6322
      %v6365 = vadd.f32 %v6155, %v6325
      %v6366 = vadd.f32 %v6156, %v6330
      %v6367 = vadd.f32 %v6157, %v6333
      %v6369 = vlaneseq
      %v6370 = vshrl.u32 %v6369, 7
      %v6371 = vsub.s32 0, %v6370
      %v6372 = vrot.slane %v3729, %v6371
      %v6374 = vadd.f32 %v6336, %v6372
      %v6375 = vadd.f32 %v6337, %v6372
      %v6376 = vadd.f32 %v6338, %v6372
      %v6377 = vadd.f32 %v6339, %v6372
      %v6378 = vadd.f32 %v6340, %v6372
      %v6379 = vadd.f32 %v6341, %v6372
      %v6380 = vadd.f32 %v6342, %v6372
      %v6381 = vadd.f32 %v6343, %v6372
      %v6382 = vadd.f32 %v6344, %v6372
      %v6383 = vadd.f32 %v6345, %v6372
      %v6384 = vadd.f32 %v6346, %v6372
      %v6385 = vadd.f32 %v6347, %v6372
      %v6386 = vadd.f32 %v6348, %v6372
      %v6387 = vadd.f32 %v6349, %v6372
      %v6388 = vadd.f32 %v6350, %v6372
      %v6389 = vadd.f32 %v6351, %v6372
      %v6390 = vadd.f32 %v6352, %v6372
      %v6391 = vadd.f32 %v6353, %v6372
      %v6392 = vadd.f32 %v6354, %v6372
      %v6393 = vadd.f32 %v6355, %v6372
      %v6394 = vadd.f32 %v6356, %v6372
      %v6395 = vadd.f32 %v6357, %v6372
      %v6396 = vadd.f32 %v6358, %v6372
      %v6397 = vadd.f32 %v6359, %v6372
      %v6398 = vadd.f32 %v6360, %v6372
      %v6399 = vadd.f32 %v6361, %v6372
      %v6400 = vadd.f32 %v6362, %v6372
      %v6401 = vadd.f32 %v6363, %v6372
      %v6402 = vadd.f32 %v6364, %v6372
      %v6403 = vadd.f32 %v6365, %v6372
      %v6404 = vadd.f32 %v6366, %v6372
      %v6405 = vadd.f32 %v6367, %v6372
      %vm6406 = vcmp.ge.f32.partialorder %v6374, 0.0
      %vm6407 = vcmp.ge.f32.partialorder %v6375, 0.0
      %vm6408 = vcmp.ge.f32.partialorder %v6376, 0.0
      %vm6409 = vcmp.ge.f32.partialorder %v6377, 0.0
      %vm6410 = vcmp.ge.f32.partialorder %v6378, 0.0
      %vm6411 = vcmp.ge.f32.partialorder %v6379, 0.0
      %vm6412 = vcmp.ge.f32.partialorder %v6380, 0.0
      %vm6413 = vcmp.ge.f32.partialorder %v6381, 0.0
      %vm6414 = vcmp.ge.f32.partialorder %v6382, 0.0
      %vm6415 = vcmp.ge.f32.partialorder %v6383, 0.0
      %vm6416 = vcmp.ge.f32.partialorder %v6384, 0.0
      %vm6417 = vcmp.ge.f32.partialorder %v6385, 0.0
      %vm6418 = vcmp.ge.f32.partialorder %v6386, 0.0
      %vm6419 = vcmp.ge.f32.partialorder %v6387, 0.0
      %vm6420 = vcmp.ge.f32.partialorder %v6388, 0.0
      %vm6421 = vcmp.ge.f32.partialorder %v6389, 0.0
      %vm6422 = vcmp.ge.f32.partialorder %v6390, 0.0
      %vm6423 = vcmp.ge.f32.partialorder %v6391, 0.0
      %vm6424 = vcmp.ge.f32.partialorder %v6392, 0.0
      %vm6425 = vcmp.ge.f32.partialorder %v6393, 0.0
      %vm6426 = vcmp.ge.f32.partialorder %v6394, 0.0
      %vm6427 = vcmp.ge.f32.partialorder %v6395, 0.0
      %vm6428 = vcmp.ge.f32.partialorder %v6396, 0.0
      %vm6429 = vcmp.ge.f32.partialorder %v6397, 0.0
      %vm6430 = vcmp.ge.f32.partialorder %v6398, 0.0
      %vm6431 = vcmp.ge.f32.partialorder %v6399, 0.0
      %vm6432 = vcmp.ge.f32.partialorder %v6400, 0.0
      %vm6433 = vcmp.ge.f32.partialorder %v6401, 0.0
      %vm6434 = vcmp.ge.f32.partialorder %v6402, 0.0
      %vm6435 = vcmp.ge.f32.partialorder %v6403, 0.0
      %vm6436 = vcmp.ge.f32.partialorder %v6404, 0.0
      %vm6437 = vcmp.ge.f32.partialorder %v6405, 0.0
      %v6438 = vmul.f32 %v6374, 0.01
      %v6439 = vmul.f32 %v6375, 0.01
      %v6440 = vmul.f32 %v6376, 0.01
      %v6441 = vmul.f32 %v6377, 0.01
      %v6442 = vmul.f32 %v6378, 0.01
      %v6443 = vmul.f32 %v6379, 0.01
      %v6444 = vmul.f32 %v6380, 0.01
      %v6445 = vmul.f32 %v6381, 0.01
      %v6446 = vmul.f32 %v6382, 0.01
      %v6447 = vmul.f32 %v6383, 0.01
      %v6448 = vmul.f32 %v6384, 0.01
      %v6449 = vmul.f32 %v6385, 0.01
      %v6450 = vmul.f32 %v6386, 0.01
      %v6451 = vmul.f32 %v6387, 0.01
      %v6452 = vmul.f32 %v6388, 0.01
      %v6453 = vmul.f32 %v6389, 0.01
      %v6454 = vmul.f32 %v6390, 0.01
      %v6455 = vmul.f32 %v6391, 0.01
      %v6456 = vmul.f32 %v6392, 0.01
      %v6457 = vmul.f32 %v6393, 0.01
      %v6458 = vmul.f32 %v6394, 0.01
      %v6459 = vmul.f32 %v6395, 0.01
      %v6460 = vmul.f32 %v6396, 0.01
      %v6461 = vmul.f32 %v6397, 0.01
      %v6462 = vmul.f32 %v6398, 0.01
      %v6463 = vmul.f32 %v6399, 0.01
      %v6464 = vmul.f32 %v6400, 0.01
      %v6465 = vmul.f32 %v6401, 0.01
      %v6466 = vmul.f32 %v6402, 0.01
      %v6467 = vmul.f32 %v6403, 0.01
      %v6468 = vmul.f32 %v6404, 0.01
      %v6469 = vmul.f32 %v6405, 0.01
      %v6470 = vsel %vm6406, %v6374, %v6438
      %v6471 = vsel %vm6407, %v6375, %v6439
      %v6472 = vsel %vm6408, %v6376, %v6440
      %v6473 = vsel %vm6409, %v6377, %v6441
      %v6474 = vsel %vm6410, %v6378, %v6442
      %v6475 = vsel %vm6411, %v6379, %v6443
      %v6476 = vsel %vm6412, %v6380, %v6444
      %v6477 = vsel %vm6413, %v6381, %v6445
      %v6478 = vsel %vm6414, %v6382, %v6446
      %v6479 = vsel %vm6415, %v6383, %v6447
      %v6480 = vsel %vm6416, %v6384, %v6448
      %v6481 = vsel %vm6417, %v6385, %v6449
      %v6482 = vsel %vm6418, %v6386, %v6450
      %v6483 = vsel %vm6419, %v6387, %v6451
      %v6484 = vsel %vm6420, %v6388, %v6452
      %v6485 = vsel %vm6421, %v6389, %v6453
      %v6486 = vsel %vm6422, %v6390, %v6454
      %v6487 = vsel %vm6423, %v6391, %v6455
      %v6488 = vsel %vm6424, %v6392, %v6456
      %v6489 = vsel %vm6425, %v6393, %v6457
      %v6490 = vsel %vm6426, %v6394, %v6458
      %v6491 = vsel %vm6427, %v6395, %v6459
      %v6492 = vsel %vm6428, %v6396, %v6460
      %v6493 = vsel %vm6429, %v6397, %v6461
      %v6494 = vsel %vm6430, %v6398, %v6462
      %v6495 = vsel %vm6431, %v6399, %v6463
      %v6496 = vsel %vm6432, %v6400, %v6464
      %v6497 = vsel %vm6433, %v6401, %v6465
      %v6498 = vsel %vm6434, %v6402, %v6466
      %v6499 = vsel %vm6435, %v6403, %v6467
      %v6500 = vsel %vm6436, %v6404, %v6468
      %v6501 = vsel %vm6437, %v6405, %v6469
      %6502 = vst.msk [vmem:[%s224] sm:$0xff] %vm4162, %v6470
      %6503 = vst.msk [vmem:[%s224 + $0x8] sm:$0xff] %vm4162, %v6471
      %6504 = vst.msk [vmem:[%s224 + $0x10] sm:$0xff] %vm4162, %v6472
      %6505 = vst.msk [vmem:[%s224 + $0x18] sm:$0xff] %vm4162, %v6473
      %6506 = vst.msk [vmem:[%s224 + $0x20] sm:$0xff] %vm4162, %v6474
      %6507 = vst.msk [vmem:[%s224 + $0x28] sm:$0xff] %vm4162, %v6475
      %6508 = vst.msk [vmem:[%s224 + $0x30] sm:$0xff] %vm4162, %v6476
      %6509 = vst.msk [vmem:[%s224 + $0x38] sm:$0xff] %vm4162, %v6477
      %6510 = vst.msk [vmem:[%s224 + $0x40] sm:$0xff] %vm4162, %v6478
      %6511 = vst.msk [vmem:[%s224 + $0x48] sm:$0xff] %vm4162, %v6479
      %6512 = vst.msk [vmem:[%s224 + $0x50] sm:$0xff] %vm4162, %v6480
      %6513 = vst.msk [vmem:[%s224 + $0x58] sm:$0xff] %vm4162, %v6481
      %6514 = vst.msk [vmem:[%s224 + $0x60] sm:$0xff] %vm4162, %v6482
      %6515 = vst.msk [vmem:[%s224 + $0x68] sm:$0xff] %vm4162, %v6483
      %6516 = vst.msk [vmem:[%s224 + $0x70] sm:$0xff] %vm4162, %v6484
      %6517 = vst.msk [vmem:[%s224 + $0x78] sm:$0xff] %vm4162, %v6485
      %6518 = vst.msk [vmem:[%s224 + $0x80] sm:$0xff] %vm4162, %v6486
      %6519 = vst.msk [vmem:[%s224 + $0x88] sm:$0xff] %vm4162, %v6487
      %6520 = vst.msk [vmem:[%s224 + $0x90] sm:$0xff] %vm4162, %v6488
      %6521 = vst.msk [vmem:[%s224 + $0x98] sm:$0xff] %vm4162, %v6489
      %6522 = vst.msk [vmem:[%s224 + $0xa0] sm:$0xff] %vm4162, %v6490
      %6523 = vst.msk [vmem:[%s224 + $0xa8] sm:$0xff] %vm4162, %v6491
      %6524 = vst.msk [vmem:[%s224 + $0xb0] sm:$0xff] %vm4162, %v6492
      %6525 = vst.msk [vmem:[%s224 + $0xb8] sm:$0xff] %vm4162, %v6493
      %6526 = vst.msk [vmem:[%s224 + $0xc0] sm:$0xff] %vm4162, %v6494
      %6527 = vst.msk [vmem:[%s224 + $0xc8] sm:$0xff] %vm4162, %v6495
      %6528 = vst.msk [vmem:[%s224 + $0xd0] sm:$0xff] %vm4162, %v6496
      %6529 = vst.msk [vmem:[%s224 + $0xd8] sm:$0xff] %vm4162, %v6497
      %6530 = vst.msk [vmem:[%s224 + $0xe0] sm:$0xff] %vm4162, %v6498
      %6531 = vst.msk [vmem:[%s224 + $0xe8] sm:$0xff] %vm4162, %v6499
      %6532 = vst.msk [vmem:[%s224 + $0xf0] sm:$0xff] %vm4162, %v6500
      %6533 = vst.msk [vmem:[%s224 + $0xf8] sm:$0xff] %vm4162, %v6501
      %p6534 = scmp.lt.s32.totalorder %s16, 1
      %s6535 = scalar_select %p6534, %s16, 1
      %s6536 = smul.addr %s6535, 32
      %s6537 = smul.addr %s6536, 8
      %s6538 = scalar_lea.vmem %s5, %s6537
      // Predicated region
      $region45: #{double_conv_forward.1} parent=39 // pred_check
        %p6539 = pneg %p144
      $region46: #{double_conv_forward.1} parent=39 // pred_check_branch
        %6541 = sbr.rel (%p6539) target = $region48
      $region47: #{double_conv_forward.1} parent=39 // pred_region
        _
      $region48: #{double_conv_forward.1} parent=39 // pred_fallthru
        _
    $region40: #{double_conv_forward.1} parent=5 // pred_fallthru
      _
    %p6542 = scmp.le.s32.totalorder 2, %s11
    // Predicated region
    $region49: #{double_conv_forward.1} parent=5 // pred_check
      %p6543 = pneg %p6542
    $region50: #{double_conv_forward.1} parent=5 // pred_check_branch
      %6545 = sbr.rel (%p6543) target = $region52
    $region51: #{double_conv_forward.1} parent=5 // pred_region
      %s6546 = ssub.s32 %s11, 2
      // Predicated region
      $region53: #{double_conv_forward.1} parent=51 // pred_check
        %p6547 = pneg %p150
      $region54: #{double_conv_forward.1} parent=51 // pred_check_branch
        %6549 = sbr.rel (%p6547) target = $region56
      $region55: #{double_conv_forward.1} parent=51 // pred_region
        %p6550 = scmp.lt.s32.totalorder %s17, 1
        %s6551 = scalar_select %p6550, %s17, 1
        %s6552 = smul.addr %s6551, 32
        %s6553 = smul.addr %s6552, 8
        %s6554 = scalar_lea.vmem %s5, %s6553
      $region56: #{double_conv_forward.1} parent=51 // pred_fallthru
        _
    $region52: #{double_conv_forward.1} parent=5 // pred_fallthru
      _
  $region6: #{double_conv_forward.1} parent=0 // loop_footer
    %s15 = sadd.s32 1, %s11
  $region7: #{double_conv_forward.1} parent=0 // loop_footer_branch
    %10 = sbr.rel target = $region3
  $region8: #{double_conv_forward.1} parent=0 // loop_exit
    _

</llo_original>
